<compile_context>
chip_gen: v7x
topology: tpu7x:2x2x1
jax: 0.10.0
libtpu: 0.0.40
codegen_flags: <defaults>
</compile_context>

<pallas_src>
import functools

import numpy as np

import jax
import jax.numpy as jnp
from jax import lax
from jax.experimental import pallas as pl
from jax.experimental.pallas import tpu as pltpu

KSIZE = 5
PAD = (KSIZE - 1) // 2
NTAPS = KSIZE * KSIZE
OUT_ROWS = 8              # output-conv weights zero-padded to a full sublane tile
_TARGET_PIX = 16 * 1024   # aim for >= this many output pixels per grid step (small imgs)


def _vmem_limit_bytes():
    # v5e/v6e: 128 MiB physical -> ~96 MB scoped; v7x: 64 MiB physical -> ~48 MB scoped.
    try:
        cap = int(pltpu.get_tpu_info().vmem_capacity_bytes)
    except Exception:
        cap = 64 * 1024 * 1024
    return int(min(cap * 3 // 4, 100 * 1024 * 1024))


def _round_up(x, m):
    return -(-x // m) * m


def _geometry(N, H, W):
    """Static layout constants for the flat-frame layout."""
    Wp = W + 2 * PAD                        # padded row width (lanes per image row)
    Lf = (H + 2 * PAD) * Wp                 # flat length of one zero-padded image frame
    L = H * Wp                              # flat length of one image's output slab
    # Batch several small images into one grid step (frames concatenate on lanes).
    cap = max(1, _TARGET_PIX // max(1, H * W))
    B = 1
    for d in range(1, N + 1):
        if N % d == 0 and d <= cap:
            B = d
    NB = N // B
    Lb = (B - 1) * Lf + L                   # valid output-slab length for B images
    QL = min(_round_up(max(Lb, 128), 128), 4096)   # spatial chunk length (lanes)
    NQ = -(-Lb // QL)
    SLAB = NQ * QL
    s_max = (KSIZE - 1) * Wp + (KSIZE - 1)  # largest tap offset
    OFF = PAD * Wp + PAD                    # frame position of output pixel (0, 0)
    FLEN = max(B * Lf, SLAB + s_max)        # frame length (all tap slices stay in-bounds)
    return dict(Wp=Wp, Lf=Lf, L=L, B=B, NB=NB, Lb=Lb, QL=QL, NQ=NQ, SLAB=SLAB,
                OFF=OFF, FLEN=FLEN)


def _valid_mask(g, H, W):
    """1.0 at slab positions that map to a real output pixel, 0.0 at padding/garbage."""
    q = np.arange(g["SLAB"], dtype=np.int64)
    f = q + g["OFF"]                        # corresponding frame position
    b = f // g["Lf"]
    rf = f % g["Lf"]
    row = rf // g["Wp"]
    col = rf % g["Wp"]
    valid = ((q < g["Lb"]) & (b < g["B"])
             & (row >= PAD) & (row < H + PAD)
             & (col >= PAD) & (col < W + PAD))
    return jnp.asarray(valid.astype(np.float32).reshape(1, g["SLAB"]))


def _fused_kernel(x_ref, mask_ref, w1_ref, b1_ref, w2_ref, b2_ref, w3_ref, b3_ref,
                  w4_ref, b4_ref, bns_ref, bnt_ref, o_ref, *,
                  C, Wp, QL, NQ, SLAB, OFF, FLEN):
    """One group of B images through conv1/2/3 (+ReLU+BN) and the sigmoid output conv.

    x_ref : (1, 1, FLEN) bf16   flat zero-padded input frame (Cin = 1)
    mask  : (1, SLAB)   f32     validity mask (zeros at padding / inter-image positions)
    w1    : (C, 25)     bf16    [co, kh*5+kw]
    w2/w3 : (C, 25*C)   bf16    [co, (kh*5+kw)*C + ci]
    w4    : (8, 25*C)   bf16    row 0 is the output conv, rows 1..7 zero
    b*    : (C,1)/(1,1) f32     bns/bnt: (C, 1) f32 (shared eval-mode BN affine)
    o_ref : (1, 1, SLAB) f32    lane-dense flat output slab
    """
    bf16 = jnp.bfloat16
    taps = tuple(kh * Wp + kw for kh in range(KSIZE) for kw in range(KSIZE))
    mask = mask_ref[...]                                      # (1, SLAB) f32

    def patches(F, q0):
        # 25 contiguous lane-offset slices of the bf16 flat frame == the 5x5 im2col of
        # this spatial chunk (replication happens AFTER the bf16 cast).
        return jnp.concatenate([F[:, q0 + s: q0 + s + QL] for s in taps], axis=0)

    def hidden_layer(F, w_ref, b_ref):
        w = w_ref[...]
        chunks = []
        for q in range(NQ):                                   # static unroll over chunks
            q0 = q * QL
            acc = jnp.dot(w, patches(F, q0),
                          preferred_element_type=jnp.float32)          # (C, QL) f32
            # Module order: conv(+bias) -> ReLU -> shared BN (eval-mode affine).
            act = jnp.maximum(acc + b_ref[...], 0.0) * bns_ref[...] + bnt_ref[...]
            act = act * mask[:, q0:q0 + QL]                   # re-zero padding positions
            chunks.append(act.astype(bf16))
        slab = chunks[0] if NQ == 1 else jnp.concatenate(chunks, axis=1)   # (C, SLAB)
        # Re-embed the activations into a fresh zero-padded flat frame for the next layer.
        head = jnp.zeros((C, OFF), bf16)
        tail = jnp.zeros((C, FLEN - OFF - SLAB), bf16)
        return jnp.concatenate([head, slab, tail], axis=1)    # (C, FLEN) bf16

    F = x_ref[0]                                              # (1, FLEN) bf16
    F = hidden_layer(F, w1_ref, b1_ref)                       # conv1: 1 -> C,  K = 25
    F = hidden_layer(F, w2_ref, b2_ref)                       # conv2: C -> C,  K = 400
    F = hidden_layer(F, w3_ref, b3_ref)                       # conv3: C -> C,  K = 400

    w4 = w4_ref[...]                                          # (8, 25*C)
    for q in range(NQ):
        q0 = q * QL
        acc = jnp.dot(w4, patches(F, q0),
                      preferred_element_type=jnp.float32)[0:1]          # (1, QL) f32
        o_ref[0, :, q0:q0 + QL] = jax.nn.sigmoid(acc + b4_ref[...]).astype(o_ref.dtype)


def _fused_call(x_frames, mask, kp, g):
    C = kp["b1"].shape[0]
    NB, _, FLEN = x_frames.shape
    kernel = functools.partial(
        _fused_kernel, C=C, Wp=g["Wp"], QL=g["QL"], NQ=g["NQ"], SLAB=g["SLAB"],
        OFF=g["OFF"], FLEN=g["FLEN"])
    spec_c1 = pl.BlockSpec((C, 1), lambda s: (0, 0))
    return pl.pallas_call(
        kernel,
        out_shape=jax.ShapeDtypeStruct((NB, 1, g["SLAB"]), jnp.float32),
        grid=(NB,),
        in_specs=[
            pl.BlockSpec((1, 1, FLEN), lambda s: (s, 0, 0)),        # input frames
            pl.BlockSpec((1, g["SLAB"]), lambda s: (0, 0)),         # validity mask
            pl.BlockSpec((C, NTAPS), lambda s: (0, 0)),             # w1
            spec_c1,                                                # b1
            pl.BlockSpec((C, NTAPS * C), lambda s: (0, 0)),         # w2
            spec_c1,                                                # b2
            pl.BlockSpec((C, NTAPS * C), lambda s: (0, 0)),         # w3
            spec_c1,                                                # b3
            pl.BlockSpec((OUT_ROWS, NTAPS * C), lambda s: (0, 0)),  # w_out (padded rows)
            pl.BlockSpec((1, 1), lambda s: (0, 0)),                 # b_out
            spec_c1,                                                # bn_scale
            spec_c1,                                                # bn_shift
        ],
        out_specs=pl.BlockSpec((1, 1, g["SLAB"]), lambda s: (s, 0, 0)),
        compiler_params=pltpu.CompilerParams(
            dimension_semantics=("parallel",),
            vmem_limit_bytes=_vmem_limit_bytes()),
    )(x_frames, mask, kp["w1"], kp["b1"], kp["w2"], kp["b2"], kp["w3"], kp["b3"],
      kp["w_out"], kp["b_out"], kp["bn_scale"], kp["bn_shift"])


@jax.jit
def detection_zone_flou(x_nchw, kernel_params):
    """DetectionZoneFlou forward: (N, 1, H, W) f32 -> (N, 1, H, W) f32."""
    N, _, H, W = x_nchw.shape
    g = _geometry(N, H, W)
    B, NB, Lf, Lb, Wp, FLEN, SLAB = (g["B"], g["NB"], g["Lf"], g["Lb"], g["Wp"],
                                     g["FLEN"], g["SLAB"])

    # Embed the single-channel input into the flat zero-padded frame layout.
    # (Cheap 1-channel XLA pads/reshapes — pure layout plumbing, no relayout kernels.)
    x = x_nchw.reshape(N, H, W).astype(jnp.bfloat16)
    x = jnp.pad(x, ((0, 0), (PAD, PAD), (PAD, PAD)))          # (N, H+4, W+4)
    x = x.reshape(NB, B * Lf)
    x = jnp.pad(x, ((0, 0), (0, FLEN - B * Lf))).reshape(NB, 1, FLEN)

    mask = _valid_mask(g, H, W)
    y = _fused_call(x, mask, kernel_params, g)                # (NB, 1, SLAB)

    # Un-flatten the lane-dense output slab back to NCHW.
    y = y.reshape(NB, SLAB)[:, :Lb]
    y = jnp.pad(y, ((0, 0), (0, B * Lf - Lb)))
    y = y.reshape(NB, B, H + 2 * PAD, Wp)[:, :, :H, :W]
    return y.reshape(N, 1, H, W)


def init_params(key, num_channels=16):
    """Deterministic synthetic parameters (HWIO weights, eval-mode BN affine)."""
    keys = jax.random.split(key, 10)

    def conv_w(k, cin, cout):
        fan_in = cin * KSIZE * KSIZE
        return (jax.random.normal(k, (KSIZE, KSIZE, cin, cout), jnp.float32)
                / jnp.sqrt(jnp.float32(fan_in)))

    def conv_b(k, cout):
        return 0.01 * jax.random.normal(k, (cout,), jnp.float32)

    gamma = 1.0 + 0.1 * jax.random.normal(keys[8], (num_channels,), jnp.float32)
    beta = 0.1 * jax.random.normal(keys[9], (num_channels,), jnp.float32)
    running_mean = jnp.zeros((num_channels,), jnp.float32)
    running_var = jnp.ones((num_channels,), jnp.float32)
    eps = 1e-5
    bn_scale = gamma / jnp.sqrt(running_var + eps)
    bn_shift = beta - running_mean * bn_scale
    return {
        "w1": conv_w(keys[0], 1, num_channels), "b1": conv_b(keys[1], num_channels),
        "w2": conv_w(keys[2], num_channels, num_channels), "b2": conv_b(keys[3], num_channels),
        "w3": conv_w(keys[4], num_channels, num_channels), "b3": conv_b(keys[5], num_channels),
        "w_out": conv_w(keys[6], num_channels, 1), "b_out": conv_b(keys[7], 1),
        "bn_scale": bn_scale, "bn_shift": bn_shift,
    }


def prepare_params(p):
    """One-time prep: tap-major (Cout, 25*Cin) bf16 weights, column-shaped biases/BN."""
    C = p["w1"].shape[-1]

    def flat_w(w):                      # HWIO (5,5,ci,co) -> (co, 25*ci), tap-major then ci
        co = w.shape[-1]
        return jnp.transpose(w, (3, 0, 1, 2)).reshape(co, -1).astype(jnp.bfloat16)

    w_out = flat_w(p["w_out"])                                  # (1, 25*C)
    w_out = jnp.concatenate(
        [w_out, jnp.zeros((OUT_ROWS - 1, w_out.shape[1]), jnp.bfloat16)], axis=0)
    return {
        "w1": flat_w(p["w1"]),                                  # (C, 25)
        "b1": p["b1"].reshape(C, 1),
        "w2": flat_w(p["w2"]),                                  # (C, 25*C)
        "b2": p["b2"].reshape(C, 1),
        "w3": flat_w(p["w3"]),
        "b3": p["b3"].reshape(C, 1),
        "w_out": w_out,                                         # (8, 25*C), rows 1..7 zero
        "b_out": p["b_out"].reshape(1, 1),
        "bn_scale": p["bn_scale"].reshape(C, 1),
        "bn_shift": p["bn_shift"].reshape(C, 1),
    }


def reference_forward(x_nchw, p):
    """Pure-JAX/XLA f32 reference used for correctness checking."""
    x = jnp.transpose(x_nchw, (0, 2, 3, 1)).astype(jnp.float32)

    def conv(h, w, b):
        y = lax.conv_general_dilated(h, w, window_strides=(1, 1), padding="SAME",
                                     dimension_numbers=("NHWC", "HWIO", "NHWC"))
        return y + b

    s, t = p["bn_scale"], p["bn_shift"]
    h = jnp.maximum(conv(x, p["w1"], p["b1"]), 0.0) * s + t
    h = jnp.maximum(conv(h, p["w2"], p["b2"]), 0.0) * s + t
    h = jnp.maximum(conv(h, p["w3"], p["b3"]), 0.0) * s + t
    out = jax.nn.sigmoid(conv(h, p["w_out"], p["b_out"]))
    return jnp.transpose(out, (0, 3, 1, 2))


if __name__ == "__main__":
    key = jax.random.PRNGKey(0)
    k_x, k_p = jax.random.split(key)

    # The module takes a single-channel image: (N, 1, H, W).
    N, H, W = 2, 16, 16
    num_channels = 16
    x = jax.random.normal(k_x, (N, 1, H, W), jnp.float32)
    params = init_params(k_p, num_channels=num_channels)
    kparams = prepare_params(params)

    y = detection_zone_flou(x, kparams)
    jax.block_until_ready(y)
    assert y.shape == (N, 1, H, W), y.shape

    y_ref = reference_forward(x, params)
    err = float(jnp.max(jnp.abs(y - y_ref)))
    assert err < 5e-2, f"max abs err vs reference: {err}"
    print("KERNEL_OK")
</pallas_src>

<mosaic_0001>
module attributes {stable_mosaic.version = 11 : i64} {
  func.func @_fused_kernel(%arg0: i32, %arg1: memref<1x1x852xbf16, #tpu.memory_space<vmem>>, %arg2: memref<1x768xf32, #tpu.memory_space<vmem>>, %arg3: memref<16x25xbf16, #tpu.memory_space<vmem>>, %arg4: memref<16x1xf32, #tpu.memory_space<vmem>>, %arg5: memref<16x400xbf16, #tpu.memory_space<vmem>>, %arg6: memref<16x1xf32, #tpu.memory_space<vmem>>, %arg7: memref<16x400xbf16, #tpu.memory_space<vmem>>, %arg8: memref<16x1xf32, #tpu.memory_space<vmem>>, %arg9: memref<8x400xbf16, #tpu.memory_space<vmem>>, %arg10: memref<1x1xf32, #tpu.memory_space<vmem>>, %arg11: memref<16x1xf32, #tpu.memory_space<vmem>>, %arg12: memref<16x1xf32, #tpu.memory_space<vmem>>, %arg13: memref<1x1x768xf32, #tpu.memory_space<vmem>>) attributes {dimension_semantics = [#tpu.dimension_semantics<parallel>], iteration_bounds = array<i64: 1>, scalar_prefetch = 0 : i64, scratch_operands = 0 : i64, tpu.core_type = #tpu.core_type<tc>, window_params = [{transform_indices = @transform_0, window_bounds = array<i64: 1, 1, 852>}, {pipeline_mode = #tpu.pipeline_mode<synchronous>, transform_indices = @transform_1, window_bounds = array<i64: 1, 768>}, {pipeline_mode = #tpu.pipeline_mode<synchronous>, transform_indices = @transform_2, window_bounds = array<i64: 16, 25>}, {pipeline_mode = #tpu.pipeline_mode<synchronous>, transform_indices = @transform_3, window_bounds = array<i64: 16, 1>}, {pipeline_mode = #tpu.pipeline_mode<synchronous>, transform_indices = @transform_4, window_bounds = array<i64: 16, 400>}, {pipeline_mode = #tpu.pipeline_mode<synchronous>, transform_indices = @transform_5, window_bounds = array<i64: 16, 1>}, {pipeline_mode = #tpu.pipeline_mode<synchronous>, transform_indices = @transform_6, window_bounds = array<i64: 16, 400>}, {pipeline_mode = #tpu.pipeline_mode<synchronous>, transform_indices = @transform_7, window_bounds = array<i64: 16, 1>}, {pipeline_mode = #tpu.pipeline_mode<synchronous>, transform_indices = @transform_8, window_bounds = array<i64: 8, 400>}, {pipeline_mode = #tpu.pipeline_mode<synchronous>, transform_indices = @transform_9, window_bounds = array<i64: 1, 1>}, {pipeline_mode = #tpu.pipeline_mode<synchronous>, transform_indices = @transform_10, window_bounds = array<i64: 16, 1>}, {pipeline_mode = #tpu.pipeline_mode<synchronous>, transform_indices = @transform_11, window_bounds = array<i64: 16, 1>}, {transform_indices = @transform_12, window_bounds = array<i64: 1, 1, 768>}]} {
    %c0 = arith.constant 0 : index
    %c0_0 = arith.constant 0 : index
    %0 = vector.load %arg2[%c0, %c0_0] : memref<1x768xf32, #tpu.memory_space<vmem>>, vector<1x768xf32>
    %c0_1 = arith.constant 0 : index
    %c0_2 = arith.constant 0 : index
    %c0_3 = arith.constant 0 : index
    %1 = vector.load %arg1[%c0_1, %c0_2, %c0_3] : memref<1x1x852xbf16, #tpu.memory_space<vmem>>, vector<1x1x852xbf16>
    %2 = vector.shape_cast %1 : vector<1x1x852xbf16> to vector<1x852xbf16>
    %c0_4 = arith.constant 0 : index
    %c0_5 = arith.constant 0 : index
    %3 = vector.load %arg3[%c0_4, %c0_5] : memref<16x25xbf16, #tpu.memory_space<vmem>>, vector<16x25xbf16>
    %4 = vector.extract_strided_slice %2 {offsets = [0, 0], sizes = [1, 768], strides = [1, 1]} : vector<1x852xbf16> to vector<1x768xbf16>
    %5 = vector.extract_strided_slice %2 {offsets = [0, 1], sizes = [1, 768], strides = [1, 1]} : vector<1x852xbf16> to vector<1x768xbf16>
    %6 = vector.extract_strided_slice %2 {offsets = [0, 2], sizes = [1, 768], strides = [1, 1]} : vector<1x852xbf16> to vector<1x768xbf16>
    %7 = vector.extract_strided_slice %2 {offsets = [0, 3], sizes = [1, 768], strides = [1, 1]} : vector<1x852xbf16> to vector<1x768xbf16>
    %8 = vector.extract_strided_slice %2 {offsets = [0, 4], sizes = [1, 768], strides = [1, 1]} : vector<1x852xbf16> to vector<1x768xbf16>
    %9 = vector.extract_strided_slice %2 {offsets = [0, 20], sizes = [1, 768], strides = [1, 1]} : vector<1x852xbf16> to vector<1x768xbf16>
    %10 = vector.extract_strided_slice %2 {offsets = [0, 21], sizes = [1, 768], strides = [1, 1]} : vector<1x852xbf16> to vector<1x768xbf16>
    %11 = vector.extract_strided_slice %2 {offsets = [0, 22], sizes = [1, 768], strides = [1, 1]} : vector<1x852xbf16> to vector<1x768xbf16>
    %12 = vector.extract_strided_slice %2 {offsets = [0, 23], sizes = [1, 768], strides = [1, 1]} : vector<1x852xbf16> to vector<1x768xbf16>
    %13 = vector.extract_strided_slice %2 {offsets = [0, 24], sizes = [1, 768], strides = [1, 1]} : vector<1x852xbf16> to vector<1x768xbf16>
    %14 = vector.extract_strided_slice %2 {offsets = [0, 40], sizes = [1, 768], strides = [1, 1]} : vector<1x852xbf16> to vector<1x768xbf16>
    %15 = vector.extract_strided_slice %2 {offsets = [0, 41], sizes = [1, 768], strides = [1, 1]} : vector<1x852xbf16> to vector<1x768xbf16>
    %16 = vector.extract_strided_slice %2 {offsets = [0, 42], sizes = [1, 768], strides = [1, 1]} : vector<1x852xbf16> to vector<1x768xbf16>
    %17 = vector.extract_strided_slice %2 {offsets = [0, 43], sizes = [1, 768], strides = [1, 1]} : vector<1x852xbf16> to vector<1x768xbf16>
    %18 = vector.extract_strided_slice %2 {offsets = [0, 44], sizes = [1, 768], strides = [1, 1]} : vector<1x852xbf16> to vector<1x768xbf16>
    %19 = vector.extract_strided_slice %2 {offsets = [0, 60], sizes = [1, 768], strides = [1, 1]} : vector<1x852xbf16> to vector<1x768xbf16>
    %20 = vector.extract_strided_slice %2 {offsets = [0, 61], sizes = [1, 768], strides = [1, 1]} : vector<1x852xbf16> to vector<1x768xbf16>
    %21 = vector.extract_strided_slice %2 {offsets = [0, 62], sizes = [1, 768], strides = [1, 1]} : vector<1x852xbf16> to vector<1x768xbf16>
    %22 = vector.extract_strided_slice %2 {offsets = [0, 63], sizes = [1, 768], strides = [1, 1]} : vector<1x852xbf16> to vector<1x768xbf16>
    %23 = vector.extract_strided_slice %2 {offsets = [0, 64], sizes = [1, 768], strides = [1, 1]} : vector<1x852xbf16> to vector<1x768xbf16>
    %24 = vector.extract_strided_slice %2 {offsets = [0, 80], sizes = [1, 768], strides = [1, 1]} : vector<1x852xbf16> to vector<1x768xbf16>
    %25 = vector.extract_strided_slice %2 {offsets = [0, 81], sizes = [1, 768], strides = [1, 1]} : vector<1x852xbf16> to vector<1x768xbf16>
    %26 = vector.extract_strided_slice %2 {offsets = [0, 82], sizes = [1, 768], strides = [1, 1]} : vector<1x852xbf16> to vector<1x768xbf16>
    %27 = vector.extract_strided_slice %2 {offsets = [0, 83], sizes = [1, 768], strides = [1, 1]} : vector<1x852xbf16> to vector<1x768xbf16>
    %28 = vector.extract_strided_slice %2 {offsets = [0, 84], sizes = [1, 768], strides = [1, 1]} : vector<1x852xbf16> to vector<1x768xbf16>
    %29 = tpu.concatenate %4, %5, %6, %7, %8, %9, %10, %11, %12, %13, %14, %15, %16, %17, %18, %19 in 0 : vector<1x768xbf16>, vector<1x768xbf16>, vector<1x768xbf16>, vector<1x768xbf16>, vector<1x768xbf16>, vector<1x768xbf16>, vector<1x768xbf16>, vector<1x768xbf16>, vector<1x768xbf16>, vector<1x768xbf16>, vector<1x768xbf16>, vector<1x768xbf16>, vector<1x768xbf16>, vector<1x768xbf16>, vector<1x768xbf16>, vector<1x768xbf16> -> vector<16x768xbf16>
    %30 = tpu.concatenate %20, %21, %22, %23, %24, %25, %26, %27, %28 in 0 : vector<1x768xbf16>, vector<1x768xbf16>, vector<1x768xbf16>, vector<1x768xbf16>, vector<1x768xbf16>, vector<1x768xbf16>, vector<1x768xbf16>, vector<1x768xbf16>, vector<1x768xbf16> -> vector<9x768xbf16>
    %31 = tpu.concatenate %29, %30 in 0 : vector<16x768xbf16>, vector<9x768xbf16> -> vector<25x768xbf16>
    %cst = arith.constant dense<0.000000e+00> : vector<16x768xf32>
    %32 = tpu.matmul %3, %31, %cst {dimension_numbers = #tpu.dot_dimension_numbers<[1], [0], [0], [1], [0, 0, 1, 1], [], []>} : vector<16x25xbf16>, vector<25x768xbf16>, vector<16x768xf32> -> vector<16x768xf32>
    %c0_6 = arith.constant 0 : index
    %c0_7 = arith.constant 0 : index
    %33 = vector.load %arg4[%c0_6, %c0_7] : memref<16x1xf32, #tpu.memory_space<vmem>>, vector<16x1xf32>
    %34 = vector.broadcast %33 : vector<16x1xf32> to vector<16x768xf32>
    %35 = arith.addf %32, %34 : vector<16x768xf32>
    %cst_8 = arith.constant 0.000000e+00 : f32
    %36 = vector.broadcast %cst_8 : f32 to vector<16x768xf32>
    %37 = arith.maximumf %35, %36 : vector<16x768xf32>
    %c0_9 = arith.constant 0 : index
    %c0_10 = arith.constant 0 : index
    %38 = vector.load %arg11[%c0_9, %c0_10] : memref<16x1xf32, #tpu.memory_space<vmem>>, vector<16x1xf32>
    %39 = vector.broadcast %38 : vector<16x1xf32> to vector<16x768xf32>
    %40 = arith.mulf %37, %39 : vector<16x768xf32>
    %c0_11 = arith.constant 0 : index
    %c0_12 = arith.constant 0 : index
    %41 = vector.load %arg12[%c0_11, %c0_12] : memref<16x1xf32, #tpu.memory_space<vmem>>, vector<16x1xf32>
    %42 = vector.broadcast %41 : vector<16x1xf32> to vector<16x768xf32>
    %43 = arith.addf %40, %42 : vector<16x768xf32>
    %44 = vector.broadcast %0 : vector<1x768xf32> to vector<16x768xf32>
    %45 = arith.mulf %43, %44 : vector<16x768xf32>
    %46 = arith.truncf %45 : vector<16x768xf32> to vector<16x768xbf16>
    %cst_13 = arith.constant 0.000000e+00 : bf16
    %47 = vector.broadcast %cst_13 : bf16 to vector<16x42xbf16>
    %cst_14 = arith.constant 0.000000e+00 : bf16
    %48 = vector.broadcast %cst_14 : bf16 to vector<16x42xbf16>
    %49 = tpu.concatenate %47, %46, %48 in 1 : vector<16x42xbf16>, vector<16x768xbf16>, vector<16x42xbf16> -> vector<16x852xbf16>
    %c0_15 = arith.constant 0 : index
    %c0_16 = arith.constant 0 : index
    %50 = vector.load %arg5[%c0_15, %c0_16] : memref<16x400xbf16, #tpu.memory_space<vmem>>, vector<16x400xbf16>
    %51 = vector.extract_strided_slice %49 {offsets = [0, 0], sizes = [16, 768], strides = [1, 1]} : vector<16x852xbf16> to vector<16x768xbf16>
    %52 = vector.extract_strided_slice %49 {offsets = [0, 1], sizes = [16, 768], strides = [1, 1]} : vector<16x852xbf16> to vector<16x768xbf16>
    %53 = vector.extract_strided_slice %49 {offsets = [0, 2], sizes = [16, 768], strides = [1, 1]} : vector<16x852xbf16> to vector<16x768xbf16>
    %54 = vector.extract_strided_slice %49 {offsets = [0, 3], sizes = [16, 768], strides = [1, 1]} : vector<16x852xbf16> to vector<16x768xbf16>
    %55 = vector.extract_strided_slice %49 {offsets = [0, 4], sizes = [16, 768], strides = [1, 1]} : vector<16x852xbf16> to vector<16x768xbf16>
    %56 = vector.extract_strided_slice %49 {offsets = [0, 20], sizes = [16, 768], strides = [1, 1]} : vector<16x852xbf16> to vector<16x768xbf16>
    %57 = vector.extract_strided_slice %49 {offsets = [0, 21], sizes = [16, 768], strides = [1, 1]} : vector<16x852xbf16> to vector<16x768xbf16>
    %58 = vector.extract_strided_slice %49 {offsets = [0, 22], sizes = [16, 768], strides = [1, 1]} : vector<16x852xbf16> to vector<16x768xbf16>
    %59 = vector.extract_strided_slice %49 {offsets = [0, 23], sizes = [16, 768], strides = [1, 1]} : vector<16x852xbf16> to vector<16x768xbf16>
    %60 = vector.extract_strided_slice %49 {offsets = [0, 24], sizes = [16, 768], strides = [1, 1]} : vector<16x852xbf16> to vector<16x768xbf16>
    %61 = vector.extract_strided_slice %49 {offsets = [0, 40], sizes = [16, 768], strides = [1, 1]} : vector<16x852xbf16> to vector<16x768xbf16>
    %62 = vector.extract_strided_slice %49 {offsets = [0, 41], sizes = [16, 768], strides = [1, 1]} : vector<16x852xbf16> to vector<16x768xbf16>
    %63 = vector.extract_strided_slice %49 {offsets = [0, 42], sizes = [16, 768], strides = [1, 1]} : vector<16x852xbf16> to vector<16x768xbf16>
    %64 = vector.extract_strided_slice %49 {offsets = [0, 43], sizes = [16, 768], strides = [1, 1]} : vector<16x852xbf16> to vector<16x768xbf16>
    %65 = vector.extract_strided_slice %49 {offsets = [0, 44], sizes = [16, 768], strides = [1, 1]} : vector<16x852xbf16> to vector<16x768xbf16>
    %66 = vector.extract_strided_slice %49 {offsets = [0, 60], sizes = [16, 768], strides = [1, 1]} : vector<16x852xbf16> to vector<16x768xbf16>
    %67 = vector.extract_strided_slice %49 {offsets = [0, 61], sizes = [16, 768], strides = [1, 1]} : vector<16x852xbf16> to vector<16x768xbf16>
    %68 = vector.extract_strided_slice %49 {offsets = [0, 62], sizes = [16, 768], strides = [1, 1]} : vector<16x852xbf16> to vector<16x768xbf16>
    %69 = vector.extract_strided_slice %49 {offsets = [0, 63], sizes = [16, 768], strides = [1, 1]} : vector<16x852xbf16> to vector<16x768xbf16>
    %70 = vector.extract_strided_slice %49 {offsets = [0, 64], sizes = [16, 768], strides = [1, 1]} : vector<16x852xbf16> to vector<16x768xbf16>
    %71 = vector.extract_strided_slice %49 {offsets = [0, 80], sizes = [16, 768], strides = [1, 1]} : vector<16x852xbf16> to vector<16x768xbf16>
    %72 = vector.extract_strided_slice %49 {offsets = [0, 81], sizes = [16, 768], strides = [1, 1]} : vector<16x852xbf16> to vector<16x768xbf16>
    %73 = vector.extract_strided_slice %49 {offsets = [0, 82], sizes = [16, 768], strides = [1, 1]} : vector<16x852xbf16> to vector<16x768xbf16>
    %74 = vector.extract_strided_slice %49 {offsets = [0, 83], sizes = [16, 768], strides = [1, 1]} : vector<16x852xbf16> to vector<16x768xbf16>
    %75 = vector.extract_strided_slice %49 {offsets = [0, 84], sizes = [16, 768], strides = [1, 1]} : vector<16x852xbf16> to vector<16x768xbf16>
    %76 = tpu.concatenate %51, %52, %53, %54, %55, %56, %57, %58, %59, %60, %61, %62, %63, %64, %65, %66 in 0 : vector<16x768xbf16>, vector<16x768xbf16>, vector<16x768xbf16>, vector<16x768xbf16>, vector<16x768xbf16>, vector<16x768xbf16>, vector<16x768xbf16>, vector<16x768xbf16>, vector<16x768xbf16>, vector<16x768xbf16>, vector<16x768xbf16>, vector<16x768xbf16>, vector<16x768xbf16>, vector<16x768xbf16>, vector<16x768xbf16>, vector<16x768xbf16> -> vector<256x768xbf16>
    %77 = tpu.concatenate %67, %68, %69, %70, %71, %72, %73, %74, %75 in 0 : vector<16x768xbf16>, vector<16x768xbf16>, vector<16x768xbf16>, vector<16x768xbf16>, vector<16x768xbf16>, vector<16x768xbf16>, vector<16x768xbf16>, vector<16x768xbf16>, vector<16x768xbf16> -> vector<144x768xbf16>
    %78 = tpu.concatenate %76, %77 in 0 : vector<256x768xbf16>, vector<144x768xbf16> -> vector<400x768xbf16>
    %cst_17 = arith.constant dense<0.000000e+00> : vector<16x768xf32>
    %79 = tpu.matmul %50, %78, %cst_17 {dimension_numbers = #tpu.dot_dimension_numbers<[1], [0], [0], [1], [0, 0, 1, 1], [], []>} : vector<16x400xbf16>, vector<400x768xbf16>, vector<16x768xf32> -> vector<16x768xf32>
    %c0_18 = arith.constant 0 : index
    %c0_19 = arith.constant 0 : index
    %80 = vector.load %arg6[%c0_18, %c0_19] : memref<16x1xf32, #tpu.memory_space<vmem>>, vector<16x1xf32>
    %81 = vector.broadcast %80 : vector<16x1xf32> to vector<16x768xf32>
    %82 = arith.addf %79, %81 : vector<16x768xf32>
    %cst_20 = arith.constant 0.000000e+00 : f32
    %83 = vector.broadcast %cst_20 : f32 to vector<16x768xf32>
    %84 = arith.maximumf %82, %83 : vector<16x768xf32>
    %c0_21 = arith.constant 0 : index
    %c0_22 = arith.constant 0 : index
    %85 = vector.load %arg11[%c0_21, %c0_22] : memref<16x1xf32, #tpu.memory_space<vmem>>, vector<16x1xf32>
    %86 = vector.broadcast %85 : vector<16x1xf32> to vector<16x768xf32>
    %87 = arith.mulf %84, %86 : vector<16x768xf32>
    %c0_23 = arith.constant 0 : index
    %c0_24 = arith.constant 0 : index
    %88 = vector.load %arg12[%c0_23, %c0_24] : memref<16x1xf32, #tpu.memory_space<vmem>>, vector<16x1xf32>
    %89 = vector.broadcast %88 : vector<16x1xf32> to vector<16x768xf32>
    %90 = arith.addf %87, %89 : vector<16x768xf32>
    %91 = vector.broadcast %0 : vector<1x768xf32> to vector<16x768xf32>
    %92 = arith.mulf %90, %91 : vector<16x768xf32>
    %93 = arith.truncf %92 : vector<16x768xf32> to vector<16x768xbf16>
    %cst_25 = arith.constant 0.000000e+00 : bf16
    %94 = vector.broadcast %cst_25 : bf16 to vector<16x42xbf16>
    %cst_26 = arith.constant 0.000000e+00 : bf16
    %95 = vector.broadcast %cst_26 : bf16 to vector<16x42xbf16>
    %96 = tpu.concatenate %94, %93, %95 in 1 : vector<16x42xbf16>, vector<16x768xbf16>, vector<16x42xbf16> -> vector<16x852xbf16>
    %c0_27 = arith.constant 0 : index
    %c0_28 = arith.constant 0 : index
    %97 = vector.load %arg7[%c0_27, %c0_28] : memref<16x400xbf16, #tpu.memory_space<vmem>>, vector<16x400xbf16>
    %98 = vector.extract_strided_slice %96 {offsets = [0, 0], sizes = [16, 768], strides = [1, 1]} : vector<16x852xbf16> to vector<16x768xbf16>
    %99 = vector.extract_strided_slice %96 {offsets = [0, 1], sizes = [16, 768], strides = [1, 1]} : vector<16x852xbf16> to vector<16x768xbf16>
    %100 = vector.extract_strided_slice %96 {offsets = [0, 2], sizes = [16, 768], strides = [1, 1]} : vector<16x852xbf16> to vector<16x768xbf16>
    %101 = vector.extract_strided_slice %96 {offsets = [0, 3], sizes = [16, 768], strides = [1, 1]} : vector<16x852xbf16> to vector<16x768xbf16>
    %102 = vector.extract_strided_slice %96 {offsets = [0, 4], sizes = [16, 768], strides = [1, 1]} : vector<16x852xbf16> to vector<16x768xbf16>
    %103 = vector.extract_strided_slice %96 {offsets = [0, 20], sizes = [16, 768], strides = [1, 1]} : vector<16x852xbf16> to vector<16x768xbf16>
    %104 = vector.extract_strided_slice %96 {offsets = [0, 21], sizes = [16, 768], strides = [1, 1]} : vector<16x852xbf16> to vector<16x768xbf16>
    %105 = vector.extract_strided_slice %96 {offsets = [0, 22], sizes = [16, 768], strides = [1, 1]} : vector<16x852xbf16> to vector<16x768xbf16>
    %106 = vector.extract_strided_slice %96 {offsets = [0, 23], sizes = [16, 768], strides = [1, 1]} : vector<16x852xbf16> to vector<16x768xbf16>
    %107 = vector.extract_strided_slice %96 {offsets = [0, 24], sizes = [16, 768], strides = [1, 1]} : vector<16x852xbf16> to vector<16x768xbf16>
    %108 = vector.extract_strided_slice %96 {offsets = [0, 40], sizes = [16, 768], strides = [1, 1]} : vector<16x852xbf16> to vector<16x768xbf16>
    %109 = vector.extract_strided_slice %96 {offsets = [0, 41], sizes = [16, 768], strides = [1, 1]} : vector<16x852xbf16> to vector<16x768xbf16>
    %110 = vector.extract_strided_slice %96 {offsets = [0, 42], sizes = [16, 768], strides = [1, 1]} : vector<16x852xbf16> to vector<16x768xbf16>
    %111 = vector.extract_strided_slice %96 {offsets = [0, 43], sizes = [16, 768], strides = [1, 1]} : vector<16x852xbf16> to vector<16x768xbf16>
    %112 = vector.extract_strided_slice %96 {offsets = [0, 44], sizes = [16, 768], strides = [1, 1]} : vector<16x852xbf16> to vector<16x768xbf16>
    %113 = vector.extract_strided_slice %96 {offsets = [0, 60], sizes = [16, 768], strides = [1, 1]} : vector<16x852xbf16> to vector<16x768xbf16>
    %114 = vector.extract_strided_slice %96 {offsets = [0, 61], sizes = [16, 768], strides = [1, 1]} : vector<16x852xbf16> to vector<16x768xbf16>
    %115 = vector.extract_strided_slice %96 {offsets = [0, 62], sizes = [16, 768], strides = [1, 1]} : vector<16x852xbf16> to vector<16x768xbf16>
    %116 = vector.extract_strided_slice %96 {offsets = [0, 63], sizes = [16, 768], strides = [1, 1]} : vector<16x852xbf16> to vector<16x768xbf16>
    %117 = vector.extract_strided_slice %96 {offsets = [0, 64], sizes = [16, 768], strides = [1, 1]} : vector<16x852xbf16> to vector<16x768xbf16>
    %118 = vector.extract_strided_slice %96 {offsets = [0, 80], sizes = [16, 768], strides = [1, 1]} : vector<16x852xbf16> to vector<16x768xbf16>
    %119 = vector.extract_strided_slice %96 {offsets = [0, 81], sizes = [16, 768], strides = [1, 1]} : vector<16x852xbf16> to vector<16x768xbf16>
    %120 = vector.extract_strided_slice %96 {offsets = [0, 82], sizes = [16, 768], strides = [1, 1]} : vector<16x852xbf16> to vector<16x768xbf16>
    %121 = vector.extract_strided_slice %96 {offsets = [0, 83], sizes = [16, 768], strides = [1, 1]} : vector<16x852xbf16> to vector<16x768xbf16>
    %122 = vector.extract_strided_slice %96 {offsets = [0, 84], sizes = [16, 768], strides = [1, 1]} : vector<16x852xbf16> to vector<16x768xbf16>
    %123 = tpu.concatenate %98, %99, %100, %101, %102, %103, %104, %105, %106, %107, %108, %109, %110, %111, %112, %113 in 0 : vector<16x768xbf16>, vector<16x768xbf16>, vector<16x768xbf16>, vector<16x768xbf16>, vector<16x768xbf16>, vector<16x768xbf16>, vector<16x768xbf16>, vector<16x768xbf16>, vector<16x768xbf16>, vector<16x768xbf16>, vector<16x768xbf16>, vector<16x768xbf16>, vector<16x768xbf16>, vector<16x768xbf16>, vector<16x768xbf16>, vector<16x768xbf16> -> vector<256x768xbf16>
    %124 = tpu.concatenate %114, %115, %116, %117, %118, %119, %120, %121, %122 in 0 : vector<16x768xbf16>, vector<16x768xbf16>, vector<16x768xbf16>, vector<16x768xbf16>, vector<16x768xbf16>, vector<16x768xbf16>, vector<16x768xbf16>, vector<16x768xbf16>, vector<16x768xbf16> -> vector<144x768xbf16>
    %125 = tpu.concatenate %123, %124 in 0 : vector<256x768xbf16>, vector<144x768xbf16> -> vector<400x768xbf16>
    %cst_29 = arith.constant dense<0.000000e+00> : vector<16x768xf32>
    %126 = tpu.matmul %97, %125, %cst_29 {dimension_numbers = #tpu.dot_dimension_numbers<[1], [0], [0], [1], [0, 0, 1, 1], [], []>} : vector<16x400xbf16>, vector<400x768xbf16>, vector<16x768xf32> -> vector<16x768xf32>
    %c0_30 = arith.constant 0 : index
    %c0_31 = arith.constant 0 : index
    %127 = vector.load %arg8[%c0_30, %c0_31] : memref<16x1xf32, #tpu.memory_space<vmem>>, vector<16x1xf32>
    %128 = vector.broadcast %127 : vector<16x1xf32> to vector<16x768xf32>
    %129 = arith.addf %126, %128 : vector<16x768xf32>
    %cst_32 = arith.constant 0.000000e+00 : f32
    %130 = vector.broadcast %cst_32 : f32 to vector<16x768xf32>
    %131 = arith.maximumf %129, %130 : vector<16x768xf32>
    %c0_33 = arith.constant 0 : index
    %c0_34 = arith.constant 0 : index
    %132 = vector.load %arg11[%c0_33, %c0_34] : memref<16x1xf32, #tpu.memory_space<vmem>>, vector<16x1xf32>
    %133 = vector.broadcast %132 : vector<16x1xf32> to vector<16x768xf32>
    %134 = arith.mulf %131, %133 : vector<16x768xf32>
    %c0_35 = arith.constant 0 : index
    %c0_36 = arith.constant 0 : index
    %135 = vector.load %arg12[%c0_35, %c0_36] : memref<16x1xf32, #tpu.memory_space<vmem>>, vector<16x1xf32>
    %136 = vector.broadcast %135 : vector<16x1xf32> to vector<16x768xf32>
    %137 = arith.addf %134, %136 : vector<16x768xf32>
    %138 = vector.broadcast %0 : vector<1x768xf32> to vector<16x768xf32>
    %139 = arith.mulf %137, %138 : vector<16x768xf32>
    %140 = arith.truncf %139 : vector<16x768xf32> to vector<16x768xbf16>
    %cst_37 = arith.constant 0.000000e+00 : bf16
    %141 = vector.broadcast %cst_37 : bf16 to vector<16x42xbf16>
    %cst_38 = arith.constant 0.000000e+00 : bf16
    %142 = vector.broadcast %cst_38 : bf16 to vector<16x42xbf16>
    %143 = tpu.concatenate %141, %140, %142 in 1 : vector<16x42xbf16>, vector<16x768xbf16>, vector<16x42xbf16> -> vector<16x852xbf16>
    %c0_39 = arith.constant 0 : index
    %c0_40 = arith.constant 0 : index
    %144 = vector.load %arg9[%c0_39, %c0_40] : memref<8x400xbf16, #tpu.memory_space<vmem>>, vector<8x400xbf16>
    %145 = vector.extract_strided_slice %143 {offsets = [0, 0], sizes = [16, 768], strides = [1, 1]} : vector<16x852xbf16> to vector<16x768xbf16>
    %146 = vector.extract_strided_slice %143 {offsets = [0, 1], sizes = [16, 768], strides = [1, 1]} : vector<16x852xbf16> to vector<16x768xbf16>
    %147 = vector.extract_strided_slice %143 {offsets = [0, 2], sizes = [16, 768], strides = [1, 1]} : vector<16x852xbf16> to vector<16x768xbf16>
    %148 = vector.extract_strided_slice %143 {offsets = [0, 3], sizes = [16, 768], strides = [1, 1]} : vector<16x852xbf16> to vector<16x768xbf16>
    %149 = vector.extract_strided_slice %143 {offsets = [0, 4], sizes = [16, 768], strides = [1, 1]} : vector<16x852xbf16> to vector<16x768xbf16>
    %150 = vector.extract_strided_slice %143 {offsets = [0, 20], sizes = [16, 768], strides = [1, 1]} : vector<16x852xbf16> to vector<16x768xbf16>
    %151 = vector.extract_strided_slice %143 {offsets = [0, 21], sizes = [16, 768], strides = [1, 1]} : vector<16x852xbf16> to vector<16x768xbf16>
    %152 = vector.extract_strided_slice %143 {offsets = [0, 22], sizes = [16, 768], strides = [1, 1]} : vector<16x852xbf16> to vector<16x768xbf16>
    %153 = vector.extract_strided_slice %143 {offsets = [0, 23], sizes = [16, 768], strides = [1, 1]} : vector<16x852xbf16> to vector<16x768xbf16>
    %154 = vector.extract_strided_slice %143 {offsets = [0, 24], sizes = [16, 768], strides = [1, 1]} : vector<16x852xbf16> to vector<16x768xbf16>
    %155 = vector.extract_strided_slice %143 {offsets = [0, 40], sizes = [16, 768], strides = [1, 1]} : vector<16x852xbf16> to vector<16x768xbf16>
    %156 = vector.extract_strided_slice %143 {offsets = [0, 41], sizes = [16, 768], strides = [1, 1]} : vector<16x852xbf16> to vector<16x768xbf16>
    %157 = vector.extract_strided_slice %143 {offsets = [0, 42], sizes = [16, 768], strides = [1, 1]} : vector<16x852xbf16> to vector<16x768xbf16>
    %158 = vector.extract_strided_slice %143 {offsets = [0, 43], sizes = [16, 768], strides = [1, 1]} : vector<16x852xbf16> to vector<16x768xbf16>
    %159 = vector.extract_strided_slice %143 {offsets = [0, 44], sizes = [16, 768], strides = [1, 1]} : vector<16x852xbf16> to vector<16x768xbf16>
    %160 = vector.extract_strided_slice %143 {offsets = [0, 60], sizes = [16, 768], strides = [1, 1]} : vector<16x852xbf16> to vector<16x768xbf16>
    %161 = vector.extract_strided_slice %143 {offsets = [0, 61], sizes = [16, 768], strides = [1, 1]} : vector<16x852xbf16> to vector<16x768xbf16>
    %162 = vector.extract_strided_slice %143 {offsets = [0, 62], sizes = [16, 768], strides = [1, 1]} : vector<16x852xbf16> to vector<16x768xbf16>
    %163 = vector.extract_strided_slice %143 {offsets = [0, 63], sizes = [16, 768], strides = [1, 1]} : vector<16x852xbf16> to vector<16x768xbf16>
    %164 = vector.extract_strided_slice %143 {offsets = [0, 64], sizes = [16, 768], strides = [1, 1]} : vector<16x852xbf16> to vector<16x768xbf16>
    %165 = vector.extract_strided_slice %143 {offsets = [0, 80], sizes = [16, 768], strides = [1, 1]} : vector<16x852xbf16> to vector<16x768xbf16>
    %166 = vector.extract_strided_slice %143 {offsets = [0, 81], sizes = [16, 768], strides = [1, 1]} : vector<16x852xbf16> to vector<16x768xbf16>
    %167 = vector.extract_strided_slice %143 {offsets = [0, 82], sizes = [16, 768], strides = [1, 1]} : vector<16x852xbf16> to vector<16x768xbf16>
    %168 = vector.extract_strided_slice %143 {offsets = [0, 83], sizes = [16, 768], strides = [1, 1]} : vector<16x852xbf16> to vector<16x768xbf16>
    %169 = vector.extract_strided_slice %143 {offsets = [0, 84], sizes = [16, 768], strides = [1, 1]} : vector<16x852xbf16> to vector<16x768xbf16>
    %170 = tpu.concatenate %145, %146, %147, %148, %149, %150, %151, %152, %153, %154, %155, %156, %157, %158, %159, %160 in 0 : vector<16x768xbf16>, vector<16x768xbf16>, vector<16x768xbf16>, vector<16x768xbf16>, vector<16x768xbf16>, vector<16x768xbf16>, vector<16x768xbf16>, vector<16x768xbf16>, vector<16x768xbf16>, vector<16x768xbf16>, vector<16x768xbf16>, vector<16x768xbf16>, vector<16x768xbf16>, vector<16x768xbf16>, vector<16x768xbf16>, vector<16x768xbf16> -> vector<256x768xbf16>
    %171 = tpu.concatenate %161, %162, %163, %164, %165, %166, %167, %168, %169 in 0 : vector<16x768xbf16>, vector<16x768xbf16>, vector<16x768xbf16>, vector<16x768xbf16>, vector<16x768xbf16>, vector<16x768xbf16>, vector<16x768xbf16>, vector<16x768xbf16>, vector<16x768xbf16> -> vector<144x768xbf16>
    %172 = tpu.concatenate %170, %171 in 0 : vector<256x768xbf16>, vector<144x768xbf16> -> vector<400x768xbf16>
    %cst_41 = arith.constant dense<0.000000e+00> : vector<8x768xf32>
    %173 = tpu.matmul %144, %172, %cst_41 {dimension_numbers = #tpu.dot_dimension_numbers<[1], [0], [0], [1], [0, 0, 1, 1], [], []>} : vector<8x400xbf16>, vector<400x768xbf16>, vector<8x768xf32> -> vector<8x768xf32>
    %174 = vector.extract_strided_slice %173 {offsets = [0, 0], sizes = [1, 768], strides = [1, 1]} : vector<8x768xf32> to vector<1x768xf32>
    %c0_42 = arith.constant 0 : index
    %c0_43 = arith.constant 0 : index
    %175 = vector.load %arg10[%c0_42, %c0_43] : memref<1x1xf32, #tpu.memory_space<vmem>>, vector<1x1xf32>
    %176 = vector.broadcast %175 : vector<1x1xf32> to vector<1x768xf32>
    %177 = arith.addf %174, %176 : vector<1x768xf32>
    %178 = arith.negf %177 : vector<1x768xf32>
    %179 = math.exp %178 : vector<1x768xf32>
    %cst_44 = arith.constant 1.000000e+00 : f32
    %180 = vector.broadcast %cst_44 : f32 to vector<1x768xf32>
    %181 = arith.addf %180, %179 : vector<1x768xf32>
    %182 = arith.divf %180, %181 : vector<1x768xf32>
    %c0_45 = arith.constant 0 : index
    %c0_46 = arith.constant 0 : index
    %c0_47 = arith.constant 0 : index
    %183 = vector.load %arg13[%c0_45, %c0_46, %c0_47] : memref<1x1x768xf32, #tpu.memory_space<vmem>>, vector<1x1x768xf32>
    %184 = vector.shape_cast %183 : vector<1x1x768xf32> to vector<1x768xf32>
    %185 = vector.shape_cast %182 : vector<1x768xf32> to vector<1x1x768xf32>
    tpu.vector_store %arg13[%c0_45, %c0_46, %c0_47], %185 {strides = array<i32>} : memref<1x1x768xf32, #tpu.memory_space<vmem>>, vector<1x1x768xf32>,
    return
  }
  func.func @transform_0(%arg0: i32) -> (i32, i32, i32) {
    %c0_i32 = arith.constant 0 : i32
    %c0_i32_0 = arith.constant 0 : i32
    %c0_i32_1 = arith.constant 0 : i32
    return %arg0, %c0_i32, %c0_i32_0 : i32, i32, i32
  }
  func.func @transform_1(%arg0: i32) -> (i32, i32) {
    %c0_i32 = arith.constant 0 : i32
    %c0_i32_0 = arith.constant 0 : i32
    %c0_i32_1 = arith.constant 0 : i32
    return %c0_i32, %c0_i32_0 : i32, i32
  }
  func.func @transform_2(%arg0: i32) -> (i32, i32) {
    %c0_i32 = arith.constant 0 : i32
    %c0_i32_0 = arith.constant 0 : i32
    %c0_i32_1 = arith.constant 0 : i32
    return %c0_i32, %c0_i32_0 : i32, i32
  }
  func.func @transform_3(%arg0: i32) -> (i32, i32) {
    %c0_i32 = arith.constant 0 : i32
    %c0_i32_0 = arith.constant 0 : i32
    %c0_i32_1 = arith.constant 0 : i32
    return %c0_i32, %c0_i32_0 : i32, i32
  }
  func.func @transform_4(%arg0: i32) -> (i32, i32) {
    %c0_i32 = arith.constant 0 : i32
    %c0_i32_0 = arith.constant 0 : i32
    %c0_i32_1 = arith.constant 0 : i32
    return %c0_i32, %c0_i32_0 : i32, i32
  }
  func.func @transform_5(%arg0: i32) -> (i32, i32) {
    %c0_i32 = arith.constant 0 : i32
    %c0_i32_0 = arith.constant 0 : i32
    %c0_i32_1 = arith.constant 0 : i32
    return %c0_i32, %c0_i32_0 : i32, i32
  }
  func.func @transform_6(%arg0: i32) -> (i32, i32) {
    %c0_i32 = arith.constant 0 : i32
    %c0_i32_0 = arith.constant 0 : i32
    %c0_i32_1 = arith.constant 0 : i32
    return %c0_i32, %c0_i32_0 : i32, i32
  }
  func.func @transform_7(%arg0: i32) -> (i32, i32) {
    %c0_i32 = arith.constant 0 : i32
    %c0_i32_0 = arith.constant 0 : i32
    %c0_i32_1 = arith.constant 0 : i32
    return %c0_i32, %c0_i32_0 : i32, i32
  }
  func.func @transform_8(%arg0: i32) -> (i32, i32) {
    %c0_i32 = arith.constant 0 : i32
    %c0_i32_0 = arith.constant 0 : i32
    %c0_i32_1 = arith.constant 0 : i32
    return %c0_i32, %c0_i32_0 : i32, i32
  }
  func.func @transform_9(%arg0: i32) -> (i32, i32) {
    %c0_i32 = arith.constant 0 : i32
    %c0_i32_0 = arith.constant 0 : i32
    %c0_i32_1 = arith.constant 0 : i32
    return %c0_i32, %c0_i32_0 : i32, i32
  }
  func.func @transform_10(%arg0: i32) -> (i32, i32) {
    %c0_i32 = arith.constant 0 : i32
    %c0_i32_0 = arith.constant 0 : i32
    %c0_i32_1 = arith.constant 0 : i32
    return %c0_i32, %c0_i32_0 : i32, i32
  }
  func.func @transform_11(%arg0: i32) -> (i32, i32) {
    %c0_i32 = arith.constant 0 : i32
    %c0_i32_0 = arith.constant 0 : i32
    %c0_i32_1 = arith.constant 0 : i32
    return %c0_i32, %c0_i32_0 : i32, i32
  }
  func.func @transform_12(%arg0: i32) -> (i32, i32, i32) {
    %c0_i32 = arith.constant 0 : i32
    %c0_i32_0 = arith.constant 0 : i32
    %c0_i32_1 = arith.constant 0 : i32
    return %arg0, %c0_i32, %c0_i32_0 : i32, i32, i32
  }
}

</mosaic_0001>

<llo_original>
// kernel: detection_zone_flou.1
$region0: #{detection_zone_flou.1}
  #allocation0 [shape = 'u32[]', space=smem, size = 0x4, offset = 0x4, fixed_abs, tag = 'smem constant byte address 0x4 - core index']
  #allocation1 [shape = 'u32[144,128]{1,0:T(1,128)}', space=vmem, size = 0x12000, scoped, tag = 'internal scratch']
  #allocation2 [shape = 'f32[1,1]{1,0:T(1,128)S(1)}', space=vmem, size = 0x200, scoped, tag = 'scoped memory for detection_zone_flou.1']
  %s0 = inlined_call_operand.vmem [shape: bf16[1,1,852], index: 0, kind: input, shape index: {}]
  %s1 = inlined_call_operand.vmem [shape: f32[1,768], index: 1, kind: input, shape index: {}]
  %s2 = inlined_call_operand.vmem [shape: bf16[16,25], index: 2, kind: input, shape index: {}]
  %s3 = inlined_call_operand.vmem [shape: f32[16,1], index: 3, kind: input, shape index: {}]
  %s4 = inlined_call_operand.vmem [shape: bf16[16,400], index: 4, kind: input, shape index: {}]
  %s5 = inlined_call_operand.vmem [shape: f32[16,1], index: 5, kind: input, shape index: {}]
  %s6 = inlined_call_operand.vmem [shape: bf16[16,400], index: 6, kind: input, shape index: {}]
  %s7 = inlined_call_operand.vmem [shape: f32[16,1], index: 7, kind: input, shape index: {}]
  %s8 = inlined_call_operand.vmem [shape: bf16[8,400], index: 8, kind: input, shape index: {}]
  %s9 = inlined_call_operand.<no memory space> [shape: f32[1,1], index: 9, kind: input, shape index: {}]
  %s10 = inlined_call_operand.vmem [shape: f32[16,1], index: 10, kind: input, shape index: {}]
  %s11 = inlined_call_operand.vmem [shape: f32[16,1], index: 11, kind: input, shape index: {}]
  %s12 = inlined_call_operand.vmem [shape: f32[1,1,768], index: 12, kind: output, shape index: {}]
  %s13 = sld [smem:[#allocation0]]
  $region58: #{detection_zone_flou.1} parent=0
    _
  %s15 = ssub.s32 1, %s13
  %s16 = scalar_select 0, %s15, %s13
  %v17 = vstv %s9
  %18 = vst [vmem:[#allocation2] sm:$0x1] %v17
  // Predicated region
  $region2: #{detection_zone_flou.1} parent=0 // pred_check
    _
  $region3: #{detection_zone_flou.1} parent=0 // pred_check_branch
    %20 = sbr.rel (0) target = $region5
  $region4: #{detection_zone_flou.1} parent=0 // pred_region
    _
  $region5: #{detection_zone_flou.1} parent=0 // pred_fallthru
    _
  // Predicated region
  $region6: #{detection_zone_flou.1} parent=0 // pred_check
    _
  $region7: #{detection_zone_flou.1} parent=0 // pred_check_branch
    %22 = sbr.rel (0) target = $region9
  $region8: #{detection_zone_flou.1} parent=0 // pred_region
    _
  $region9: #{detection_zone_flou.1} parent=0 // pred_fallthru
    _
  // Predicated region
  $region10: #{detection_zone_flou.1} parent=0 // pred_check
    _
  $region11: #{detection_zone_flou.1} parent=0 // pred_check_branch
    %24 = sbr.rel (0) target = $region13
  $region12: #{detection_zone_flou.1} parent=0 // pred_region
    _
  $region13: #{detection_zone_flou.1} parent=0 // pred_fallthru
    _
  // Predicated region
  $region14: #{detection_zone_flou.1} parent=0 // pred_check
    _
  $region15: #{detection_zone_flou.1} parent=0 // pred_check_branch
    %26 = sbr.rel (0) target = $region17
  $region16: #{detection_zone_flou.1} parent=0 // pred_region
    _
  $region17: #{detection_zone_flou.1} parent=0 // pred_fallthru
    _
  // Predicated region
  $region18: #{detection_zone_flou.1} parent=0 // pred_check
    _
  $region19: #{detection_zone_flou.1} parent=0 // pred_check_branch
    %28 = sbr.rel (0) target = $region21
  $region20: #{detection_zone_flou.1} parent=0 // pred_region
    _
  $region21: #{detection_zone_flou.1} parent=0 // pred_fallthru
    _
  // Predicated region
  $region22: #{detection_zone_flou.1} parent=0 // pred_check
    _
  $region23: #{detection_zone_flou.1} parent=0 // pred_check_branch
    %30 = sbr.rel (0) target = $region25
  $region24: #{detection_zone_flou.1} parent=0 // pred_region
    _
  $region25: #{detection_zone_flou.1} parent=0 // pred_fallthru
    _
  // Predicated region
  $region26: #{detection_zone_flou.1} parent=0 // pred_check
    _
  $region27: #{detection_zone_flou.1} parent=0 // pred_check_branch
    %32 = sbr.rel (0) target = $region29
  $region28: #{detection_zone_flou.1} parent=0 // pred_region
    _
  $region29: #{detection_zone_flou.1} parent=0 // pred_fallthru
    _
  // Predicated region
  $region30: #{detection_zone_flou.1} parent=0 // pred_check
    _
  $region31: #{detection_zone_flou.1} parent=0 // pred_check_branch
    %34 = sbr.rel (0) target = $region33
  $region32: #{detection_zone_flou.1} parent=0 // pred_region
    _
  $region33: #{detection_zone_flou.1} parent=0 // pred_fallthru
    _
  // Predicated region
  $region34: #{detection_zone_flou.1} parent=0 // pred_check
    _
  $region35: #{detection_zone_flou.1} parent=0 // pred_check_branch
    %36 = sbr.rel (0) target = $region37
  $region36: #{detection_zone_flou.1} parent=0 // pred_region
    _
  $region37: #{detection_zone_flou.1} parent=0 // pred_fallthru
    _
  // Predicated region
  $region38: #{detection_zone_flou.1} parent=0 // pred_check
    _
  $region39: #{detection_zone_flou.1} parent=0 // pred_check_branch
    %38 = sbr.rel (0) target = $region41
  $region40: #{detection_zone_flou.1} parent=0 // pred_region
    _
  $region41: #{detection_zone_flou.1} parent=0 // pred_fallthru
    _
  // Predicated region
  $region42: #{detection_zone_flou.1} parent=0 // pred_check
    _
  $region43: #{detection_zone_flou.1} parent=0 // pred_check_branch
    %40 = sbr.rel (0) target = $region45
  $region44: #{detection_zone_flou.1} parent=0 // pred_region
    _
  $region45: #{detection_zone_flou.1} parent=0 // pred_fallthru
    _
  // Predicated region
  $region46: #{detection_zone_flou.1} parent=0 // pred_check
    _
  $region47: #{detection_zone_flou.1} parent=0 // pred_check_branch
    %42 = sbr.rel (0) target = $region49
  $region48: #{detection_zone_flou.1} parent=0 // pred_region
    _
  $region49: #{detection_zone_flou.1} parent=0 // pred_fallthru
    _
  %v44 = vld [vmem:[%s1] sm:$0x3f]
  %v45 = vld [vmem:[%s0] sm:$0x7f]
  %v46 = vld [vmem:[%s2] sm:$0xf]
  %v47 = vld [vmem:[%s2 + $0x4] sm:$0xf]
  %v49 = vcombine.high %v45, %v45
  %v51 = vunpack.c.l.s4 1966171168
  %v52 = vunpack.c.0.s8 %v51
  %v53 = vlaneseq
  %v54 = vshrl.u32 %v53, 7
  %v55 = vsub.s32 %v52, %v54
  %v56 = vrot.slane %v45, %v55
  %v58 = vunpack.c.l.s4 1966171168
  %v59 = vunpack.c.0.s8 %v58
  %v60 = vlaneseq
  %v61 = vshrl.u32 %v60, 7
  %v62 = vsub.s32 %v59, %v61
  %v63 = vrot.slane %v49, %v62
  %v64 = vcombine.high %v56, %v56
  %v65 = vcombine.high %v63, %v63
  %v67 = vunpack.c.l.s4 1966171168
  %v68 = vunpack.c.0.s8 %v67
  %v69 = vlaneseq
  %v70 = vshrl.u32 %v69, 7
  %v71 = vsub.s32 %v68, %v70
  %v72 = vrot.slane %v56, %v71
  %v74 = vunpack.c.l.s4 1966171168
  %v75 = vunpack.c.0.s8 %v74
  %v76 = vlaneseq
  %v77 = vshrl.u32 %v76, 7
  %v78 = vsub.s32 %v75, %v77
  %v79 = vrot.slane %v63, %v78
  %v81 = vunpack.c.l.s4 1966171168
  %v82 = vunpack.c.0.s8 %v81
  %v83 = vlaneseq
  %v84 = vshrl.u32 %v83, 7
  %v85 = vsub.s32 %v82, %v84
  %v86 = vrot.slane %v64, %v85
  %v88 = vunpack.c.l.s4 1966171168
  %v89 = vunpack.c.0.s8 %v88
  %v90 = vlaneseq
  %v91 = vshrl.u32 %v90, 7
  %v92 = vsub.s32 %v89, %v91
  %v93 = vrot.slane %v65, %v92
  %v94 = vcombine.high %v72, %v72
  %v95 = vcombine.high %v86, %v86
  %v102 = vcombine.high %v79, %v79
  %v104 = vshll.u32 %v72, 16
  %v107 = vshll.u32 %v86, 16
  %v110 = vshll.u32 %v94, 16
  %v113 = vshll.u32 %v95, 16
  %v116 = vshll.u32 %v79, 16
  %v119 = vshll.u32 %v93, 16
  %v122 = vshll.u32 %v102, 16
  %124 = vrot.lane.b32.xlu0 %v104, 127
  %v125 = vpop.permute.xlu0 %124
  %126 = vrot.lane.b32.xlu0 %v107, 127
  %v127 = vpop.permute.xlu0 %126
  %128 = vrot.lane.b32.xlu0 %v110, 127
  %v129 = vpop.permute.xlu0 %128
  %130 = vrot.lane.b32.xlu0 %v113, 127
  %v131 = vpop.permute.xlu0 %130
  %132 = vrot.lane.b32.xlu0 %v116, 127
  %v133 = vpop.permute.xlu0 %132
  %134 = vrot.lane.b32.xlu0 %v119, 127
  %v135 = vpop.permute.xlu0 %134
  %136 = vrot.lane.b32.xlu0 %v122, 127
  %v137 = vpop.permute.xlu0 %136
  %vm138 = vcmask 1039360
  %v139 = vsel %vm138, %v125, %v127
  %v140 = vsel %vm138, %v127, %v129
  %v141 = vsel %vm138, %v129, %v131
  %v142 = vsel %vm138, %v131, %v133
  %v143 = vsel %vm138, %v133, %v135
  %v144 = vsel %vm138, %v135, %v137
  %v151 = vcombine.low %v45, %v45
  %v153 = vunpack.c.l.s4 1966171168
  %v154 = vunpack.c.0.s8 %v153
  %v155 = vlaneseq
  %v156 = vshrl.u32 %v155, 7
  %v157 = vsub.s32 %v154, %v156
  %v158 = vrot.slane %v151, %v157
  %v159 = vcombine.high %v158, %v158
  %v161 = vunpack.c.l.s4 1966171168
  %v162 = vunpack.c.0.s8 %v161
  %v163 = vlaneseq
  %v164 = vshrl.u32 %v163, 7
  %v165 = vsub.s32 %v162, %v164
  %v166 = vrot.slane %v158, %v165
  %v168 = vunpack.c.l.s4 1966171168
  %v169 = vunpack.c.0.s8 %v168
  %v170 = vlaneseq
  %v171 = vshrl.u32 %v170, 7
  %v172 = vsub.s32 %v169, %v171
  %v173 = vrot.slane %v159, %v172
  %v174 = vcombine.high %v166, %v166
  %v175 = vcombine.high %v173, %v173
  %176 = vrot.lane.b32.xlu0 %v166, 126
  %v177 = vpop.permute.xlu0 %176
  %178 = vrot.lane.b32.xlu0 %v173, 126
  %v179 = vpop.permute.xlu0 %178
  %180 = vrot.lane.b32.xlu0 %v174, 126
  %v181 = vpop.permute.xlu0 %180
  %182 = vrot.lane.b32.xlu0 %v175, 126
  %v183 = vpop.permute.xlu0 %182
  %184 = vrot.lane.b32.xlu0 %v72, 126
  %v185 = vpop.permute.xlu0 %184
  %186 = vrot.lane.b32.xlu0 %v86, 126
  %v187 = vpop.permute.xlu0 %186
  %188 = vrot.lane.b32.xlu0 %v94, 126
  %v189 = vpop.permute.xlu0 %188
  %vm190 = vcmask 1031168
  %v191 = vsel %vm190, %v177, %v179
  %v192 = vsel %vm190, %v179, %v181
  %v193 = vsel %vm190, %v181, %v183
  %v194 = vsel %vm190, %v183, %v185
  %v195 = vsel %vm190, %v185, %v187
  %v196 = vsel %vm190, %v187, %v189
  %v197 = vrot.slane %v104, 7
  %v198 = vrot.slane %v107, 7
  %v199 = vrot.slane %v110, 7
  %v200 = vrot.slane %v113, 7
  %v201 = vrot.slane %v116, 7
  %v202 = vrot.slane %v119, 7
  %v203 = vrot.slane %v122, 7
  %204 = vrot.lane.b32.xlu0 %v197, 125
  %v205 = vpop.permute.xlu0 %204
  %206 = vrot.lane.b32.xlu0 %v198, 125
  %v207 = vpop.permute.xlu0 %206
  %208 = vrot.lane.b32.xlu0 %v199, 125
  %v209 = vpop.permute.xlu0 %208
  %210 = vrot.lane.b32.xlu0 %v200, 125
  %v211 = vpop.permute.xlu0 %210
  %212 = vrot.lane.b32.xlu0 %v201, 125
  %v213 = vpop.permute.xlu0 %212
  %214 = vrot.lane.b32.xlu0 %v202, 125
  %v215 = vpop.permute.xlu0 %214
  %216 = vrot.lane.b32.xlu0 %v203, 125
  %v217 = vpop.permute.xlu0 %216
  %vm218 = vcmask 1022976
  %v219 = vsel %vm218, %v205, %v207
  %v220 = vsel %vm218, %v207, %v209
  %v221 = vsel %vm218, %v209, %v211
  %v222 = vsel %vm218, %v211, %v213
  %v223 = vsel %vm218, %v213, %v215
  %v224 = vsel %vm218, %v215, %v217
  %v231 = vcombine.low %v56, %v56
  %v232 = vcombine.low %v63, %v63
  %v234 = vunpack.c.l.s4 1966171168
  %v235 = vunpack.c.0.s8 %v234
  %v236 = vlaneseq
  %v237 = vshrl.u32 %v236, 7
  %v238 = vsub.s32 %v235, %v237
  %v239 = vrot.slane %v231, %v238
  %v241 = vunpack.c.l.s4 1966171168
  %v242 = vunpack.c.0.s8 %v241
  %v243 = vlaneseq
  %v244 = vshrl.u32 %v243, 7
  %v245 = vsub.s32 %v242, %v244
  %v246 = vrot.slane %v232, %v245
  %v247 = vcombine.high %v239, %v239
  %v248 = vcombine.high %v246, %v246
  %249 = vrot.lane.b32.xlu0 %v239, 124
  %v250 = vpop.permute.xlu0 %249
  %251 = vrot.lane.b32.xlu0 %v72, 124
  %v252 = vpop.permute.xlu0 %251
  %253 = vrot.lane.b32.xlu0 %v247, 124
  %v254 = vpop.permute.xlu0 %253
  %255 = vrot.lane.b32.xlu0 %v94, 124
  %v256 = vpop.permute.xlu0 %255
  %257 = vrot.lane.b32.xlu0 %v246, 124
  %v258 = vpop.permute.xlu0 %257
  %259 = vrot.lane.b32.xlu0 %v79, 124
  %v260 = vpop.permute.xlu0 %259
  %261 = vrot.lane.b32.xlu0 %v248, 124
  %v262 = vpop.permute.xlu0 %261
  %vm263 = vcmask 1014784
  %v264 = vsel %vm263, %v250, %v252
  %v265 = vsel %vm263, %v252, %v254
  %v266 = vsel %vm263, %v254, %v256
  %v267 = vsel %vm263, %v256, %v258
  %v268 = vsel %vm263, %v258, %v260
  %v269 = vsel %vm263, %v260, %v262
  %v270 = vrot.slane %v104, 6
  %v271 = vrot.slane %v107, 6
  %v272 = vrot.slane %v110, 6
  %v273 = vrot.slane %v113, 6
  %v274 = vrot.slane %v116, 6
  %v275 = vrot.slane %v119, 6
  %v276 = vrot.slane %v122, 6
  %277 = vrot.lane.b32.xlu0 %v270, 108
  %v278 = vpop.permute.xlu0 %277
  %279 = vrot.lane.b32.xlu0 %v271, 108
  %v280 = vpop.permute.xlu0 %279
  %281 = vrot.lane.b32.xlu0 %v272, 108
  %v282 = vpop.permute.xlu0 %281
  %283 = vrot.lane.b32.xlu0 %v273, 108
  %v284 = vpop.permute.xlu0 %283
  %285 = vrot.lane.b32.xlu0 %v274, 108
  %v286 = vpop.permute.xlu0 %285
  %287 = vrot.lane.b32.xlu0 %v275, 108
  %v288 = vpop.permute.xlu0 %287
  %289 = vrot.lane.b32.xlu0 %v276, 108
  %v290 = vpop.permute.xlu0 %289
  %vm291 = vcmask 883712
  %v292 = vsel %vm291, %v278, %v280
  %v293 = vsel %vm291, %v280, %v282
  %v294 = vsel %vm291, %v282, %v284
  %v295 = vsel %vm291, %v284, %v286
  %v296 = vsel %vm291, %v286, %v288
  %v297 = vsel %vm291, %v288, %v290
  %v304 = vcombine.low %v158, %v158
  %v306 = vunpack.c.l.s4 1966171168
  %v307 = vunpack.c.0.s8 %v306
  %v308 = vlaneseq
  %v309 = vshrl.u32 %v308, 7
  %v310 = vsub.s32 %v307, %v309
  %v311 = vrot.slane %v304, %v310
  %v312 = vcombine.high %v311, %v311
  %313 = vrot.lane.b32.xlu0 %v311, 107
  %v314 = vpop.permute.xlu0 %313
  %315 = vrot.lane.b32.xlu0 %v166, 107
  %v316 = vpop.permute.xlu0 %315
  %317 = vrot.lane.b32.xlu0 %v312, 107
  %v318 = vpop.permute.xlu0 %317
  %319 = vrot.lane.b32.xlu0 %v174, 107
  %v320 = vpop.permute.xlu0 %319
  %321 = vrot.lane.b32.xlu0 %v239, 107
  %v322 = vpop.permute.xlu0 %321
  %323 = vrot.lane.b32.xlu0 %v72, 107
  %v324 = vpop.permute.xlu0 %323
  %325 = vrot.lane.b32.xlu0 %v247, 107
  %v326 = vpop.permute.xlu0 %325
  %vm327 = vcmask 875520
  %v328 = vsel %vm327, %v314, %v316
  %v329 = vsel %vm327, %v316, %v318
  %v330 = vsel %vm327, %v318, %v320
  %v331 = vsel %vm327, %v320, %v322
  %v332 = vsel %vm327, %v322, %v324
  %v333 = vsel %vm327, %v324, %v326
  %v334 = vrot.slane %v104, 5
  %v335 = vrot.slane %v107, 5
  %v336 = vrot.slane %v110, 5
  %v337 = vrot.slane %v113, 5
  %v338 = vrot.slane %v116, 5
  %v339 = vrot.slane %v119, 5
  %v340 = vrot.slane %v122, 5
  %341 = vrot.lane.b32.xlu0 %v334, 106
  %v342 = vpop.permute.xlu0 %341
  %343 = vrot.lane.b32.xlu0 %v335, 106
  %v344 = vpop.permute.xlu0 %343
  %345 = vrot.lane.b32.xlu0 %v336, 106
  %v346 = vpop.permute.xlu0 %345
  %347 = vrot.lane.b32.xlu0 %v337, 106
  %v348 = vpop.permute.xlu0 %347
  %349 = vrot.lane.b32.xlu0 %v338, 106
  %v350 = vpop.permute.xlu0 %349
  %351 = vrot.lane.b32.xlu0 %v339, 106
  %v352 = vpop.permute.xlu0 %351
  %353 = vrot.lane.b32.xlu0 %v340, 106
  %v354 = vpop.permute.xlu0 %353
  %vm355 = vcmask 867328
  %v356 = vsel %vm355, %v342, %v344
  %v357 = vsel %vm355, %v344, %v346
  %v358 = vsel %vm355, %v346, %v348
  %v359 = vsel %vm355, %v348, %v350
  %v360 = vsel %vm355, %v350, %v352
  %v361 = vsel %vm355, %v352, %v354
  %v368 = vcombine.low %v72, %v72
  %v369 = vcombine.low %v79, %v79
  %v370 = vcombine.low %v86, %v86
  %v371 = vcombine.low %v93, %v93
  %372 = vrot.lane.b32.xlu0 %v368, 105
  %v373 = vpop.permute.xlu0 %372
  %374 = vrot.lane.b32.xlu0 %v370, 105
  %v375 = vpop.permute.xlu0 %374
  %376 = vrot.lane.b32.xlu0 %v72, 105
  %v377 = vpop.permute.xlu0 %376
  %378 = vrot.lane.b32.xlu0 %v86, 105
  %v379 = vpop.permute.xlu0 %378
  %380 = vrot.lane.b32.xlu0 %v369, 105
  %v381 = vpop.permute.xlu0 %380
  %382 = vrot.lane.b32.xlu0 %v371, 105
  %v383 = vpop.permute.xlu0 %382
  %384 = vrot.lane.b32.xlu0 %v79, 105
  %v385 = vpop.permute.xlu0 %384
  %vm386 = vcmask 859136
  %v387 = vsel %vm386, %v373, %v375
  %v388 = vsel %vm386, %v375, %v377
  %v389 = vsel %vm386, %v377, %v379
  %v390 = vsel %vm386, %v379, %v381
  %v391 = vsel %vm386, %v381, %v383
  %v392 = vsel %vm386, %v383, %v385
  %v393 = vrot.slane %v104, 4
  %v394 = vrot.slane %v107, 4
  %v395 = vrot.slane %v110, 4
  %v396 = vrot.slane %v113, 4
  %v397 = vrot.slane %v116, 4
  %v398 = vrot.slane %v119, 4
  %v399 = vrot.slane %v122, 4
  %400 = vrot.lane.b32.xlu0 %v393, 104
  %v401 = vpop.permute.xlu0 %400
  %402 = vrot.lane.b32.xlu0 %v394, 104
  %v403 = vpop.permute.xlu0 %402
  %404 = vrot.lane.b32.xlu0 %v395, 104
  %v405 = vpop.permute.xlu0 %404
  %406 = vrot.lane.b32.xlu0 %v396, 104
  %v407 = vpop.permute.xlu0 %406
  %408 = vrot.lane.b32.xlu0 %v397, 104
  %v409 = vpop.permute.xlu0 %408
  %410 = vrot.lane.b32.xlu0 %v398, 104
  %v411 = vpop.permute.xlu0 %410
  %412 = vrot.lane.b32.xlu0 %v399, 104
  %v413 = vpop.permute.xlu0 %412
  %vm414 = vcmask 850944
  %v415 = vsel %vm414, %v401, %v403
  %v416 = vsel %vm414, %v403, %v405
  %v417 = vsel %vm414, %v405, %v407
  %v418 = vsel %vm414, %v407, %v409
  %v419 = vsel %vm414, %v409, %v411
  %v420 = vsel %vm414, %v411, %v413
  %v427 = vcombine.low %v166, %v166
  %v428 = vcombine.low %v173, %v173
  %429 = vrot.lane.b32.xlu0 %v427, 88
  %v430 = vpop.permute.xlu0 %429
  %431 = vrot.lane.b32.xlu0 %v428, 88
  %v432 = vpop.permute.xlu0 %431
  %433 = vrot.lane.b32.xlu0 %v166, 88
  %v434 = vpop.permute.xlu0 %433
  %435 = vrot.lane.b32.xlu0 %v173, 88
  %v436 = vpop.permute.xlu0 %435
  %437 = vrot.lane.b32.xlu0 %v368, 88
  %v438 = vpop.permute.xlu0 %437
  %439 = vrot.lane.b32.xlu0 %v370, 88
  %v440 = vpop.permute.xlu0 %439
  %441 = vrot.lane.b32.xlu0 %v72, 88
  %v442 = vpop.permute.xlu0 %441
  %vm443 = vcmask 719872
  %v444 = vsel %vm443, %v430, %v432
  %v445 = vsel %vm443, %v432, %v434
  %v446 = vsel %vm443, %v434, %v436
  %v447 = vsel %vm443, %v436, %v438
  %v448 = vsel %vm443, %v438, %v440
  %v449 = vsel %vm443, %v440, %v442
  %v450 = vrot.slane %v104, 3
  %v451 = vrot.slane %v107, 3
  %v452 = vrot.slane %v110, 3
  %v453 = vrot.slane %v113, 3
  %v454 = vrot.slane %v116, 3
  %v455 = vrot.slane %v119, 3
  %v456 = vrot.slane %v122, 3
  %457 = vrot.lane.b32.xlu0 %v450, 87
  %v458 = vpop.permute.xlu0 %457
  %459 = vrot.lane.b32.xlu0 %v451, 87
  %v460 = vpop.permute.xlu0 %459
  %461 = vrot.lane.b32.xlu0 %v452, 87
  %v462 = vpop.permute.xlu0 %461
  %463 = vrot.lane.b32.xlu0 %v453, 87
  %v464 = vpop.permute.xlu0 %463
  %465 = vrot.lane.b32.xlu0 %v454, 87
  %v466 = vpop.permute.xlu0 %465
  %467 = vrot.lane.b32.xlu0 %v455, 87
  %v468 = vpop.permute.xlu0 %467
  %469 = vrot.lane.b32.xlu0 %v456, 87
  %v470 = vpop.permute.xlu0 %469
  %vm471 = vcmask 711680
  %v472 = vsel %vm471, %v458, %v460
  %v473 = vsel %vm471, %v460, %v462
  %v474 = vsel %vm471, %v462, %v464
  %v475 = vsel %vm471, %v464, %v466
  %v476 = vsel %vm471, %v466, %v468
  %v477 = vsel %vm471, %v468, %v470
  %v484 = vcombine.low %v239, %v239
  %v485 = vcombine.low %v246, %v246
  %486 = vrot.lane.b32.xlu0 %v484, 86
  %v487 = vpop.permute.xlu0 %486
  %488 = vrot.lane.b32.xlu0 %v368, 86
  %v489 = vpop.permute.xlu0 %488
  %490 = vrot.lane.b32.xlu0 %v239, 86
  %v491 = vpop.permute.xlu0 %490
  %492 = vrot.lane.b32.xlu0 %v72, 86
  %v493 = vpop.permute.xlu0 %492
  %494 = vrot.lane.b32.xlu0 %v485, 86
  %v495 = vpop.permute.xlu0 %494
  %496 = vrot.lane.b32.xlu0 %v369, 86
  %v497 = vpop.permute.xlu0 %496
  %498 = vrot.lane.b32.xlu0 %v246, 86
  %v499 = vpop.permute.xlu0 %498
  %vm500 = vcmask 703488
  %v501 = vsel %vm500, %v487, %v489
  %v502 = vsel %vm500, %v489, %v491
  %v503 = vsel %vm500, %v491, %v493
  %v504 = vsel %vm500, %v493, %v495
  %v505 = vsel %vm500, %v495, %v497
  %v506 = vsel %vm500, %v497, %v499
  %v507 = vrot.slane %v104, 2
  %v508 = vrot.slane %v107, 2
  %v509 = vrot.slane %v110, 2
  %v510 = vrot.slane %v113, 2
  %v511 = vrot.slane %v116, 2
  %v512 = vrot.slane %v119, 2
  %v513 = vrot.slane %v122, 2
  %514 = vrot.lane.b32.xlu0 %v507, 85
  %v515 = vpop.permute.xlu0 %514
  %516 = vrot.lane.b32.xlu0 %v508, 85
  %v517 = vpop.permute.xlu0 %516
  %518 = vrot.lane.b32.xlu0 %v509, 85
  %v519 = vpop.permute.xlu0 %518
  %520 = vrot.lane.b32.xlu0 %v510, 85
  %v521 = vpop.permute.xlu0 %520
  %522 = vrot.lane.b32.xlu0 %v511, 85
  %v523 = vpop.permute.xlu0 %522
  %524 = vrot.lane.b32.xlu0 %v512, 85
  %v525 = vpop.permute.xlu0 %524
  %526 = vrot.lane.b32.xlu0 %v513, 85
  %v527 = vpop.permute.xlu0 %526
  %vm528 = vcmask 695296
  %v529 = vsel %vm528, %v515, %v517
  %v530 = vsel %vm528, %v517, %v519
  %v531 = vsel %vm528, %v519, %v521
  %v532 = vsel %vm528, %v521, %v523
  %v533 = vsel %vm528, %v523, %v525
  %v534 = vsel %vm528, %v525, %v527
  %v541 = vcombine.low %v311, %v311
  %542 = vrot.lane.b32.xlu0 %v541, 84
  %v543 = vpop.permute.xlu0 %542
  %544 = vrot.lane.b32.xlu0 %v427, 84
  %v545 = vpop.permute.xlu0 %544
  %546 = vrot.lane.b32.xlu0 %v311, 84
  %v547 = vpop.permute.xlu0 %546
  %548 = vrot.lane.b32.xlu0 %v166, 84
  %v549 = vpop.permute.xlu0 %548
  %550 = vrot.lane.b32.xlu0 %v484, 84
  %v551 = vpop.permute.xlu0 %550
  %552 = vrot.lane.b32.xlu0 %v368, 84
  %v553 = vpop.permute.xlu0 %552
  %554 = vrot.lane.b32.xlu0 %v239, 84
  %v555 = vpop.permute.xlu0 %554
  %vm556 = vcmask 687104
  %v557 = vsel %vm556, %v543, %v545
  %v558 = vsel %vm556, %v545, %v547
  %v559 = vsel %vm556, %v547, %v549
  %v560 = vsel %vm556, %v549, %v551
  %v561 = vsel %vm556, %v551, %v553
  %v562 = vsel %vm556, %v553, %v555
  %v563 = vrot.slane %v104, 1
  %v564 = vrot.slane %v107, 1
  %v565 = vrot.slane %v110, 1
  %v566 = vrot.slane %v113, 1
  %v567 = vrot.slane %v116, 1
  %v568 = vrot.slane %v119, 1
  %v569 = vrot.slane %v122, 1
  %570 = vrot.lane.b32.xlu0 %v563, 68
  %v571 = vpop.permute.xlu0 %570
  %572 = vrot.lane.b32.xlu0 %v564, 68
  %v573 = vpop.permute.xlu0 %572
  %574 = vrot.lane.b32.xlu0 %v565, 68
  %v575 = vpop.permute.xlu0 %574
  %576 = vrot.lane.b32.xlu0 %v566, 68
  %v577 = vpop.permute.xlu0 %576
  %578 = vrot.lane.b32.xlu0 %v567, 68
  %v579 = vpop.permute.xlu0 %578
  %580 = vrot.lane.b32.xlu0 %v568, 68
  %v581 = vpop.permute.xlu0 %580
  %582 = vrot.lane.b32.xlu0 %v569, 68
  %v583 = vpop.permute.xlu0 %582
  %vm584 = vcmask 556032
  %v585 = vsel %vm584, %v571, %v573
  %v586 = vsel %vm584, %v573, %v575
  %v587 = vsel %vm584, %v575, %v577
  %v588 = vsel %vm584, %v577, %v579
  %v589 = vsel %vm584, %v579, %v581
  %v590 = vsel %vm584, %v581, %v583
  %vm597 = vcmask 1040384
  %vm598 = vsmask.f32 256
  %vm599 = vmand %vm597, %vm598
  %v600 = vsel %vm599, %v72, %v139
  %v601 = vsel %vm599, %v86, %v140
  %v602 = vsel %vm599, %v94, %v141
  %v603 = vsel %vm599, %v95, %v142
  %v604 = vsel %vm599, %v79, %v143
  %v605 = vsel %vm599, %v93, %v144
  %vm606 = vcmask 1040384
  %v609 = vsel %vm606, %v600, %v191
  %v613 = vsel %vm606, %v601, %v192
  %v617 = vsel %vm606, %v602, %v193
  %v621 = vsel %vm606, %v603, %v194
  %v625 = vsel %vm606, %v604, %v195
  %v629 = vsel %vm606, %v605, %v196
  %vm631 = vcmask 1041408
  %vm632 = vsmask.f32 1280
  %vm633 = vmand %vm631, %vm632
  %v634 = vsel %vm633, %v609, %v219
  %v635 = vsel %vm633, %v613, %v220
  %v636 = vsel %vm633, %v617, %v221
  %v637 = vsel %vm633, %v621, %v222
  %v638 = vsel %vm633, %v625, %v223
  %v639 = vsel %vm633, %v629, %v224
  %vm640 = vcmask 1041408
  %v643 = vsel %vm640, %v634, %v264
  %v647 = vsel %vm640, %v635, %v265
  %v651 = vsel %vm640, %v636, %v266
  %v655 = vsel %vm640, %v637, %v267
  %v659 = vsel %vm640, %v638, %v268
  %v663 = vsel %vm640, %v639, %v269
  %vm665 = vcmask 1042432
  %vm666 = vsmask.f32 2304
  %vm667 = vmand %vm665, %vm666
  %v668 = vsel %vm667, %v643, %v292
  %v669 = vsel %vm667, %v647, %v293
  %v670 = vsel %vm667, %v651, %v294
  %v671 = vsel %vm667, %v655, %v295
  %v672 = vsel %vm667, %v659, %v296
  %v673 = vsel %vm667, %v663, %v297
  %vm674 = vcmask 1042432
  %v677 = vsel %vm674, %v668, %v328
  %v681 = vsel %vm674, %v669, %v329
  %v685 = vsel %vm674, %v670, %v330
  %v689 = vsel %vm674, %v671, %v331
  %v693 = vsel %vm674, %v672, %v332
  %v697 = vsel %vm674, %v673, %v333
  %vm699 = vcmask 1043456
  %vm700 = vsmask.f32 3328
  %vm701 = vmand %vm699, %vm700
  %v702 = vsel %vm701, %v677, %v356
  %v703 = vsel %vm701, %v681, %v357
  %v704 = vsel %vm701, %v685, %v358
  %v705 = vsel %vm701, %v689, %v359
  %v706 = vsel %vm701, %v693, %v360
  %v707 = vsel %vm701, %v697, %v361
  %vm708 = vcmask 1043456
  %v711 = vsel %vm708, %v702, %v387
  %v715 = vsel %vm708, %v703, %v388
  %v719 = vsel %vm708, %v704, %v389
  %v723 = vsel %vm708, %v705, %v390
  %v727 = vsel %vm708, %v706, %v391
  %v731 = vsel %vm708, %v707, %v392
  %vm733 = vcmask 1044480
  %vm734 = vsmask.f32 4352
  %vm735 = vmand %vm733, %vm734
  %v736 = vsel %vm735, %v711, %v415
  %v737 = vsel %vm735, %v715, %v416
  %v738 = vsel %vm735, %v719, %v417
  %v739 = vsel %vm735, %v723, %v418
  %v740 = vsel %vm735, %v727, %v419
  %v741 = vsel %vm735, %v731, %v420
  %vm742 = vcmask 1044480
  %v745 = vsel %vm742, %v736, %v444
  %v749 = vsel %vm742, %v737, %v445
  %v753 = vsel %vm742, %v738, %v446
  %v757 = vsel %vm742, %v739, %v447
  %v761 = vsel %vm742, %v740, %v448
  %v765 = vsel %vm742, %v741, %v449
  %vm767 = vcmask 1045504
  %vm768 = vsmask.f32 5376
  %vm769 = vmand %vm767, %vm768
  %v770 = vsel %vm769, %v745, %v472
  %v771 = vsel %vm769, %v749, %v473
  %v772 = vsel %vm769, %v753, %v474
  %v773 = vsel %vm769, %v757, %v475
  %v774 = vsel %vm769, %v761, %v476
  %v775 = vsel %vm769, %v765, %v477
  %vm776 = vcmask 1045504
  %v779 = vsel %vm776, %v770, %v501
  %v783 = vsel %vm776, %v771, %v502
  %v787 = vsel %vm776, %v772, %v503
  %v791 = vsel %vm776, %v773, %v504
  %v795 = vsel %vm776, %v774, %v505
  %v799 = vsel %vm776, %v775, %v506
  %vm801 = vcmask 1046528
  %vm802 = vsmask.f32 6400
  %vm803 = vmand %vm801, %vm802
  %v804 = vsel %vm803, %v779, %v529
  %v805 = vsel %vm803, %v783, %v530
  %v806 = vsel %vm803, %v787, %v531
  %v807 = vsel %vm803, %v791, %v532
  %v808 = vsel %vm803, %v795, %v533
  %v809 = vsel %vm803, %v799, %v534
  %vm810 = vcmask 1046528
  %v813 = vsel %vm810, %v804, %v557
  %v817 = vsel %vm810, %v805, %v558
  %v821 = vsel %vm810, %v806, %v559
  %v825 = vsel %vm810, %v807, %v560
  %v829 = vsel %vm810, %v808, %v561
  %v833 = vsel %vm810, %v809, %v562
  %vm835 = vcmask 1047552
  %vm836 = vsmask.f32 7424
  %vm837 = vmand %vm835, %vm836
  %v838 = vsel %vm837, %v813, %v585
  %v839 = vsel %vm837, %v817, %v586
  %v840 = vsel %vm837, %v821, %v587
  %v841 = vsel %vm837, %v825, %v588
  %v842 = vsel %vm837, %v829, %v589
  %v843 = vsel %vm837, %v833, %v590
  %847 = vrot.lane.b32.xlu0 %v239, 109
  %v848 = vpop.permute.xlu0 %847
  %849 = vrot.lane.b32.xlu0 %v72, 109
  %v850 = vpop.permute.xlu0 %849
  %851 = vrot.lane.b32.xlu0 %v247, 109
  %v852 = vpop.permute.xlu0 %851
  %853 = vrot.lane.b32.xlu0 %v94, 109
  %v854 = vpop.permute.xlu0 %853
  %855 = vrot.lane.b32.xlu0 %v246, 109
  %v856 = vpop.permute.xlu0 %855
  %857 = vrot.lane.b32.xlu0 %v79, 109
  %v858 = vpop.permute.xlu0 %857
  %859 = vrot.lane.b32.xlu0 %v248, 109
  %v860 = vpop.permute.xlu0 %859
  %vm861 = vcmask 891904
  %v862 = vsel %vm861, %v848, %v850
  %v863 = vsel %vm861, %v850, %v852
  %v864 = vsel %vm861, %v852, %v854
  %v865 = vsel %vm861, %v854, %v856
  %v866 = vsel %vm861, %v856, %v858
  %v867 = vsel %vm861, %v858, %v860
  %v870 = vsel %vm599, %v102, %v137
  %v873 = vsel %vm606, %v870, %v189
  %v875 = vsel %vm633, %v873, %v217
  %v877 = vsel %vm640, %v634, %v862
  %v880 = vsel %vm640, %v635, %v863
  %v883 = vsel %vm640, %v636, %v864
  %v886 = vsel %vm640, %v637, %v865
  %v889 = vsel %vm640, %v638, %v866
  %v892 = vsel %vm640, %v639, %v867
  %v896 = vsel %vm640, %v875, %v860
  %v898 = vsel %vm667, %v877, %v292
  %v899 = vsel %vm667, %v880, %v293
  %v900 = vsel %vm667, %v883, %v294
  %v901 = vsel %vm667, %v886, %v295
  %v902 = vsel %vm667, %v889, %v296
  %v903 = vsel %vm667, %v892, %v297
  %v904 = vsel %vm667, %v896, %v290
  %v906 = vsel %vm674, %v898, %v328
  %v909 = vsel %vm674, %v899, %v329
  %v912 = vsel %vm674, %v900, %v330
  %v915 = vsel %vm674, %v901, %v331
  %v918 = vsel %vm674, %v902, %v332
  %v921 = vsel %vm674, %v903, %v333
  %v925 = vsel %vm674, %v904, %v326
  %v927 = vsel %vm701, %v906, %v356
  %v928 = vsel %vm701, %v909, %v357
  %v929 = vsel %vm701, %v912, %v358
  %v930 = vsel %vm701, %v915, %v359
  %v931 = vsel %vm701, %v918, %v360
  %v932 = vsel %vm701, %v921, %v361
  %v933 = vsel %vm701, %v925, %v354
  %v935 = vsel %vm708, %v927, %v387
  %v937 = vsel %vm708, %v928, %v388
  %v939 = vsel %vm708, %v929, %v389
  %v941 = vsel %vm708, %v930, %v390
  %v943 = vsel %vm708, %v931, %v391
  %v945 = vsel %vm708, %v932, %v392
  %v948 = vsel %vm708, %v933, %v385
  %956 = vrot.lane.b32.xlu0 %v935, 67
  %v957 = vpop.permute.xlu0 %956
  %958 = vrot.lane.b32.xlu0 %v937, 67
  %v959 = vpop.permute.xlu0 %958
  %960 = vrot.lane.b32.xlu0 %v939, 67
  %v961 = vpop.permute.xlu0 %960
  %962 = vrot.lane.b32.xlu0 %v941, 67
  %v963 = vpop.permute.xlu0 %962
  %964 = vrot.lane.b32.xlu0 %v943, 67
  %v965 = vpop.permute.xlu0 %964
  %966 = vrot.lane.b32.xlu0 %v945, 67
  %v967 = vpop.permute.xlu0 %966
  %968 = vrot.lane.b32.xlu0 %v948, 67
  %v969 = vpop.permute.xlu0 %968
  %vm970 = vcmask 547840
  %v971 = vsel %vm970, %v957, %v959
  %v972 = vsel %vm970, %v959, %v961
  %v973 = vsel %vm970, %v961, %v963
  %v974 = vsel %vm970, %v963, %v965
  %v975 = vsel %vm970, %v965, %v967
  %v976 = vsel %vm970, %v967, %v969
  %v977 = vld [vmem:[%s3] sm:$0xff]
  %v978 = vld [vmem:[%s3 + $0x8] sm:$0xff]
  %980 = vset.pattern.permute.xlu0 0
  %981 = vperm.xlu0 %980, %v977
  %v982 = vpop.permute.xlu0 %981
  %985 = vset.pattern.permute.xlu0 0
  %986 = vperm.xlu0 %985, %v978
  %v987 = vpop.permute.xlu0 %986
  %v991 = vunpack.c.l.b16 %v46
  %v992 = vunpack.c.l.b16 %v47
  %v993 = vpack.c.b16 %v992, %v991
  %vm994 = vcmask 203776
  %v996 = vsel %vm994, %v993, 0
  %v998 = vsel %vm708, 4294967295, 65535
  %v999 = vsel %vm742, %v998, 0
  %v1001 = vand.u32 %v971, %v999
  %v1004 = vand.u32 %v972, %v999
  %v1007 = vand.u32 %v973, %v999
  %v1010 = vand.u32 %v974, %v999
  %v1013 = vand.u32 %v975, %v999
  %v1016 = vand.u32 %v976, %v999
  %1018 = vmatprep.subr.bf16.mxu0 %v839
  %1019 = vmatpush1.bf16.msra.mxu0 %v838
  %1020 = vmatprep.subr.bf16.mxu0 %v1004
  %1021 = vmatpush1.bf16.msra.mxu0 %v1001
  %1022 = vmatprep.subr.bf16.mxu0 0
  %1023 = vmatpush1.bf16.msra.mxu0 0
  %1024 = vmatprep.subr.bf16.mxu0 0
  %1025 = vmatpush1.bf16.msra.mxu0 0
  %1026 = vmatprep.subr.bf16.mxu0 0
  %1027 = vmatpush1.bf16.msra.mxu0 0
  %1028 = vmatprep.subr.bf16.mxu0 0
  %1029 = vmatpush1.bf16.msra.mxu0 0
  %1030 = vmatprep.subr.bf16.mxu0 0
  %1031 = vmatpush1.bf16.msra.mxu0 0
  %1032 = vmatprep.subr.bf16.mxu0 0
  %1033 = vmatpush1.bf16.msra.mxu0 0
  %1034 = vmatprep.subr.bf16.mxu0 0
  %1035 = vmatpush1.bf16.msra.mxu0 0
  %1036 = vmatprep.subr.bf16.mxu0 0
  %1037 = vmatpush1.bf16.msra.mxu0 0
  %1038 = vmatprep.subr.bf16.mxu0 0
  %1039 = vmatpush1.bf16.msra.mxu0 0
  %1040 = vmatprep.subr.bf16.mxu0 0
  %1041 = vmatpush1.bf16.msra.mxu0 0
  %1042 = vmatprep.subr.bf16.mxu0 0
  %1043 = vmatpush1.bf16.msra.mxu0 0
  %1044 = vmatprep.subr.bf16.mxu0 0
  %1045 = vmatpush1.bf16.msra.mxu0 0
  %1046 = vmatprep.subr.bf16.mxu0 0
  %1047 = vmatpush1.bf16.msra.mxu0 0
  %1048 = vmatprep.subr.bf16.mxu0 0
  %1049 = vmatpush1.bf16.msra.mxu0 0
  %1050 = vmatprep.mubr.bf16.mxu0 0
  %1051 = vmatmul.mubr.bf16.gmra.mrb[0].mxu0 %v996
  %v1052 = vpop.f32.mrb[0].mxu0
  %v1053 = vadd.f32 %v982, %v1052
  %v1054 = vpop.f32.mrb[0].mxu0
  %v1055 = vadd.f32 %v982, %v1054
  %v1056 = vpop.f32.mrb[0].mxu0
  %v1057 = vadd.f32 %v987, %v1056
  %v1058 = vpop.f32.mrb[0].mxu0
  %v1059 = vadd.f32 %v987, %v1058
  %1060 = vdwg.mxu0
  %1061 = vmatprep.subr.bf16.mxu0 %v841
  %1062 = vmatpush1.bf16.msra.mxu0 %v840
  %1063 = vmatprep.subr.bf16.mxu0 %v1010
  %1064 = vmatpush1.bf16.msra.mxu0 %v1007
  %1065 = vmatprep.subr.bf16.mxu0 0
  %1066 = vmatpush1.bf16.msra.mxu0 0
  %1067 = vmatprep.subr.bf16.mxu0 0
  %1068 = vmatpush1.bf16.msra.mxu0 0
  %1069 = vmatprep.subr.bf16.mxu0 0
  %1070 = vmatpush1.bf16.msra.mxu0 0
  %1071 = vmatprep.subr.bf16.mxu0 0
  %1072 = vmatpush1.bf16.msra.mxu0 0
  %1073 = vmatprep.subr.bf16.mxu0 0
  %1074 = vmatpush1.bf16.msra.mxu0 0
  %1075 = vmatprep.subr.bf16.mxu0 0
  %1076 = vmatpush1.bf16.msra.mxu0 0
  %1077 = vmatprep.subr.bf16.mxu0 0
  %1078 = vmatpush1.bf16.msra.mxu0 0
  %1079 = vmatprep.subr.bf16.mxu0 0
  %1080 = vmatpush1.bf16.msra.mxu0 0
  %1081 = vmatprep.subr.bf16.mxu0 0
  %1082 = vmatpush1.bf16.msra.mxu0 0
  %1083 = vmatprep.subr.bf16.mxu0 0
  %1084 = vmatpush1.bf16.msra.mxu0 0
  %1085 = vmatprep.subr.bf16.mxu0 0
  %1086 = vmatpush1.bf16.msra.mxu0 0
  %1087 = vmatprep.subr.bf16.mxu0 0
  %1088 = vmatpush1.bf16.msra.mxu0 0
  %1089 = vmatprep.subr.bf16.mxu0 0
  %1090 = vmatpush1.bf16.msra.mxu0 0
  %1091 = vmatprep.subr.bf16.mxu0 0
  %1092 = vmatpush1.bf16.msra.mxu0 0
  %1093 = vmatprep.mubr.bf16.mxu0 0
  %1094 = vmatmul.mubr.bf16.gmra.mrb[0].mxu0 %v996
  %v1095 = vpop.f32.mrb[0].mxu0
  %v1096 = vadd.f32 %v982, %v1095
  %v1097 = vpop.f32.mrb[0].mxu0
  %v1098 = vadd.f32 %v982, %v1097
  %v1099 = vpop.f32.mrb[0].mxu0
  %v1100 = vadd.f32 %v987, %v1099
  %v1101 = vpop.f32.mrb[0].mxu0
  %v1102 = vadd.f32 %v987, %v1101
  %1103 = vdwg.mxu0
  %1104 = vmatprep.subr.bf16.mxu0 %v843
  %1105 = vmatpush1.bf16.msra.mxu0 %v842
  %1106 = vmatprep.subr.bf16.mxu0 %v1016
  %1107 = vmatpush1.bf16.msra.mxu0 %v1013
  %1108 = vmatprep.subr.bf16.mxu0 0
  %1109 = vmatpush1.bf16.msra.mxu0 0
  %1110 = vmatprep.subr.bf16.mxu0 0
  %1111 = vmatpush1.bf16.msra.mxu0 0
  %1112 = vmatprep.subr.bf16.mxu0 0
  %1113 = vmatpush1.bf16.msra.mxu0 0
  %1114 = vmatprep.subr.bf16.mxu0 0
  %1115 = vmatpush1.bf16.msra.mxu0 0
  %1116 = vmatprep.subr.bf16.mxu0 0
  %1117 = vmatpush1.bf16.msra.mxu0 0
  %1118 = vmatprep.subr.bf16.mxu0 0
  %1119 = vmatpush1.bf16.msra.mxu0 0
  %1120 = vmatprep.subr.bf16.mxu0 0
  %1121 = vmatpush1.bf16.msra.mxu0 0
  %1122 = vmatprep.subr.bf16.mxu0 0
  %1123 = vmatpush1.bf16.msra.mxu0 0
  %1124 = vmatprep.subr.bf16.mxu0 0
  %1125 = vmatpush1.bf16.msra.mxu0 0
  %1126 = vmatprep.subr.bf16.mxu0 0
  %1127 = vmatpush1.bf16.msra.mxu0 0
  %1128 = vmatprep.subr.bf16.mxu0 0
  %1129 = vmatpush1.bf16.msra.mxu0 0
  %1130 = vmatprep.subr.bf16.mxu0 0
  %1131 = vmatpush1.bf16.msra.mxu0 0
  %1132 = vmatprep.subr.bf16.mxu0 0
  %1133 = vmatpush1.bf16.msra.mxu0 0
  %1134 = vmatprep.subr.bf16.mxu0 0
  %1135 = vmatpush1.bf16.msra.mxu0 0
  %1136 = vmatprep.mubr.bf16.mxu0 0
  %1137 = vmatmul.mubr.bf16.gmra.mrb[0].mxu0 %v996
  %v1138 = vpop.f32.mrb[0].mxu0
  %v1139 = vadd.f32 %v982, %v1138
  %v1140 = vpop.f32.mrb[0].mxu0
  %v1141 = vadd.f32 %v982, %v1140
  %v1142 = vpop.f32.mrb[0].mxu0
  %v1143 = vadd.f32 %v987, %v1142
  %v1144 = vpop.f32.mrb[0].mxu0
  %v1145 = vadd.f32 %v987, %v1144
  %1146 = vdwg.mxu0
  %v1147 = vmax.f32 %v1053, 0.0
  %v1148 = vmax.f32 %v1055, 0.0
  %v1149 = vmax.f32 %v1096, 0.0
  %v1150 = vmax.f32 %v1098, 0.0
  %v1151 = vmax.f32 %v1139, 0.0
  %v1152 = vmax.f32 %v1141, 0.0
  %v1153 = vmax.f32 %v1057, 0.0
  %v1154 = vmax.f32 %v1059, 0.0
  %v1155 = vmax.f32 %v1100, 0.0
  %v1156 = vmax.f32 %v1102, 0.0
  %v1157 = vmax.f32 %v1143, 0.0
  %v1158 = vmax.f32 %v1145, 0.0
  %v1159 = vld [vmem:[%s10] sm:$0xff]
  %v1160 = vld [vmem:[%s10 + $0x8] sm:$0xff]
  %1162 = vset.pattern.permute.xlu0 0
  %1163 = vperm.xlu0 %1162, %v1159
  %v1164 = vpop.permute.xlu0 %1163
  %1167 = vset.pattern.permute.xlu0 0
  %1168 = vperm.xlu0 %1167, %v1160
  %v1169 = vpop.permute.xlu0 %1168
  %v1171 = vmul.f32 %v1147, %v1164
  %v1172 = vmul.f32 %v1148, %v1164
  %v1173 = vmul.f32 %v1149, %v1164
  %v1174 = vmul.f32 %v1150, %v1164
  %v1175 = vmul.f32 %v1151, %v1164
  %v1176 = vmul.f32 %v1152, %v1164
  %v1177 = vmul.f32 %v1153, %v1169
  %v1178 = vmul.f32 %v1154, %v1169
  %v1179 = vmul.f32 %v1155, %v1169
  %v1180 = vmul.f32 %v1156, %v1169
  %v1181 = vmul.f32 %v1157, %v1169
  %v1182 = vmul.f32 %v1158, %v1169
  %v1183 = vld [vmem:[%s11] sm:$0xff]
  %v1184 = vld [vmem:[%s11 + $0x8] sm:$0xff]
  %1186 = vset.pattern.permute.xlu0 0
  %1187 = vperm.xlu0 %1186, %v1183
  %v1188 = vpop.permute.xlu0 %1187
  %1191 = vset.pattern.permute.xlu0 0
  %1192 = vperm.xlu0 %1191, %v1184
  %v1193 = vpop.permute.xlu0 %1192
  %v1195 = vadd.f32 %v1171, %v1188
  %v1196 = vadd.f32 %v1172, %v1188
  %v1197 = vadd.f32 %v1173, %v1188
  %v1198 = vadd.f32 %v1174, %v1188
  %v1199 = vadd.f32 %v1175, %v1188
  %v1200 = vadd.f32 %v1176, %v1188
  %v1201 = vadd.f32 %v1177, %v1193
  %v1202 = vadd.f32 %v1178, %v1193
  %v1203 = vadd.f32 %v1179, %v1193
  %v1204 = vadd.f32 %v1180, %v1193
  %v1205 = vadd.f32 %v1181, %v1193
  %v1206 = vadd.f32 %v1182, %v1193
  %v1208 = vlaneseq
  %v1209 = vshrl.u32 %v1208, 7
  %v1210 = vsub.s32 0, %v1209
  %v1211 = vrot.slane %v44, %v1210
  %v1212 = vlaneseq
  %v1213 = vshrl.u32 %v1212, 7
  %v1214 = vsub.s32 1, %v1213
  %v1215 = vrot.slane %v44, %v1214
  %v1216 = vlaneseq
  %v1217 = vshrl.u32 %v1216, 7
  %v1218 = vsub.s32 2, %v1217
  %v1219 = vrot.slane %v44, %v1218
  %v1220 = vlaneseq
  %v1221 = vshrl.u32 %v1220, 7
  %v1222 = vsub.s32 3, %v1221
  %v1223 = vrot.slane %v44, %v1222
  %v1224 = vlaneseq
  %v1225 = vshrl.u32 %v1224, 7
  %v1226 = vsub.s32 4, %v1225
  %v1227 = vrot.slane %v44, %v1226
  %v1228 = vlaneseq
  %v1229 = vshrl.u32 %v1228, 7
  %v1230 = vsub.s32 5, %v1229
  %v1231 = vrot.slane %v44, %v1230
  %v1238 = vmul.f32 %v1195, %v1211
  %v1239 = vmul.f32 %v1196, %v1215
  %v1240 = vmul.f32 %v1197, %v1219
  %v1241 = vmul.f32 %v1198, %v1223
  %v1242 = vmul.f32 %v1199, %v1227
  %v1243 = vmul.f32 %v1200, %v1231
  %v1244 = vmul.f32 %v1201, %v1211
  %v1245 = vmul.f32 %v1202, %v1215
  %v1246 = vmul.f32 %v1203, %v1219
  %v1247 = vmul.f32 %v1204, %v1223
  %v1248 = vmul.f32 %v1205, %v1227
  %v1249 = vmul.f32 %v1206, %v1231
  %v1250 = vpack.c.bf16 %v1244, %v1238
  %v1251 = vpack.c.bf16 %v1245, %v1239
  %v1252 = vpack.c.bf16 %v1246, %v1240
  %v1253 = vpack.c.bf16 %v1247, %v1241
  %v1254 = vpack.c.bf16 %v1248, %v1242
  %v1255 = vpack.c.bf16 %v1249, %v1243
  %1262 = vrot.lane.b32.xlu0 %v1250, 42
  %v1263 = vpop.permute.xlu0 %1262
  %1264 = vrot.lane.b32.xlu0 %v1251, 42
  %v1265 = vpop.permute.xlu0 %1264
  %1266 = vrot.lane.b32.xlu0 %v1252, 42
  %v1267 = vpop.permute.xlu0 %1266
  %1268 = vrot.lane.b32.xlu0 %v1253, 42
  %v1269 = vpop.permute.xlu0 %1268
  %1270 = vrot.lane.b32.xlu0 %v1254, 42
  %v1271 = vpop.permute.xlu0 %1270
  %1272 = vrot.lane.b32.xlu0 %v1255, 42
  %v1273 = vpop.permute.xlu0 %1272
  %vm1274 = vcmask 343040
  %v1275 = vsel %vm1274, %v1263, %v1265
  %v1276 = vsel %vm1274, %v1265, %v1267
  %v1277 = vsel %vm1274, %v1267, %v1269
  %v1278 = vsel %vm1274, %v1269, %v1271
  %v1279 = vsel %vm1274, %v1271, %v1273
  %vm1285 = vcmask 343040
  %v1288 = vsel %vm1285, 0, %v1263
  %v1291 = vsel %vm1285, %v1273, 0
  %v1292 = vld [vmem:[%s4] sm:$0xff]
  %v1293 = vld [vmem:[%s4 + $0x8] sm:$0xff]
  %v1294 = vld [vmem:[%s4 + $0x10] sm:$0xff]
  %v1295 = vld [vmem:[%s4 + $0x18] sm:$0xff]
  %1298 = vrot.lane.b32.xlu0 %v1288, 127
  %v1299 = vpop.permute.xlu0 %1298
  %1300 = vrot.lane.b32.xlu0 %v1275, 127
  %v1301 = vpop.permute.xlu0 %1300
  %1302 = vrot.lane.b32.xlu0 %v1276, 127
  %v1303 = vpop.permute.xlu0 %1302
  %1304 = vrot.lane.b32.xlu0 %v1277, 127
  %v1305 = vpop.permute.xlu0 %1304
  %1306 = vrot.lane.b32.xlu0 %v1278, 127
  %v1307 = vpop.permute.xlu0 %1306
  %1308 = vrot.lane.b32.xlu0 %v1279, 127
  %v1309 = vpop.permute.xlu0 %1308
  %1310 = vrot.lane.b32.xlu0 %v1291, 127
  %v1311 = vpop.permute.xlu0 %1310
  %v1312 = vsel %vm138, %v1299, %v1301
  %v1313 = vsel %vm138, %v1301, %v1303
  %v1314 = vsel %vm138, %v1303, %v1305
  %v1315 = vsel %vm138, %v1305, %v1307
  %v1316 = vsel %vm138, %v1307, %v1309
  %v1317 = vsel %vm138, %v1309, %v1311
  %1324 = vrot.lane.b32.xlu0 %v1288, 126
  %v1325 = vpop.permute.xlu0 %1324
  %1326 = vrot.lane.b32.xlu0 %v1275, 126
  %v1327 = vpop.permute.xlu0 %1326
  %1328 = vrot.lane.b32.xlu0 %v1276, 126
  %v1329 = vpop.permute.xlu0 %1328
  %1330 = vrot.lane.b32.xlu0 %v1277, 126
  %v1331 = vpop.permute.xlu0 %1330
  %1332 = vrot.lane.b32.xlu0 %v1278, 126
  %v1333 = vpop.permute.xlu0 %1332
  %1334 = vrot.lane.b32.xlu0 %v1279, 126
  %v1335 = vpop.permute.xlu0 %1334
  %1336 = vrot.lane.b32.xlu0 %v1291, 126
  %v1337 = vpop.permute.xlu0 %1336
  %v1338 = vsel %vm190, %v1325, %v1327
  %v1339 = vsel %vm190, %v1327, %v1329
  %v1340 = vsel %vm190, %v1329, %v1331
  %v1341 = vsel %vm190, %v1331, %v1333
  %v1342 = vsel %vm190, %v1333, %v1335
  %v1343 = vsel %vm190, %v1335, %v1337
  %1350 = vrot.lane.b32.xlu0 %v1288, 125
  %v1351 = vpop.permute.xlu0 %1350
  %1352 = vrot.lane.b32.xlu0 %v1275, 125
  %v1353 = vpop.permute.xlu0 %1352
  %1354 = vrot.lane.b32.xlu0 %v1276, 125
  %v1355 = vpop.permute.xlu0 %1354
  %1356 = vrot.lane.b32.xlu0 %v1277, 125
  %v1357 = vpop.permute.xlu0 %1356
  %1358 = vrot.lane.b32.xlu0 %v1278, 125
  %v1359 = vpop.permute.xlu0 %1358
  %1360 = vrot.lane.b32.xlu0 %v1279, 125
  %v1361 = vpop.permute.xlu0 %1360
  %1362 = vrot.lane.b32.xlu0 %v1291, 125
  %v1363 = vpop.permute.xlu0 %1362
  %v1364 = vsel %vm218, %v1351, %v1353
  %v1365 = vsel %vm218, %v1353, %v1355
  %v1366 = vsel %vm218, %v1355, %v1357
  %v1367 = vsel %vm218, %v1357, %v1359
  %v1368 = vsel %vm218, %v1359, %v1361
  %v1369 = vsel %vm218, %v1361, %v1363
  %1376 = vrot.lane.b32.xlu0 %v1288, 124
  %v1377 = vpop.permute.xlu0 %1376
  %1378 = vrot.lane.b32.xlu0 %v1275, 124
  %v1379 = vpop.permute.xlu0 %1378
  %1380 = vrot.lane.b32.xlu0 %v1276, 124
  %v1381 = vpop.permute.xlu0 %1380
  %1382 = vrot.lane.b32.xlu0 %v1277, 124
  %v1383 = vpop.permute.xlu0 %1382
  %1384 = vrot.lane.b32.xlu0 %v1278, 124
  %v1385 = vpop.permute.xlu0 %1384
  %1386 = vrot.lane.b32.xlu0 %v1279, 124
  %v1387 = vpop.permute.xlu0 %1386
  %1388 = vrot.lane.b32.xlu0 %v1291, 124
  %v1389 = vpop.permute.xlu0 %1388
  %v1390 = vsel %vm263, %v1377, %v1379
  %v1391 = vsel %vm263, %v1379, %v1381
  %v1392 = vsel %vm263, %v1381, %v1383
  %v1393 = vsel %vm263, %v1383, %v1385
  %v1394 = vsel %vm263, %v1385, %v1387
  %v1395 = vsel %vm263, %v1387, %v1389
  %1402 = vrot.lane.b32.xlu0 %v1288, 108
  %v1403 = vpop.permute.xlu0 %1402
  %1404 = vrot.lane.b32.xlu0 %v1275, 108
  %v1405 = vpop.permute.xlu0 %1404
  %1406 = vrot.lane.b32.xlu0 %v1276, 108
  %v1407 = vpop.permute.xlu0 %1406
  %1408 = vrot.lane.b32.xlu0 %v1277, 108
  %v1409 = vpop.permute.xlu0 %1408
  %1410 = vrot.lane.b32.xlu0 %v1278, 108
  %v1411 = vpop.permute.xlu0 %1410
  %1412 = vrot.lane.b32.xlu0 %v1279, 108
  %v1413 = vpop.permute.xlu0 %1412
  %1414 = vrot.lane.b32.xlu0 %v1291, 108
  %v1415 = vpop.permute.xlu0 %1414
  %v1416 = vsel %vm291, %v1403, %v1405
  %v1417 = vsel %vm291, %v1405, %v1407
  %v1418 = vsel %vm291, %v1407, %v1409
  %v1419 = vsel %vm291, %v1409, %v1411
  %v1420 = vsel %vm291, %v1411, %v1413
  %v1421 = vsel %vm291, %v1413, %v1415
  %1428 = vrot.lane.b32.xlu0 %v1288, 107
  %v1429 = vpop.permute.xlu0 %1428
  %1430 = vrot.lane.b32.xlu0 %v1275, 107
  %v1431 = vpop.permute.xlu0 %1430
  %1432 = vrot.lane.b32.xlu0 %v1276, 107
  %v1433 = vpop.permute.xlu0 %1432
  %1434 = vrot.lane.b32.xlu0 %v1277, 107
  %v1435 = vpop.permute.xlu0 %1434
  %1436 = vrot.lane.b32.xlu0 %v1278, 107
  %v1437 = vpop.permute.xlu0 %1436
  %1438 = vrot.lane.b32.xlu0 %v1279, 107
  %v1439 = vpop.permute.xlu0 %1438
  %1440 = vrot.lane.b32.xlu0 %v1291, 107
  %v1441 = vpop.permute.xlu0 %1440
  %v1442 = vsel %vm327, %v1429, %v1431
  %v1443 = vsel %vm327, %v1431, %v1433
  %v1444 = vsel %vm327, %v1433, %v1435
  %v1445 = vsel %vm327, %v1435, %v1437
  %v1446 = vsel %vm327, %v1437, %v1439
  %v1447 = vsel %vm327, %v1439, %v1441
  %1454 = vrot.lane.b32.xlu0 %v1288, 106
  %v1455 = vpop.permute.xlu0 %1454
  %1456 = vrot.lane.b32.xlu0 %v1275, 106
  %v1457 = vpop.permute.xlu0 %1456
  %1458 = vrot.lane.b32.xlu0 %v1276, 106
  %v1459 = vpop.permute.xlu0 %1458
  %1460 = vrot.lane.b32.xlu0 %v1277, 106
  %v1461 = vpop.permute.xlu0 %1460
  %1462 = vrot.lane.b32.xlu0 %v1278, 106
  %v1463 = vpop.permute.xlu0 %1462
  %1464 = vrot.lane.b32.xlu0 %v1279, 106
  %v1465 = vpop.permute.xlu0 %1464
  %1466 = vrot.lane.b32.xlu0 %v1291, 106
  %v1467 = vpop.permute.xlu0 %1466
  %v1468 = vsel %vm355, %v1455, %v1457
  %v1469 = vsel %vm355, %v1457, %v1459
  %v1470 = vsel %vm355, %v1459, %v1461
  %v1471 = vsel %vm355, %v1461, %v1463
  %v1472 = vsel %vm355, %v1463, %v1465
  %v1473 = vsel %vm355, %v1465, %v1467
  %1480 = vrot.lane.b32.xlu0 %v1288, 105
  %v1481 = vpop.permute.xlu0 %1480
  %1482 = vrot.lane.b32.xlu0 %v1275, 105
  %v1483 = vpop.permute.xlu0 %1482
  %1484 = vrot.lane.b32.xlu0 %v1276, 105
  %v1485 = vpop.permute.xlu0 %1484
  %1486 = vrot.lane.b32.xlu0 %v1277, 105
  %v1487 = vpop.permute.xlu0 %1486
  %1488 = vrot.lane.b32.xlu0 %v1278, 105
  %v1489 = vpop.permute.xlu0 %1488
  %1490 = vrot.lane.b32.xlu0 %v1279, 105
  %v1491 = vpop.permute.xlu0 %1490
  %1492 = vrot.lane.b32.xlu0 %v1291, 105
  %v1493 = vpop.permute.xlu0 %1492
  %v1494 = vsel %vm386, %v1481, %v1483
  %v1495 = vsel %vm386, %v1483, %v1485
  %v1496 = vsel %vm386, %v1485, %v1487
  %v1497 = vsel %vm386, %v1487, %v1489
  %v1498 = vsel %vm386, %v1489, %v1491
  %v1499 = vsel %vm386, %v1491, %v1493
  %1506 = vrot.lane.b32.xlu0 %v1288, 104
  %v1507 = vpop.permute.xlu0 %1506
  %1508 = vrot.lane.b32.xlu0 %v1275, 104
  %v1509 = vpop.permute.xlu0 %1508
  %1510 = vrot.lane.b32.xlu0 %v1276, 104
  %v1511 = vpop.permute.xlu0 %1510
  %1512 = vrot.lane.b32.xlu0 %v1277, 104
  %v1513 = vpop.permute.xlu0 %1512
  %1514 = vrot.lane.b32.xlu0 %v1278, 104
  %v1515 = vpop.permute.xlu0 %1514
  %1516 = vrot.lane.b32.xlu0 %v1279, 104
  %v1517 = vpop.permute.xlu0 %1516
  %1518 = vrot.lane.b32.xlu0 %v1291, 104
  %v1519 = vpop.permute.xlu0 %1518
  %v1520 = vsel %vm414, %v1507, %v1509
  %v1521 = vsel %vm414, %v1509, %v1511
  %v1522 = vsel %vm414, %v1511, %v1513
  %v1523 = vsel %vm414, %v1513, %v1515
  %v1524 = vsel %vm414, %v1515, %v1517
  %v1525 = vsel %vm414, %v1517, %v1519
  %1532 = vrot.lane.b32.xlu0 %v1288, 88
  %v1533 = vpop.permute.xlu0 %1532
  %1534 = vrot.lane.b32.xlu0 %v1275, 88
  %v1535 = vpop.permute.xlu0 %1534
  %1536 = vrot.lane.b32.xlu0 %v1276, 88
  %v1537 = vpop.permute.xlu0 %1536
  %1538 = vrot.lane.b32.xlu0 %v1277, 88
  %v1539 = vpop.permute.xlu0 %1538
  %1540 = vrot.lane.b32.xlu0 %v1278, 88
  %v1541 = vpop.permute.xlu0 %1540
  %1542 = vrot.lane.b32.xlu0 %v1279, 88
  %v1543 = vpop.permute.xlu0 %1542
  %1544 = vrot.lane.b32.xlu0 %v1291, 88
  %v1545 = vpop.permute.xlu0 %1544
  %v1546 = vsel %vm443, %v1533, %v1535
  %v1547 = vsel %vm443, %v1535, %v1537
  %v1548 = vsel %vm443, %v1537, %v1539
  %v1549 = vsel %vm443, %v1539, %v1541
  %v1550 = vsel %vm443, %v1541, %v1543
  %v1551 = vsel %vm443, %v1543, %v1545
  %1558 = vrot.lane.b32.xlu0 %v1288, 87
  %v1559 = vpop.permute.xlu0 %1558
  %1560 = vrot.lane.b32.xlu0 %v1275, 87
  %v1561 = vpop.permute.xlu0 %1560
  %1562 = vrot.lane.b32.xlu0 %v1276, 87
  %v1563 = vpop.permute.xlu0 %1562
  %1564 = vrot.lane.b32.xlu0 %v1277, 87
  %v1565 = vpop.permute.xlu0 %1564
  %1566 = vrot.lane.b32.xlu0 %v1278, 87
  %v1567 = vpop.permute.xlu0 %1566
  %1568 = vrot.lane.b32.xlu0 %v1279, 87
  %v1569 = vpop.permute.xlu0 %1568
  %1570 = vrot.lane.b32.xlu0 %v1291, 87
  %v1571 = vpop.permute.xlu0 %1570
  %v1572 = vsel %vm471, %v1559, %v1561
  %v1573 = vsel %vm471, %v1561, %v1563
  %v1574 = vsel %vm471, %v1563, %v1565
  %v1575 = vsel %vm471, %v1565, %v1567
  %v1576 = vsel %vm471, %v1567, %v1569
  %v1577 = vsel %vm471, %v1569, %v1571
  %1584 = vrot.lane.b32.xlu0 %v1288, 86
  %v1585 = vpop.permute.xlu0 %1584
  %1586 = vrot.lane.b32.xlu0 %v1275, 86
  %v1587 = vpop.permute.xlu0 %1586
  %1588 = vrot.lane.b32.xlu0 %v1276, 86
  %v1589 = vpop.permute.xlu0 %1588
  %1590 = vrot.lane.b32.xlu0 %v1277, 86
  %v1591 = vpop.permute.xlu0 %1590
  %1592 = vrot.lane.b32.xlu0 %v1278, 86
  %v1593 = vpop.permute.xlu0 %1592
  %1594 = vrot.lane.b32.xlu0 %v1279, 86
  %v1595 = vpop.permute.xlu0 %1594
  %1596 = vrot.lane.b32.xlu0 %v1291, 86
  %v1597 = vpop.permute.xlu0 %1596
  %v1598 = vsel %vm500, %v1585, %v1587
  %v1599 = vsel %vm500, %v1587, %v1589
  %v1600 = vsel %vm500, %v1589, %v1591
  %v1601 = vsel %vm500, %v1591, %v1593
  %v1602 = vsel %vm500, %v1593, %v1595
  %v1603 = vsel %vm500, %v1595, %v1597
  %1610 = vrot.lane.b32.xlu0 %v1288, 85
  %v1611 = vpop.permute.xlu0 %1610
  %1612 = vrot.lane.b32.xlu0 %v1275, 85
  %v1613 = vpop.permute.xlu0 %1612
  %1614 = vrot.lane.b32.xlu0 %v1276, 85
  %v1615 = vpop.permute.xlu0 %1614
  %1616 = vrot.lane.b32.xlu0 %v1277, 85
  %v1617 = vpop.permute.xlu0 %1616
  %1618 = vrot.lane.b32.xlu0 %v1278, 85
  %v1619 = vpop.permute.xlu0 %1618
  %1620 = vrot.lane.b32.xlu0 %v1279, 85
  %v1621 = vpop.permute.xlu0 %1620
  %1622 = vrot.lane.b32.xlu0 %v1291, 85
  %v1623 = vpop.permute.xlu0 %1622
  %v1624 = vsel %vm528, %v1611, %v1613
  %v1625 = vsel %vm528, %v1613, %v1615
  %v1626 = vsel %vm528, %v1615, %v1617
  %v1627 = vsel %vm528, %v1617, %v1619
  %v1628 = vsel %vm528, %v1619, %v1621
  %v1629 = vsel %vm528, %v1621, %v1623
  %1636 = vrot.lane.b32.xlu0 %v1288, 84
  %v1637 = vpop.permute.xlu0 %1636
  %1638 = vrot.lane.b32.xlu0 %v1275, 84
  %v1639 = vpop.permute.xlu0 %1638
  %1640 = vrot.lane.b32.xlu0 %v1276, 84
  %v1641 = vpop.permute.xlu0 %1640
  %1642 = vrot.lane.b32.xlu0 %v1277, 84
  %v1643 = vpop.permute.xlu0 %1642
  %1644 = vrot.lane.b32.xlu0 %v1278, 84
  %v1645 = vpop.permute.xlu0 %1644
  %1646 = vrot.lane.b32.xlu0 %v1279, 84
  %v1647 = vpop.permute.xlu0 %1646
  %1648 = vrot.lane.b32.xlu0 %v1291, 84
  %v1649 = vpop.permute.xlu0 %1648
  %v1650 = vsel %vm556, %v1637, %v1639
  %v1651 = vsel %vm556, %v1639, %v1641
  %v1652 = vsel %vm556, %v1641, %v1643
  %v1653 = vsel %vm556, %v1643, %v1645
  %v1654 = vsel %vm556, %v1645, %v1647
  %v1655 = vsel %vm556, %v1647, %v1649
  %1662 = vrot.lane.b32.xlu0 %v1288, 68
  %v1663 = vpop.permute.xlu0 %1662
  %1664 = vrot.lane.b32.xlu0 %v1275, 68
  %v1665 = vpop.permute.xlu0 %1664
  %1666 = vrot.lane.b32.xlu0 %v1276, 68
  %v1667 = vpop.permute.xlu0 %1666
  %1668 = vrot.lane.b32.xlu0 %v1277, 68
  %v1669 = vpop.permute.xlu0 %1668
  %1670 = vrot.lane.b32.xlu0 %v1278, 68
  %v1671 = vpop.permute.xlu0 %1670
  %1672 = vrot.lane.b32.xlu0 %v1279, 68
  %v1673 = vpop.permute.xlu0 %1672
  %1674 = vrot.lane.b32.xlu0 %v1291, 68
  %v1675 = vpop.permute.xlu0 %1674
  %v1676 = vsel %vm584, %v1663, %v1665
  %v1677 = vsel %vm584, %v1665, %v1667
  %v1678 = vsel %vm584, %v1667, %v1669
  %v1679 = vsel %vm584, %v1669, %v1671
  %v1680 = vsel %vm584, %v1671, %v1673
  %v1681 = vsel %vm584, %v1673, %v1675
  %1688 = vrot.lane.b32.xlu0 %v1288, 109
  %v1689 = vpop.permute.xlu0 %1688
  %1690 = vrot.lane.b32.xlu0 %v1275, 109
  %v1691 = vpop.permute.xlu0 %1690
  %1692 = vrot.lane.b32.xlu0 %v1276, 109
  %v1693 = vpop.permute.xlu0 %1692
  %1694 = vrot.lane.b32.xlu0 %v1277, 109
  %v1695 = vpop.permute.xlu0 %1694
  %1696 = vrot.lane.b32.xlu0 %v1278, 109
  %v1697 = vpop.permute.xlu0 %1696
  %1698 = vrot.lane.b32.xlu0 %v1279, 109
  %v1699 = vpop.permute.xlu0 %1698
  %1700 = vrot.lane.b32.xlu0 %v1291, 109
  %v1701 = vpop.permute.xlu0 %1700
  %v1702 = vsel %vm861, %v1689, %v1691
  %v1703 = vsel %vm861, %v1691, %v1693
  %v1704 = vsel %vm861, %v1693, %v1695
  %v1705 = vsel %vm861, %v1695, %v1697
  %v1706 = vsel %vm861, %v1697, %v1699
  %v1707 = vsel %vm861, %v1699, %v1701
  %1708 = vrot.lane.b32.xlu0 %v1288, 67
  %v1709 = vpop.permute.xlu0 %1708
  %1710 = vrot.lane.b32.xlu0 %v1275, 67
  %v1711 = vpop.permute.xlu0 %1710
  %1712 = vrot.lane.b32.xlu0 %v1276, 67
  %v1713 = vpop.permute.xlu0 %1712
  %1714 = vrot.lane.b32.xlu0 %v1277, 67
  %v1715 = vpop.permute.xlu0 %1714
  %1716 = vrot.lane.b32.xlu0 %v1278, 67
  %v1717 = vpop.permute.xlu0 %1716
  %1718 = vrot.lane.b32.xlu0 %v1279, 67
  %v1719 = vpop.permute.xlu0 %1718
  %1720 = vrot.lane.b32.xlu0 %v1291, 67
  %v1721 = vpop.permute.xlu0 %1720
  %1722 = vrot.lane.b32.xlu0 %v1312, 67
  %v1723 = vpop.permute.xlu0 %1722
  %1724 = vrot.lane.b32.xlu0 %v1313, 67
  %v1725 = vpop.permute.xlu0 %1724
  %1726 = vrot.lane.b32.xlu0 %v1314, 67
  %v1727 = vpop.permute.xlu0 %1726
  %1728 = vrot.lane.b32.xlu0 %v1315, 67
  %v1729 = vpop.permute.xlu0 %1728
  %1730 = vrot.lane.b32.xlu0 %v1316, 67
  %v1731 = vpop.permute.xlu0 %1730
  %1732 = vrot.lane.b32.xlu0 %v1317, 67
  %v1733 = vpop.permute.xlu0 %1732
  %1734 = vrot.lane.b32.xlu0 %v1311, 67
  %v1735 = vpop.permute.xlu0 %1734
  %1736 = vrot.lane.b32.xlu0 %v1338, 67
  %v1737 = vpop.permute.xlu0 %1736
  %1738 = vrot.lane.b32.xlu0 %v1339, 67
  %v1739 = vpop.permute.xlu0 %1738
  %1740 = vrot.lane.b32.xlu0 %v1340, 67
  %v1741 = vpop.permute.xlu0 %1740
  %1742 = vrot.lane.b32.xlu0 %v1341, 67
  %v1743 = vpop.permute.xlu0 %1742
  %1744 = vrot.lane.b32.xlu0 %v1342, 67
  %v1745 = vpop.permute.xlu0 %1744
  %1746 = vrot.lane.b32.xlu0 %v1343, 67
  %v1747 = vpop.permute.xlu0 %1746
  %1748 = vrot.lane.b32.xlu0 %v1337, 67
  %v1749 = vpop.permute.xlu0 %1748
  %1750 = vrot.lane.b32.xlu0 %v1364, 67
  %v1751 = vpop.permute.xlu0 %1750
  %1752 = vrot.lane.b32.xlu0 %v1365, 67
  %v1753 = vpop.permute.xlu0 %1752
  %1754 = vrot.lane.b32.xlu0 %v1366, 67
  %v1755 = vpop.permute.xlu0 %1754
  %1756 = vrot.lane.b32.xlu0 %v1367, 67
  %v1757 = vpop.permute.xlu0 %1756
  %1758 = vrot.lane.b32.xlu0 %v1368, 67
  %v1759 = vpop.permute.xlu0 %1758
  %1760 = vrot.lane.b32.xlu0 %v1369, 67
  %v1761 = vpop.permute.xlu0 %1760
  %1762 = vrot.lane.b32.xlu0 %v1363, 67
  %v1763 = vpop.permute.xlu0 %1762
  %1764 = vrot.lane.b32.xlu0 %v1702, 67
  %v1765 = vpop.permute.xlu0 %1764
  %1766 = vrot.lane.b32.xlu0 %v1703, 67
  %v1767 = vpop.permute.xlu0 %1766
  %1768 = vrot.lane.b32.xlu0 %v1704, 67
  %v1769 = vpop.permute.xlu0 %1768
  %1770 = vrot.lane.b32.xlu0 %v1705, 67
  %v1771 = vpop.permute.xlu0 %1770
  %1772 = vrot.lane.b32.xlu0 %v1706, 67
  %v1773 = vpop.permute.xlu0 %1772
  %1774 = vrot.lane.b32.xlu0 %v1707, 67
  %v1775 = vpop.permute.xlu0 %1774
  %1776 = vrot.lane.b32.xlu0 %v1701, 67
  %v1777 = vpop.permute.xlu0 %1776
  %1778 = vrot.lane.b32.xlu0 %v1416, 67
  %v1779 = vpop.permute.xlu0 %1778
  %1780 = vrot.lane.b32.xlu0 %v1417, 67
  %v1781 = vpop.permute.xlu0 %1780
  %1782 = vrot.lane.b32.xlu0 %v1418, 67
  %v1783 = vpop.permute.xlu0 %1782
  %1784 = vrot.lane.b32.xlu0 %v1419, 67
  %v1785 = vpop.permute.xlu0 %1784
  %1786 = vrot.lane.b32.xlu0 %v1420, 67
  %v1787 = vpop.permute.xlu0 %1786
  %1788 = vrot.lane.b32.xlu0 %v1421, 67
  %v1789 = vpop.permute.xlu0 %1788
  %1790 = vrot.lane.b32.xlu0 %v1415, 67
  %v1791 = vpop.permute.xlu0 %1790
  %1792 = vrot.lane.b32.xlu0 %v1442, 67
  %v1793 = vpop.permute.xlu0 %1792
  %1794 = vrot.lane.b32.xlu0 %v1443, 67
  %v1795 = vpop.permute.xlu0 %1794
  %1796 = vrot.lane.b32.xlu0 %v1444, 67
  %v1797 = vpop.permute.xlu0 %1796
  %1798 = vrot.lane.b32.xlu0 %v1445, 67
  %v1799 = vpop.permute.xlu0 %1798
  %1800 = vrot.lane.b32.xlu0 %v1446, 67
  %v1801 = vpop.permute.xlu0 %1800
  %1802 = vrot.lane.b32.xlu0 %v1447, 67
  %v1803 = vpop.permute.xlu0 %1802
  %1804 = vrot.lane.b32.xlu0 %v1441, 67
  %v1805 = vpop.permute.xlu0 %1804
  %1806 = vrot.lane.b32.xlu0 %v1468, 67
  %v1807 = vpop.permute.xlu0 %1806
  %1808 = vrot.lane.b32.xlu0 %v1469, 67
  %v1809 = vpop.permute.xlu0 %1808
  %1810 = vrot.lane.b32.xlu0 %v1470, 67
  %v1811 = vpop.permute.xlu0 %1810
  %1812 = vrot.lane.b32.xlu0 %v1471, 67
  %v1813 = vpop.permute.xlu0 %1812
  %1814 = vrot.lane.b32.xlu0 %v1472, 67
  %v1815 = vpop.permute.xlu0 %1814
  %1816 = vrot.lane.b32.xlu0 %v1473, 67
  %v1817 = vpop.permute.xlu0 %1816
  %1818 = vrot.lane.b32.xlu0 %v1467, 67
  %v1819 = vpop.permute.xlu0 %1818
  %1820 = vrot.lane.b32.xlu0 %v1494, 67
  %v1821 = vpop.permute.xlu0 %1820
  %1822 = vrot.lane.b32.xlu0 %v1495, 67
  %v1823 = vpop.permute.xlu0 %1822
  %1824 = vrot.lane.b32.xlu0 %v1496, 67
  %v1825 = vpop.permute.xlu0 %1824
  %1826 = vrot.lane.b32.xlu0 %v1497, 67
  %v1827 = vpop.permute.xlu0 %1826
  %1828 = vrot.lane.b32.xlu0 %v1498, 67
  %v1829 = vpop.permute.xlu0 %1828
  %1830 = vrot.lane.b32.xlu0 %v1499, 67
  %v1831 = vpop.permute.xlu0 %1830
  %1832 = vrot.lane.b32.xlu0 %v1493, 67
  %v1833 = vpop.permute.xlu0 %1832
  %v1834 = vsel %vm970, %v1709, %v1711
  %v1835 = vsel %vm970, %v1711, %v1713
  %v1836 = vsel %vm970, %v1713, %v1715
  %v1837 = vsel %vm970, %v1715, %v1717
  %v1838 = vsel %vm970, %v1717, %v1719
  %v1839 = vsel %vm970, %v1719, %v1721
  %v1840 = vsel %vm970, %v1723, %v1725
  %v1841 = vsel %vm970, %v1725, %v1727
  %v1842 = vsel %vm970, %v1727, %v1729
  %v1843 = vsel %vm970, %v1729, %v1731
  %v1844 = vsel %vm970, %v1731, %v1733
  %v1845 = vsel %vm970, %v1733, %v1735
  %v1846 = vsel %vm970, %v1737, %v1739
  %v1847 = vsel %vm970, %v1739, %v1741
  %v1848 = vsel %vm970, %v1741, %v1743
  %v1849 = vsel %vm970, %v1743, %v1745
  %v1850 = vsel %vm970, %v1745, %v1747
  %v1851 = vsel %vm970, %v1747, %v1749
  %v1852 = vsel %vm970, %v1751, %v1753
  %v1853 = vsel %vm970, %v1753, %v1755
  %v1854 = vsel %vm970, %v1755, %v1757
  %v1855 = vsel %vm970, %v1757, %v1759
  %v1856 = vsel %vm970, %v1759, %v1761
  %v1857 = vsel %vm970, %v1761, %v1763
  %v1858 = vsel %vm970, %v1765, %v1767
  %v1859 = vsel %vm970, %v1767, %v1769
  %v1860 = vsel %vm970, %v1769, %v1771
  %v1861 = vsel %vm970, %v1771, %v1773
  %v1862 = vsel %vm970, %v1773, %v1775
  %v1863 = vsel %vm970, %v1775, %v1777
  %v1864 = vsel %vm970, %v1779, %v1781
  %v1865 = vsel %vm970, %v1781, %v1783
  %v1866 = vsel %vm970, %v1783, %v1785
  %v1867 = vsel %vm970, %v1785, %v1787
  %v1868 = vsel %vm970, %v1787, %v1789
  %v1869 = vsel %vm970, %v1789, %v1791
  %v1870 = vsel %vm970, %v1793, %v1795
  %v1871 = vsel %vm970, %v1795, %v1797
  %v1872 = vsel %vm970, %v1797, %v1799
  %v1873 = vsel %vm970, %v1799, %v1801
  %v1874 = vsel %vm970, %v1801, %v1803
  %v1875 = vsel %vm970, %v1803, %v1805
  %v1876 = vsel %vm970, %v1807, %v1809
  %v1877 = vsel %vm970, %v1809, %v1811
  %v1878 = vsel %vm970, %v1811, %v1813
  %v1879 = vsel %vm970, %v1813, %v1815
  %v1880 = vsel %vm970, %v1815, %v1817
  %v1881 = vsel %vm970, %v1817, %v1819
  %v1882 = vsel %vm970, %v1821, %v1823
  %v1883 = vsel %vm970, %v1823, %v1825
  %v1884 = vsel %vm970, %v1825, %v1827
  %v1885 = vsel %vm970, %v1827, %v1829
  %v1886 = vsel %vm970, %v1829, %v1831
  %v1887 = vsel %vm970, %v1831, %v1833
  %v1942 = vld [vmem:[%s5] sm:$0xff]
  %v1943 = vld [vmem:[%s5 + $0x8] sm:$0xff]
  %1945 = vset.pattern.permute.xlu0 0
  %1946 = vperm.xlu0 %1945, %v1942
  %v1947 = vpop.permute.xlu0 %1946
  %1950 = vset.pattern.permute.xlu0 0
  %1951 = vperm.xlu0 %1950, %v1943
  %v1952 = vpop.permute.xlu0 %1951
  %v1958 = vunpack.c.l.b16 %v1292
  %v1959 = vunpack.c.h.b16 %v1292
  %v1960 = vunpack.c.l.b16 %v1293
  %v1961 = vunpack.c.h.b16 %v1293
  %v1962 = vunpack.c.l.b16 %v1294
  %v1963 = vunpack.c.h.b16 %v1294
  %v1964 = vunpack.c.l.b16 %v1295
  %v1965 = vunpack.c.h.b16 %v1295
  %v1966 = vpack.c.b16 %v1962, %v1958
  %v1967 = vpack.c.b16 %v1963, %v1959
  %v1968 = vpack.c.b16 %v1964, %v1960
  %v1969 = vpack.c.b16 %v1965, %v1961
  %vm1973 = vcmask 130048
  %v1975 = vsel %vm1973, %v1969, 0
  %1977 = vmatprep.subr.bf16.mxu0 %v1275
  %1978 = vmatpush1.bf16.msra.mxu0 %v1288
  %1979 = vmatprep.subr.bf16.mxu0 %v1313
  %1980 = vmatpush1.bf16.msra.mxu0 %v1312
  %1981 = vmatprep.subr.bf16.mxu0 %v1339
  %1982 = vmatpush1.bf16.msra.mxu0 %v1338
  %1983 = vmatprep.subr.bf16.mxu0 %v1365
  %1984 = vmatpush1.bf16.msra.mxu0 %v1364
  %1985 = vmatprep.subr.bf16.mxu0 %v1391
  %1986 = vmatpush1.bf16.msra.mxu0 %v1390
  %1987 = vmatprep.subr.bf16.mxu0 %v1417
  %1988 = vmatpush1.bf16.msra.mxu0 %v1416
  %1989 = vmatprep.subr.bf16.mxu0 %v1443
  %1990 = vmatpush1.bf16.msra.mxu0 %v1442
  %1991 = vmatprep.subr.bf16.mxu0 %v1469
  %1992 = vmatpush1.bf16.msra.mxu0 %v1468
  %1993 = vmatprep.subr.bf16.mxu0 %v1495
  %1994 = vmatpush1.bf16.msra.mxu0 %v1494
  %1995 = vmatprep.subr.bf16.mxu0 %v1521
  %1996 = vmatpush1.bf16.msra.mxu0 %v1520
  %1997 = vmatprep.subr.bf16.mxu0 %v1547
  %1998 = vmatpush1.bf16.msra.mxu0 %v1546
  %1999 = vmatprep.subr.bf16.mxu0 %v1573
  %2000 = vmatpush1.bf16.msra.mxu0 %v1572
  %2001 = vmatprep.subr.bf16.mxu0 %v1599
  %2002 = vmatpush1.bf16.msra.mxu0 %v1598
  %2003 = vmatprep.subr.bf16.mxu0 %v1625
  %2004 = vmatpush1.bf16.msra.mxu0 %v1624
  %2005 = vmatprep.subr.bf16.mxu0 %v1651
  %2006 = vmatpush1.bf16.msra.mxu0 %v1650
  %2007 = vmatprep.subr.bf16.mxu0 %v1677
  %2008 = vmatpush1.bf16.msra.mxu0 %v1676
  %2009 = vmatprep.mubr.bf16.mxu0 %v1967
  %2010 = vmatmul.mubr.bf16.gmra.mrb[0].mxu0 %v1966
  %v2011 = vpop.f32.mrb[0].mxu0
  %v2012 = vadd.f32 %v1947, %v2011
  %v2013 = vpop.f32.mrb[0].mxu0
  %v2014 = vadd.f32 %v1947, %v2013
  %v2015 = vpop.f32.mrb[0].mxu0
  %v2016 = vadd.f32 %v1952, %v2015
  %v2017 = vpop.f32.mrb[0].mxu0
  %v2018 = vadd.f32 %v1952, %v2017
  %2019 = vdwg.mxu0
  %2020 = vmatprep.subr.bf16.mxu0 %v1835
  %2021 = vmatpush1.bf16.msra.mxu0 %v1834
  %2022 = vmatprep.subr.bf16.mxu0 %v1841
  %2023 = vmatpush1.bf16.msra.mxu0 %v1840
  %2024 = vmatprep.subr.bf16.mxu0 %v1847
  %2025 = vmatpush1.bf16.msra.mxu0 %v1846
  %2026 = vmatprep.subr.bf16.mxu0 %v1853
  %2027 = vmatpush1.bf16.msra.mxu0 %v1852
  %2028 = vmatprep.subr.bf16.mxu0 %v1859
  %2029 = vmatpush1.bf16.msra.mxu0 %v1858
  %2030 = vmatprep.subr.bf16.mxu0 %v1865
  %2031 = vmatpush1.bf16.msra.mxu0 %v1864
  %2032 = vmatprep.subr.bf16.mxu0 %v1871
  %2033 = vmatpush1.bf16.msra.mxu0 %v1870
  %2034 = vmatprep.subr.bf16.mxu0 %v1877
  %2035 = vmatpush1.bf16.msra.mxu0 %v1876
  %2036 = vmatprep.subr.bf16.mxu0 %v1883
  %2037 = vmatpush1.bf16.msra.mxu0 %v1882
  %2038 = vmatprep.subr.bf16.mxu0 0
  %2039 = vmatpush1.bf16.msra.mxu0 0
  %2040 = vmatprep.subr.bf16.mxu0 0
  %2041 = vmatpush1.bf16.msra.mxu0 0
  %2042 = vmatprep.subr.bf16.mxu0 0
  %2043 = vmatpush1.bf16.msra.mxu0 0
  %2044 = vmatprep.subr.bf16.mxu0 0
  %2045 = vmatpush1.bf16.msra.mxu0 0
  %2046 = vmatprep.subr.bf16.mxu0 0
  %2047 = vmatpush1.bf16.msra.mxu0 0
  %2048 = vmatprep.subr.bf16.mxu0 0
  %2049 = vmatpush1.bf16.msra.mxu0 0
  %2050 = vmatprep.subr.bf16.mxu0 0
  %2051 = vmatpush1.bf16.msra.mxu0 0
  %2052 = vmatprep.mubr.bf16.mxu0 %v1975
  %2053 = vmatmul.mubr.bf16.gmra.mrb[0].mxu0 %v1968
  %v2054 = vpop.f32.mrb[0].mxu0
  %v2055 = vadd.f32 %v2012, %v2054
  %v2056 = vpop.f32.mrb[0].mxu0
  %v2057 = vadd.f32 %v2014, %v2056
  %v2058 = vpop.f32.mrb[0].mxu0
  %v2059 = vadd.f32 %v2016, %v2058
  %v2060 = vpop.f32.mrb[0].mxu0
  %v2061 = vadd.f32 %v2018, %v2060
  %2062 = vdwg.mxu0
  %2063 = vmatprep.subr.bf16.mxu0 %v1277
  %2064 = vmatpush1.bf16.msra.mxu0 %v1276
  %2065 = vmatprep.subr.bf16.mxu0 %v1315
  %2066 = vmatpush1.bf16.msra.mxu0 %v1314
  %2067 = vmatprep.subr.bf16.mxu0 %v1341
  %2068 = vmatpush1.bf16.msra.mxu0 %v1340
  %2069 = vmatprep.subr.bf16.mxu0 %v1367
  %2070 = vmatpush1.bf16.msra.mxu0 %v1366
  %2071 = vmatprep.subr.bf16.mxu0 %v1393
  %2072 = vmatpush1.bf16.msra.mxu0 %v1392
  %2073 = vmatprep.subr.bf16.mxu0 %v1419
  %2074 = vmatpush1.bf16.msra.mxu0 %v1418
  %2075 = vmatprep.subr.bf16.mxu0 %v1445
  %2076 = vmatpush1.bf16.msra.mxu0 %v1444
  %2077 = vmatprep.subr.bf16.mxu0 %v1471
  %2078 = vmatpush1.bf16.msra.mxu0 %v1470
  %2079 = vmatprep.subr.bf16.mxu0 %v1497
  %2080 = vmatpush1.bf16.msra.mxu0 %v1496
  %2081 = vmatprep.subr.bf16.mxu0 %v1523
  %2082 = vmatpush1.bf16.msra.mxu0 %v1522
  %2083 = vmatprep.subr.bf16.mxu0 %v1549
  %2084 = vmatpush1.bf16.msra.mxu0 %v1548
  %2085 = vmatprep.subr.bf16.mxu0 %v1575
  %2086 = vmatpush1.bf16.msra.mxu0 %v1574
  %2087 = vmatprep.subr.bf16.mxu0 %v1601
  %2088 = vmatpush1.bf16.msra.mxu0 %v1600
  %2089 = vmatprep.subr.bf16.mxu0 %v1627
  %2090 = vmatpush1.bf16.msra.mxu0 %v1626
  %2091 = vmatprep.subr.bf16.mxu0 %v1653
  %2092 = vmatpush1.bf16.msra.mxu0 %v1652
  %2093 = vmatprep.subr.bf16.mxu0 %v1679
  %2094 = vmatpush1.bf16.msra.mxu0 %v1678
  %2095 = vmatprep.mubr.bf16.mxu0 %v1967
  %2096 = vmatmul.mubr.bf16.gmra.mrb[0].mxu0 %v1966
  %v2097 = vpop.f32.mrb[0].mxu0
  %v2098 = vadd.f32 %v1947, %v2097
  %v2099 = vpop.f32.mrb[0].mxu0
  %v2100 = vadd.f32 %v1947, %v2099
  %v2101 = vpop.f32.mrb[0].mxu0
  %v2102 = vadd.f32 %v1952, %v2101
  %v2103 = vpop.f32.mrb[0].mxu0
  %v2104 = vadd.f32 %v1952, %v2103
  %2105 = vdwg.mxu0
  %2106 = vmatprep.subr.bf16.mxu0 %v1837
  %2107 = vmatpush1.bf16.msra.mxu0 %v1836
  %2108 = vmatprep.subr.bf16.mxu0 %v1843
  %2109 = vmatpush1.bf16.msra.mxu0 %v1842
  %2110 = vmatprep.subr.bf16.mxu0 %v1849
  %2111 = vmatpush1.bf16.msra.mxu0 %v1848
  %2112 = vmatprep.subr.bf16.mxu0 %v1855
  %2113 = vmatpush1.bf16.msra.mxu0 %v1854
  %2114 = vmatprep.subr.bf16.mxu0 %v1861
  %2115 = vmatpush1.bf16.msra.mxu0 %v1860
  %2116 = vmatprep.subr.bf16.mxu0 %v1867
  %2117 = vmatpush1.bf16.msra.mxu0 %v1866
  %2118 = vmatprep.subr.bf16.mxu0 %v1873
  %2119 = vmatpush1.bf16.msra.mxu0 %v1872
  %2120 = vmatprep.subr.bf16.mxu0 %v1879
  %2121 = vmatpush1.bf16.msra.mxu0 %v1878
  %2122 = vmatprep.subr.bf16.mxu0 %v1885
  %2123 = vmatpush1.bf16.msra.mxu0 %v1884
  %2124 = vmatprep.subr.bf16.mxu0 0
  %2125 = vmatpush1.bf16.msra.mxu0 0
  %2126 = vmatprep.subr.bf16.mxu0 0
  %2127 = vmatpush1.bf16.msra.mxu0 0
  %2128 = vmatprep.subr.bf16.mxu0 0
  %2129 = vmatpush1.bf16.msra.mxu0 0
  %2130 = vmatprep.subr.bf16.mxu0 0
  %2131 = vmatpush1.bf16.msra.mxu0 0
  %2132 = vmatprep.subr.bf16.mxu0 0
  %2133 = vmatpush1.bf16.msra.mxu0 0
  %2134 = vmatprep.subr.bf16.mxu0 0
  %2135 = vmatpush1.bf16.msra.mxu0 0
  %2136 = vmatprep.subr.bf16.mxu0 0
  %2137 = vmatpush1.bf16.msra.mxu0 0
  %2138 = vmatprep.mubr.bf16.mxu0 %v1975
  %2139 = vmatmul.mubr.bf16.gmra.mrb[0].mxu0 %v1968
  %v2140 = vpop.f32.mrb[0].mxu0
  %v2141 = vadd.f32 %v2098, %v2140
  %v2142 = vpop.f32.mrb[0].mxu0
  %v2143 = vadd.f32 %v2100, %v2142
  %v2144 = vpop.f32.mrb[0].mxu0
  %v2145 = vadd.f32 %v2102, %v2144
  %v2146 = vpop.f32.mrb[0].mxu0
  %v2147 = vadd.f32 %v2104, %v2146
  %2148 = vdwg.mxu0
  %2149 = vmatprep.subr.bf16.mxu0 %v1279
  %2150 = vmatpush1.bf16.msra.mxu0 %v1278
  %2151 = vmatprep.subr.bf16.mxu0 %v1317
  %2152 = vmatpush1.bf16.msra.mxu0 %v1316
  %2153 = vmatprep.subr.bf16.mxu0 %v1343
  %2154 = vmatpush1.bf16.msra.mxu0 %v1342
  %2155 = vmatprep.subr.bf16.mxu0 %v1369
  %2156 = vmatpush1.bf16.msra.mxu0 %v1368
  %2157 = vmatprep.subr.bf16.mxu0 %v1395
  %2158 = vmatpush1.bf16.msra.mxu0 %v1394
  %2159 = vmatprep.subr.bf16.mxu0 %v1421
  %2160 = vmatpush1.bf16.msra.mxu0 %v1420
  %2161 = vmatprep.subr.bf16.mxu0 %v1447
  %2162 = vmatpush1.bf16.msra.mxu0 %v1446
  %2163 = vmatprep.subr.bf16.mxu0 %v1473
  %2164 = vmatpush1.bf16.msra.mxu0 %v1472
  %2165 = vmatprep.subr.bf16.mxu0 %v1499
  %2166 = vmatpush1.bf16.msra.mxu0 %v1498
  %2167 = vmatprep.subr.bf16.mxu0 %v1525
  %2168 = vmatpush1.bf16.msra.mxu0 %v1524
  %2169 = vmatprep.subr.bf16.mxu0 %v1551
  %2170 = vmatpush1.bf16.msra.mxu0 %v1550
  %2171 = vmatprep.subr.bf16.mxu0 %v1577
  %2172 = vmatpush1.bf16.msra.mxu0 %v1576
  %2173 = vmatprep.subr.bf16.mxu0 %v1603
  %2174 = vmatpush1.bf16.msra.mxu0 %v1602
  %2175 = vmatprep.subr.bf16.mxu0 %v1629
  %2176 = vmatpush1.bf16.msra.mxu0 %v1628
  %2177 = vmatprep.subr.bf16.mxu0 %v1655
  %2178 = vmatpush1.bf16.msra.mxu0 %v1654
  %2179 = vmatprep.subr.bf16.mxu0 %v1681
  %2180 = vmatpush1.bf16.msra.mxu0 %v1680
  %2181 = vmatprep.mubr.bf16.mxu0 %v1967
  %2182 = vmatmul.mubr.bf16.gmra.mrb[0].mxu0 %v1966
  %v2183 = vpop.f32.mrb[0].mxu0
  %v2184 = vadd.f32 %v1947, %v2183
  %v2185 = vpop.f32.mrb[0].mxu0
  %v2186 = vadd.f32 %v1947, %v2185
  %v2187 = vpop.f32.mrb[0].mxu0
  %v2188 = vadd.f32 %v1952, %v2187
  %v2189 = vpop.f32.mrb[0].mxu0
  %v2190 = vadd.f32 %v1952, %v2189
  %2191 = vdwg.mxu0
  %2192 = vmatprep.subr.bf16.mxu0 %v1839
  %2193 = vmatpush1.bf16.msra.mxu0 %v1838
  %2194 = vmatprep.subr.bf16.mxu0 %v1845
  %2195 = vmatpush1.bf16.msra.mxu0 %v1844
  %2196 = vmatprep.subr.bf16.mxu0 %v1851
  %2197 = vmatpush1.bf16.msra.mxu0 %v1850
  %2198 = vmatprep.subr.bf16.mxu0 %v1857
  %2199 = vmatpush1.bf16.msra.mxu0 %v1856
  %2200 = vmatprep.subr.bf16.mxu0 %v1863
  %2201 = vmatpush1.bf16.msra.mxu0 %v1862
  %2202 = vmatprep.subr.bf16.mxu0 %v1869
  %2203 = vmatpush1.bf16.msra.mxu0 %v1868
  %2204 = vmatprep.subr.bf16.mxu0 %v1875
  %2205 = vmatpush1.bf16.msra.mxu0 %v1874
  %2206 = vmatprep.subr.bf16.mxu0 %v1881
  %2207 = vmatpush1.bf16.msra.mxu0 %v1880
  %2208 = vmatprep.subr.bf16.mxu0 %v1887
  %2209 = vmatpush1.bf16.msra.mxu0 %v1886
  %2210 = vmatprep.subr.bf16.mxu0 0
  %2211 = vmatpush1.bf16.msra.mxu0 0
  %2212 = vmatprep.subr.bf16.mxu0 0
  %2213 = vmatpush1.bf16.msra.mxu0 0
  %2214 = vmatprep.subr.bf16.mxu0 0
  %2215 = vmatpush1.bf16.msra.mxu0 0
  %2216 = vmatprep.subr.bf16.mxu0 0
  %2217 = vmatpush1.bf16.msra.mxu0 0
  %2218 = vmatprep.subr.bf16.mxu0 0
  %2219 = vmatpush1.bf16.msra.mxu0 0
  %2220 = vmatprep.subr.bf16.mxu0 0
  %2221 = vmatpush1.bf16.msra.mxu0 0
  %2222 = vmatprep.subr.bf16.mxu0 0
  %2223 = vmatpush1.bf16.msra.mxu0 0
  %2224 = vmatprep.mubr.bf16.mxu0 %v1975
  %2225 = vmatmul.mubr.bf16.gmra.mrb[0].mxu0 %v1968
  %v2226 = vpop.f32.mrb[0].mxu0
  %v2227 = vadd.f32 %v2184, %v2226
  %v2228 = vpop.f32.mrb[0].mxu0
  %v2229 = vadd.f32 %v2186, %v2228
  %v2230 = vpop.f32.mrb[0].mxu0
  %v2231 = vadd.f32 %v2188, %v2230
  %v2232 = vpop.f32.mrb[0].mxu0
  %v2233 = vadd.f32 %v2190, %v2232
  %2234 = vdwg.mxu0
  %v2235 = vmax.f32 %v2055, 0.0
  %v2236 = vmax.f32 %v2057, 0.0
  %v2237 = vmax.f32 %v2141, 0.0
  %v2238 = vmax.f32 %v2143, 0.0
  %v2239 = vmax.f32 %v2227, 0.0
  %v2240 = vmax.f32 %v2229, 0.0
  %v2241 = vmax.f32 %v2059, 0.0
  %v2242 = vmax.f32 %v2061, 0.0
  %v2243 = vmax.f32 %v2145, 0.0
  %v2244 = vmax.f32 %v2147, 0.0
  %v2245 = vmax.f32 %v2231, 0.0
  %v2246 = vmax.f32 %v2233, 0.0
  %v2247 = vmul.f32 %v2235, %v1164
  %v2248 = vmul.f32 %v2236, %v1164
  %v2249 = vmul.f32 %v2237, %v1164
  %v2250 = vmul.f32 %v2238, %v1164
  %v2251 = vmul.f32 %v2239, %v1164
  %v2252 = vmul.f32 %v2240, %v1164
  %v2253 = vmul.f32 %v2241, %v1169
  %v2254 = vmul.f32 %v2242, %v1169
  %v2255 = vmul.f32 %v2243, %v1169
  %v2256 = vmul.f32 %v2244, %v1169
  %v2257 = vmul.f32 %v2245, %v1169
  %v2258 = vmul.f32 %v2246, %v1169
  %v2259 = vadd.f32 %v2247, %v1188
  %v2260 = vadd.f32 %v2248, %v1188
  %v2261 = vadd.f32 %v2249, %v1188
  %v2262 = vadd.f32 %v2250, %v1188
  %v2263 = vadd.f32 %v2251, %v1188
  %v2264 = vadd.f32 %v2252, %v1188
  %v2265 = vadd.f32 %v2253, %v1193
  %v2266 = vadd.f32 %v2254, %v1193
  %v2267 = vadd.f32 %v2255, %v1193
  %v2268 = vadd.f32 %v2256, %v1193
  %v2269 = vadd.f32 %v2257, %v1193
  %v2270 = vadd.f32 %v2258, %v1193
  %v2271 = vmul.f32 %v2259, %v1211
  %v2272 = vmul.f32 %v2260, %v1215
  %v2273 = vmul.f32 %v2261, %v1219
  %v2274 = vmul.f32 %v2262, %v1223
  %v2275 = vmul.f32 %v2263, %v1227
  %v2276 = vmul.f32 %v2264, %v1231
  %v2277 = vmul.f32 %v2265, %v1211
  %v2278 = vmul.f32 %v2266, %v1215
  %v2279 = vmul.f32 %v2267, %v1219
  %v2280 = vmul.f32 %v2268, %v1223
  %v2281 = vmul.f32 %v2269, %v1227
  %v2282 = vmul.f32 %v2270, %v1231
  %v2283 = vpack.c.bf16 %v2277, %v2271
  %v2284 = vpack.c.bf16 %v2278, %v2272
  %v2285 = vpack.c.bf16 %v2279, %v2273
  %v2286 = vpack.c.bf16 %v2280, %v2274
  %v2287 = vpack.c.bf16 %v2281, %v2275
  %v2288 = vpack.c.bf16 %v2282, %v2276
  %2295 = vrot.lane.b32.xlu0 %v2283, 42
  %v2296 = vpop.permute.xlu0 %2295
  %2297 = vrot.lane.b32.xlu0 %v2284, 42
  %v2298 = vpop.permute.xlu0 %2297
  %2299 = vrot.lane.b32.xlu0 %v2285, 42
  %v2300 = vpop.permute.xlu0 %2299
  %2301 = vrot.lane.b32.xlu0 %v2286, 42
  %v2302 = vpop.permute.xlu0 %2301
  %2303 = vrot.lane.b32.xlu0 %v2287, 42
  %v2304 = vpop.permute.xlu0 %2303
  %2305 = vrot.lane.b32.xlu0 %v2288, 42
  %v2306 = vpop.permute.xlu0 %2305
  %v2307 = vsel %vm1274, %v2296, %v2298
  %v2308 = vsel %vm1274, %v2298, %v2300
  %v2309 = vsel %vm1274, %v2300, %v2302
  %v2310 = vsel %vm1274, %v2302, %v2304
  %v2311 = vsel %vm1274, %v2304, %v2306
  %v2318 = vsel %vm1285, 0, %v2296
  %v2321 = vsel %vm1285, %v2306, 0
  %v2322 = vld [vmem:[%s6] sm:$0xff]
  %v2323 = vld [vmem:[%s6 + $0x8] sm:$0xff]
  %v2324 = vld [vmem:[%s6 + $0x10] sm:$0xff]
  %v2325 = vld [vmem:[%s6 + $0x18] sm:$0xff]
  %2328 = vrot.lane.b32.xlu0 %v2318, 127
  %v2329 = vpop.permute.xlu0 %2328
  %2330 = vrot.lane.b32.xlu0 %v2307, 127
  %v2331 = vpop.permute.xlu0 %2330
  %2332 = vrot.lane.b32.xlu0 %v2308, 127
  %v2333 = vpop.permute.xlu0 %2332
  %2334 = vrot.lane.b32.xlu0 %v2309, 127
  %v2335 = vpop.permute.xlu0 %2334
  %2336 = vrot.lane.b32.xlu0 %v2310, 127
  %v2337 = vpop.permute.xlu0 %2336
  %2338 = vrot.lane.b32.xlu0 %v2311, 127
  %v2339 = vpop.permute.xlu0 %2338
  %2340 = vrot.lane.b32.xlu0 %v2321, 127
  %v2341 = vpop.permute.xlu0 %2340
  %v2342 = vsel %vm138, %v2329, %v2331
  %v2343 = vsel %vm138, %v2331, %v2333
  %v2344 = vsel %vm138, %v2333, %v2335
  %v2345 = vsel %vm138, %v2335, %v2337
  %v2346 = vsel %vm138, %v2337, %v2339
  %v2347 = vsel %vm138, %v2339, %v2341
  %2354 = vrot.lane.b32.xlu0 %v2318, 126
  %v2355 = vpop.permute.xlu0 %2354
  %2356 = vrot.lane.b32.xlu0 %v2307, 126
  %v2357 = vpop.permute.xlu0 %2356
  %2358 = vrot.lane.b32.xlu0 %v2308, 126
  %v2359 = vpop.permute.xlu0 %2358
  %2360 = vrot.lane.b32.xlu0 %v2309, 126
  %v2361 = vpop.permute.xlu0 %2360
  %2362 = vrot.lane.b32.xlu0 %v2310, 126
  %v2363 = vpop.permute.xlu0 %2362
  %2364 = vrot.lane.b32.xlu0 %v2311, 126
  %v2365 = vpop.permute.xlu0 %2364
  %2366 = vrot.lane.b32.xlu0 %v2321, 126
  %v2367 = vpop.permute.xlu0 %2366
  %v2368 = vsel %vm190, %v2355, %v2357
  %v2369 = vsel %vm190, %v2357, %v2359
  %v2370 = vsel %vm190, %v2359, %v2361
  %v2371 = vsel %vm190, %v2361, %v2363
  %v2372 = vsel %vm190, %v2363, %v2365
  %v2373 = vsel %vm190, %v2365, %v2367
  %2380 = vrot.lane.b32.xlu0 %v2318, 125
  %v2381 = vpop.permute.xlu0 %2380
  %2382 = vrot.lane.b32.xlu0 %v2307, 125
  %v2383 = vpop.permute.xlu0 %2382
  %2384 = vrot.lane.b32.xlu0 %v2308, 125
  %v2385 = vpop.permute.xlu0 %2384
  %2386 = vrot.lane.b32.xlu0 %v2309, 125
  %v2387 = vpop.permute.xlu0 %2386
  %2388 = vrot.lane.b32.xlu0 %v2310, 125
  %v2389 = vpop.permute.xlu0 %2388
  %2390 = vrot.lane.b32.xlu0 %v2311, 125
  %v2391 = vpop.permute.xlu0 %2390
  %2392 = vrot.lane.b32.xlu0 %v2321, 125
  %v2393 = vpop.permute.xlu0 %2392
  %v2394 = vsel %vm218, %v2381, %v2383
  %v2395 = vsel %vm218, %v2383, %v2385
  %v2396 = vsel %vm218, %v2385, %v2387
  %v2397 = vsel %vm218, %v2387, %v2389
  %v2398 = vsel %vm218, %v2389, %v2391
  %v2399 = vsel %vm218, %v2391, %v2393
  %2406 = vrot.lane.b32.xlu0 %v2318, 124
  %v2407 = vpop.permute.xlu0 %2406
  %2408 = vrot.lane.b32.xlu0 %v2307, 124
  %v2409 = vpop.permute.xlu0 %2408
  %2410 = vrot.lane.b32.xlu0 %v2308, 124
  %v2411 = vpop.permute.xlu0 %2410
  %2412 = vrot.lane.b32.xlu0 %v2309, 124
  %v2413 = vpop.permute.xlu0 %2412
  %2414 = vrot.lane.b32.xlu0 %v2310, 124
  %v2415 = vpop.permute.xlu0 %2414
  %2416 = vrot.lane.b32.xlu0 %v2311, 124
  %v2417 = vpop.permute.xlu0 %2416
  %2418 = vrot.lane.b32.xlu0 %v2321, 124
  %v2419 = vpop.permute.xlu0 %2418
  %v2420 = vsel %vm263, %v2407, %v2409
  %v2421 = vsel %vm263, %v2409, %v2411
  %v2422 = vsel %vm263, %v2411, %v2413
  %v2423 = vsel %vm263, %v2413, %v2415
  %v2424 = vsel %vm263, %v2415, %v2417
  %v2425 = vsel %vm263, %v2417, %v2419
  %2432 = vrot.lane.b32.xlu0 %v2318, 108
  %v2433 = vpop.permute.xlu0 %2432
  %2434 = vrot.lane.b32.xlu0 %v2307, 108
  %v2435 = vpop.permute.xlu0 %2434
  %2436 = vrot.lane.b32.xlu0 %v2308, 108
  %v2437 = vpop.permute.xlu0 %2436
  %2438 = vrot.lane.b32.xlu0 %v2309, 108
  %v2439 = vpop.permute.xlu0 %2438
  %2440 = vrot.lane.b32.xlu0 %v2310, 108
  %v2441 = vpop.permute.xlu0 %2440
  %2442 = vrot.lane.b32.xlu0 %v2311, 108
  %v2443 = vpop.permute.xlu0 %2442
  %2444 = vrot.lane.b32.xlu0 %v2321, 108
  %v2445 = vpop.permute.xlu0 %2444
  %v2446 = vsel %vm291, %v2433, %v2435
  %v2447 = vsel %vm291, %v2435, %v2437
  %v2448 = vsel %vm291, %v2437, %v2439
  %v2449 = vsel %vm291, %v2439, %v2441
  %v2450 = vsel %vm291, %v2441, %v2443
  %v2451 = vsel %vm291, %v2443, %v2445
  %2458 = vrot.lane.b32.xlu0 %v2318, 107
  %v2459 = vpop.permute.xlu0 %2458
  %2460 = vrot.lane.b32.xlu0 %v2307, 107
  %v2461 = vpop.permute.xlu0 %2460
  %2462 = vrot.lane.b32.xlu0 %v2308, 107
  %v2463 = vpop.permute.xlu0 %2462
  %2464 = vrot.lane.b32.xlu0 %v2309, 107
  %v2465 = vpop.permute.xlu0 %2464
  %2466 = vrot.lane.b32.xlu0 %v2310, 107
  %v2467 = vpop.permute.xlu0 %2466
  %2468 = vrot.lane.b32.xlu0 %v2311, 107
  %v2469 = vpop.permute.xlu0 %2468
  %2470 = vrot.lane.b32.xlu0 %v2321, 107
  %v2471 = vpop.permute.xlu0 %2470
  %v2472 = vsel %vm327, %v2459, %v2461
  %v2473 = vsel %vm327, %v2461, %v2463
  %v2474 = vsel %vm327, %v2463, %v2465
  %v2475 = vsel %vm327, %v2465, %v2467
  %v2476 = vsel %vm327, %v2467, %v2469
  %v2477 = vsel %vm327, %v2469, %v2471
  %2484 = vrot.lane.b32.xlu0 %v2318, 106
  %v2485 = vpop.permute.xlu0 %2484
  %2486 = vrot.lane.b32.xlu0 %v2307, 106
  %v2487 = vpop.permute.xlu0 %2486
  %2488 = vrot.lane.b32.xlu0 %v2308, 106
  %v2489 = vpop.permute.xlu0 %2488
  %2490 = vrot.lane.b32.xlu0 %v2309, 106
  %v2491 = vpop.permute.xlu0 %2490
  %2492 = vrot.lane.b32.xlu0 %v2310, 106
  %v2493 = vpop.permute.xlu0 %2492
  %2494 = vrot.lane.b32.xlu0 %v2311, 106
  %v2495 = vpop.permute.xlu0 %2494
  %2496 = vrot.lane.b32.xlu0 %v2321, 106
  %v2497 = vpop.permute.xlu0 %2496
  %v2498 = vsel %vm355, %v2485, %v2487
  %v2499 = vsel %vm355, %v2487, %v2489
  %v2500 = vsel %vm355, %v2489, %v2491
  %v2501 = vsel %vm355, %v2491, %v2493
  %v2502 = vsel %vm355, %v2493, %v2495
  %v2503 = vsel %vm355, %v2495, %v2497
  %2510 = vrot.lane.b32.xlu0 %v2318, 105
  %v2511 = vpop.permute.xlu0 %2510
  %2512 = vrot.lane.b32.xlu0 %v2307, 105
  %v2513 = vpop.permute.xlu0 %2512
  %2514 = vrot.lane.b32.xlu0 %v2308, 105
  %v2515 = vpop.permute.xlu0 %2514
  %2516 = vrot.lane.b32.xlu0 %v2309, 105
  %v2517 = vpop.permute.xlu0 %2516
  %2518 = vrot.lane.b32.xlu0 %v2310, 105
  %v2519 = vpop.permute.xlu0 %2518
  %2520 = vrot.lane.b32.xlu0 %v2311, 105
  %v2521 = vpop.permute.xlu0 %2520
  %2522 = vrot.lane.b32.xlu0 %v2321, 105
  %v2523 = vpop.permute.xlu0 %2522
  %v2524 = vsel %vm386, %v2511, %v2513
  %v2525 = vsel %vm386, %v2513, %v2515
  %v2526 = vsel %vm386, %v2515, %v2517
  %v2527 = vsel %vm386, %v2517, %v2519
  %v2528 = vsel %vm386, %v2519, %v2521
  %v2529 = vsel %vm386, %v2521, %v2523
  %2536 = vrot.lane.b32.xlu0 %v2318, 104
  %v2537 = vpop.permute.xlu0 %2536
  %2538 = vrot.lane.b32.xlu0 %v2307, 104
  %v2539 = vpop.permute.xlu0 %2538
  %2540 = vrot.lane.b32.xlu0 %v2308, 104
  %v2541 = vpop.permute.xlu0 %2540
  %2542 = vrot.lane.b32.xlu0 %v2309, 104
  %v2543 = vpop.permute.xlu0 %2542
  %2544 = vrot.lane.b32.xlu0 %v2310, 104
  %v2545 = vpop.permute.xlu0 %2544
  %2546 = vrot.lane.b32.xlu0 %v2311, 104
  %v2547 = vpop.permute.xlu0 %2546
  %2548 = vrot.lane.b32.xlu0 %v2321, 104
  %v2549 = vpop.permute.xlu0 %2548
  %v2550 = vsel %vm414, %v2537, %v2539
  %v2551 = vsel %vm414, %v2539, %v2541
  %v2552 = vsel %vm414, %v2541, %v2543
  %v2553 = vsel %vm414, %v2543, %v2545
  %v2554 = vsel %vm414, %v2545, %v2547
  %v2555 = vsel %vm414, %v2547, %v2549
  %2562 = vrot.lane.b32.xlu0 %v2318, 88
  %v2563 = vpop.permute.xlu0 %2562
  %2564 = vrot.lane.b32.xlu0 %v2307, 88
  %v2565 = vpop.permute.xlu0 %2564
  %2566 = vrot.lane.b32.xlu0 %v2308, 88
  %v2567 = vpop.permute.xlu0 %2566
  %2568 = vrot.lane.b32.xlu0 %v2309, 88
  %v2569 = vpop.permute.xlu0 %2568
  %2570 = vrot.lane.b32.xlu0 %v2310, 88
  %v2571 = vpop.permute.xlu0 %2570
  %2572 = vrot.lane.b32.xlu0 %v2311, 88
  %v2573 = vpop.permute.xlu0 %2572
  %2574 = vrot.lane.b32.xlu0 %v2321, 88
  %v2575 = vpop.permute.xlu0 %2574
  %v2576 = vsel %vm443, %v2563, %v2565
  %v2577 = vsel %vm443, %v2565, %v2567
  %v2578 = vsel %vm443, %v2567, %v2569
  %v2579 = vsel %vm443, %v2569, %v2571
  %v2580 = vsel %vm443, %v2571, %v2573
  %v2581 = vsel %vm443, %v2573, %v2575
  %2588 = vrot.lane.b32.xlu0 %v2318, 87
  %v2589 = vpop.permute.xlu0 %2588
  %2590 = vrot.lane.b32.xlu0 %v2307, 87
  %v2591 = vpop.permute.xlu0 %2590
  %2592 = vrot.lane.b32.xlu0 %v2308, 87
  %v2593 = vpop.permute.xlu0 %2592
  %2594 = vrot.lane.b32.xlu0 %v2309, 87
  %v2595 = vpop.permute.xlu0 %2594
  %2596 = vrot.lane.b32.xlu0 %v2310, 87
  %v2597 = vpop.permute.xlu0 %2596
  %2598 = vrot.lane.b32.xlu0 %v2311, 87
  %v2599 = vpop.permute.xlu0 %2598
  %2600 = vrot.lane.b32.xlu0 %v2321, 87
  %v2601 = vpop.permute.xlu0 %2600
  %v2602 = vsel %vm471, %v2589, %v2591
  %v2603 = vsel %vm471, %v2591, %v2593
  %v2604 = vsel %vm471, %v2593, %v2595
  %v2605 = vsel %vm471, %v2595, %v2597
  %v2606 = vsel %vm471, %v2597, %v2599
  %v2607 = vsel %vm471, %v2599, %v2601
  %2614 = vrot.lane.b32.xlu0 %v2318, 86
  %v2615 = vpop.permute.xlu0 %2614
  %2616 = vrot.lane.b32.xlu0 %v2307, 86
  %v2617 = vpop.permute.xlu0 %2616
  %2618 = vrot.lane.b32.xlu0 %v2308, 86
  %v2619 = vpop.permute.xlu0 %2618
  %2620 = vrot.lane.b32.xlu0 %v2309, 86
  %v2621 = vpop.permute.xlu0 %2620
  %2622 = vrot.lane.b32.xlu0 %v2310, 86
  %v2623 = vpop.permute.xlu0 %2622
  %2624 = vrot.lane.b32.xlu0 %v2311, 86
  %v2625 = vpop.permute.xlu0 %2624
  %2626 = vrot.lane.b32.xlu0 %v2321, 86
  %v2627 = vpop.permute.xlu0 %2626
  %v2628 = vsel %vm500, %v2615, %v2617
  %v2629 = vsel %vm500, %v2617, %v2619
  %v2630 = vsel %vm500, %v2619, %v2621
  %v2631 = vsel %vm500, %v2621, %v2623
  %v2632 = vsel %vm500, %v2623, %v2625
  %v2633 = vsel %vm500, %v2625, %v2627
  %2640 = vrot.lane.b32.xlu0 %v2318, 85
  %v2641 = vpop.permute.xlu0 %2640
  %2642 = vrot.lane.b32.xlu0 %v2307, 85
  %v2643 = vpop.permute.xlu0 %2642
  %2644 = vrot.lane.b32.xlu0 %v2308, 85
  %v2645 = vpop.permute.xlu0 %2644
  %2646 = vrot.lane.b32.xlu0 %v2309, 85
  %v2647 = vpop.permute.xlu0 %2646
  %2648 = vrot.lane.b32.xlu0 %v2310, 85
  %v2649 = vpop.permute.xlu0 %2648
  %2650 = vrot.lane.b32.xlu0 %v2311, 85
  %v2651 = vpop.permute.xlu0 %2650
  %2652 = vrot.lane.b32.xlu0 %v2321, 85
  %v2653 = vpop.permute.xlu0 %2652
  %v2654 = vsel %vm528, %v2641, %v2643
  %v2655 = vsel %vm528, %v2643, %v2645
  %v2656 = vsel %vm528, %v2645, %v2647
  %v2657 = vsel %vm528, %v2647, %v2649
  %v2658 = vsel %vm528, %v2649, %v2651
  %v2659 = vsel %vm528, %v2651, %v2653
  %2666 = vrot.lane.b32.xlu0 %v2318, 84
  %v2667 = vpop.permute.xlu0 %2666
  %2668 = vrot.lane.b32.xlu0 %v2307, 84
  %v2669 = vpop.permute.xlu0 %2668
  %2670 = vrot.lane.b32.xlu0 %v2308, 84
  %v2671 = vpop.permute.xlu0 %2670
  %2672 = vrot.lane.b32.xlu0 %v2309, 84
  %v2673 = vpop.permute.xlu0 %2672
  %2674 = vrot.lane.b32.xlu0 %v2310, 84
  %v2675 = vpop.permute.xlu0 %2674
  %2676 = vrot.lane.b32.xlu0 %v2311, 84
  %v2677 = vpop.permute.xlu0 %2676
  %2678 = vrot.lane.b32.xlu0 %v2321, 84
  %v2679 = vpop.permute.xlu0 %2678
  %v2680 = vsel %vm556, %v2667, %v2669
  %v2681 = vsel %vm556, %v2669, %v2671
  %v2682 = vsel %vm556, %v2671, %v2673
  %v2683 = vsel %vm556, %v2673, %v2675
  %v2684 = vsel %vm556, %v2675, %v2677
  %v2685 = vsel %vm556, %v2677, %v2679
  %2692 = vrot.lane.b32.xlu0 %v2318, 68
  %v2693 = vpop.permute.xlu0 %2692
  %2694 = vrot.lane.b32.xlu0 %v2307, 68
  %v2695 = vpop.permute.xlu0 %2694
  %2696 = vrot.lane.b32.xlu0 %v2308, 68
  %v2697 = vpop.permute.xlu0 %2696
  %2698 = vrot.lane.b32.xlu0 %v2309, 68
  %v2699 = vpop.permute.xlu0 %2698
  %2700 = vrot.lane.b32.xlu0 %v2310, 68
  %v2701 = vpop.permute.xlu0 %2700
  %2702 = vrot.lane.b32.xlu0 %v2311, 68
  %v2703 = vpop.permute.xlu0 %2702
  %2704 = vrot.lane.b32.xlu0 %v2321, 68
  %v2705 = vpop.permute.xlu0 %2704
  %v2706 = vsel %vm584, %v2693, %v2695
  %v2707 = vsel %vm584, %v2695, %v2697
  %v2708 = vsel %vm584, %v2697, %v2699
  %v2709 = vsel %vm584, %v2699, %v2701
  %v2710 = vsel %vm584, %v2701, %v2703
  %v2711 = vsel %vm584, %v2703, %v2705
  %2718 = vrot.lane.b32.xlu0 %v2318, 109
  %v2719 = vpop.permute.xlu0 %2718
  %2720 = vrot.lane.b32.xlu0 %v2307, 109
  %v2721 = vpop.permute.xlu0 %2720
  %2722 = vrot.lane.b32.xlu0 %v2308, 109
  %v2723 = vpop.permute.xlu0 %2722
  %2724 = vrot.lane.b32.xlu0 %v2309, 109
  %v2725 = vpop.permute.xlu0 %2724
  %2726 = vrot.lane.b32.xlu0 %v2310, 109
  %v2727 = vpop.permute.xlu0 %2726
  %2728 = vrot.lane.b32.xlu0 %v2311, 109
  %v2729 = vpop.permute.xlu0 %2728
  %2730 = vrot.lane.b32.xlu0 %v2321, 109
  %v2731 = vpop.permute.xlu0 %2730
  %v2732 = vsel %vm861, %v2719, %v2721
  %v2733 = vsel %vm861, %v2721, %v2723
  %v2734 = vsel %vm861, %v2723, %v2725
  %v2735 = vsel %vm861, %v2725, %v2727
  %v2736 = vsel %vm861, %v2727, %v2729
  %v2737 = vsel %vm861, %v2729, %v2731
  %2738 = vrot.lane.b32.xlu0 %v2318, 67
  %v2739 = vpop.permute.xlu0 %2738
  %2740 = vrot.lane.b32.xlu0 %v2307, 67
  %v2741 = vpop.permute.xlu0 %2740
  %2742 = vrot.lane.b32.xlu0 %v2308, 67
  %v2743 = vpop.permute.xlu0 %2742
  %2744 = vrot.lane.b32.xlu0 %v2309, 67
  %v2745 = vpop.permute.xlu0 %2744
  %2746 = vrot.lane.b32.xlu0 %v2310, 67
  %v2747 = vpop.permute.xlu0 %2746
  %2748 = vrot.lane.b32.xlu0 %v2311, 67
  %v2749 = vpop.permute.xlu0 %2748
  %2750 = vrot.lane.b32.xlu0 %v2321, 67
  %v2751 = vpop.permute.xlu0 %2750
  %2752 = vrot.lane.b32.xlu0 %v2342, 67
  %v2753 = vpop.permute.xlu0 %2752
  %2754 = vrot.lane.b32.xlu0 %v2343, 67
  %v2755 = vpop.permute.xlu0 %2754
  %2756 = vrot.lane.b32.xlu0 %v2344, 67
  %v2757 = vpop.permute.xlu0 %2756
  %2758 = vrot.lane.b32.xlu0 %v2345, 67
  %v2759 = vpop.permute.xlu0 %2758
  %2760 = vrot.lane.b32.xlu0 %v2346, 67
  %v2761 = vpop.permute.xlu0 %2760
  %2762 = vrot.lane.b32.xlu0 %v2347, 67
  %v2763 = vpop.permute.xlu0 %2762
  %2764 = vrot.lane.b32.xlu0 %v2341, 67
  %v2765 = vpop.permute.xlu0 %2764
  %2766 = vrot.lane.b32.xlu0 %v2368, 67
  %v2767 = vpop.permute.xlu0 %2766
  %2768 = vrot.lane.b32.xlu0 %v2369, 67
  %v2769 = vpop.permute.xlu0 %2768
  %2770 = vrot.lane.b32.xlu0 %v2370, 67
  %v2771 = vpop.permute.xlu0 %2770
  %2772 = vrot.lane.b32.xlu0 %v2371, 67
  %v2773 = vpop.permute.xlu0 %2772
  %2774 = vrot.lane.b32.xlu0 %v2372, 67
  %v2775 = vpop.permute.xlu0 %2774
  %2776 = vrot.lane.b32.xlu0 %v2373, 67
  %v2777 = vpop.permute.xlu0 %2776
  %2778 = vrot.lane.b32.xlu0 %v2367, 67
  %v2779 = vpop.permute.xlu0 %2778
  %2780 = vrot.lane.b32.xlu0 %v2394, 67
  %v2781 = vpop.permute.xlu0 %2780
  %2782 = vrot.lane.b32.xlu0 %v2395, 67
  %v2783 = vpop.permute.xlu0 %2782
  %2784 = vrot.lane.b32.xlu0 %v2396, 67
  %v2785 = vpop.permute.xlu0 %2784
  %2786 = vrot.lane.b32.xlu0 %v2397, 67
  %v2787 = vpop.permute.xlu0 %2786
  %2788 = vrot.lane.b32.xlu0 %v2398, 67
  %v2789 = vpop.permute.xlu0 %2788
  %2790 = vrot.lane.b32.xlu0 %v2399, 67
  %v2791 = vpop.permute.xlu0 %2790
  %2792 = vrot.lane.b32.xlu0 %v2393, 67
  %v2793 = vpop.permute.xlu0 %2792
  %2794 = vrot.lane.b32.xlu0 %v2732, 67
  %v2795 = vpop.permute.xlu0 %2794
  %2796 = vrot.lane.b32.xlu0 %v2733, 67
  %v2797 = vpop.permute.xlu0 %2796
  %2798 = vrot.lane.b32.xlu0 %v2734, 67
  %v2799 = vpop.permute.xlu0 %2798
  %2800 = vrot.lane.b32.xlu0 %v2735, 67
  %v2801 = vpop.permute.xlu0 %2800
  %2802 = vrot.lane.b32.xlu0 %v2736, 67
  %v2803 = vpop.permute.xlu0 %2802
  %2804 = vrot.lane.b32.xlu0 %v2737, 67
  %v2805 = vpop.permute.xlu0 %2804
  %2806 = vrot.lane.b32.xlu0 %v2731, 67
  %v2807 = vpop.permute.xlu0 %2806
  %2808 = vrot.lane.b32.xlu0 %v2446, 67
  %v2809 = vpop.permute.xlu0 %2808
  %2810 = vrot.lane.b32.xlu0 %v2447, 67
  %v2811 = vpop.permute.xlu0 %2810
  %2812 = vrot.lane.b32.xlu0 %v2448, 67
  %v2813 = vpop.permute.xlu0 %2812
  %2814 = vrot.lane.b32.xlu0 %v2449, 67
  %v2815 = vpop.permute.xlu0 %2814
  %2816 = vrot.lane.b32.xlu0 %v2450, 67
  %v2817 = vpop.permute.xlu0 %2816
  %2818 = vrot.lane.b32.xlu0 %v2451, 67
  %v2819 = vpop.permute.xlu0 %2818
  %2820 = vrot.lane.b32.xlu0 %v2445, 67
  %v2821 = vpop.permute.xlu0 %2820
  %2822 = vrot.lane.b32.xlu0 %v2472, 67
  %v2823 = vpop.permute.xlu0 %2822
  %2824 = vrot.lane.b32.xlu0 %v2473, 67
  %v2825 = vpop.permute.xlu0 %2824
  %2826 = vrot.lane.b32.xlu0 %v2474, 67
  %v2827 = vpop.permute.xlu0 %2826
  %2828 = vrot.lane.b32.xlu0 %v2475, 67
  %v2829 = vpop.permute.xlu0 %2828
  %2830 = vrot.lane.b32.xlu0 %v2476, 67
  %v2831 = vpop.permute.xlu0 %2830
  %2832 = vrot.lane.b32.xlu0 %v2477, 67
  %v2833 = vpop.permute.xlu0 %2832
  %2834 = vrot.lane.b32.xlu0 %v2471, 67
  %v2835 = vpop.permute.xlu0 %2834
  %2836 = vrot.lane.b32.xlu0 %v2498, 67
  %v2837 = vpop.permute.xlu0 %2836
  %2838 = vrot.lane.b32.xlu0 %v2499, 67
  %v2839 = vpop.permute.xlu0 %2838
  %2840 = vrot.lane.b32.xlu0 %v2500, 67
  %v2841 = vpop.permute.xlu0 %2840
  %2842 = vrot.lane.b32.xlu0 %v2501, 67
  %v2843 = vpop.permute.xlu0 %2842
  %2844 = vrot.lane.b32.xlu0 %v2502, 67
  %v2845 = vpop.permute.xlu0 %2844
  %2846 = vrot.lane.b32.xlu0 %v2503, 67
  %v2847 = vpop.permute.xlu0 %2846
  %2848 = vrot.lane.b32.xlu0 %v2497, 67
  %v2849 = vpop.permute.xlu0 %2848
  %2850 = vrot.lane.b32.xlu0 %v2524, 67
  %v2851 = vpop.permute.xlu0 %2850
  %2852 = vrot.lane.b32.xlu0 %v2525, 67
  %v2853 = vpop.permute.xlu0 %2852
  %2854 = vrot.lane.b32.xlu0 %v2526, 67
  %v2855 = vpop.permute.xlu0 %2854
  %2856 = vrot.lane.b32.xlu0 %v2527, 67
  %v2857 = vpop.permute.xlu0 %2856
  %2858 = vrot.lane.b32.xlu0 %v2528, 67
  %v2859 = vpop.permute.xlu0 %2858
  %2860 = vrot.lane.b32.xlu0 %v2529, 67
  %v2861 = vpop.permute.xlu0 %2860
  %2862 = vrot.lane.b32.xlu0 %v2523, 67
  %v2863 = vpop.permute.xlu0 %2862
  %v2864 = vsel %vm970, %v2739, %v2741
  %v2865 = vsel %vm970, %v2741, %v2743
  %v2866 = vsel %vm970, %v2743, %v2745
  %v2867 = vsel %vm970, %v2745, %v2747
  %v2868 = vsel %vm970, %v2747, %v2749
  %v2869 = vsel %vm970, %v2749, %v2751
  %v2870 = vsel %vm970, %v2753, %v2755
  %v2871 = vsel %vm970, %v2755, %v2757
  %v2872 = vsel %vm970, %v2757, %v2759
  %v2873 = vsel %vm970, %v2759, %v2761
  %v2874 = vsel %vm970, %v2761, %v2763
  %v2875 = vsel %vm970, %v2763, %v2765
  %v2876 = vsel %vm970, %v2767, %v2769
  %v2877 = vsel %vm970, %v2769, %v2771
  %v2878 = vsel %vm970, %v2771, %v2773
  %v2879 = vsel %vm970, %v2773, %v2775
  %v2880 = vsel %vm970, %v2775, %v2777
  %v2881 = vsel %vm970, %v2777, %v2779
  %v2882 = vsel %vm970, %v2781, %v2783
  %v2883 = vsel %vm970, %v2783, %v2785
  %v2884 = vsel %vm970, %v2785, %v2787
  %v2885 = vsel %vm970, %v2787, %v2789
  %v2886 = vsel %vm970, %v2789, %v2791
  %v2887 = vsel %vm970, %v2791, %v2793
  %v2888 = vsel %vm970, %v2795, %v2797
  %v2889 = vsel %vm970, %v2797, %v2799
  %v2890 = vsel %vm970, %v2799, %v2801
  %v2891 = vsel %vm970, %v2801, %v2803
  %v2892 = vsel %vm970, %v2803, %v2805
  %v2893 = vsel %vm970, %v2805, %v2807
  %v2894 = vsel %vm970, %v2809, %v2811
  %v2895 = vsel %vm970, %v2811, %v2813
  %v2896 = vsel %vm970, %v2813, %v2815
  %v2897 = vsel %vm970, %v2815, %v2817
  %v2898 = vsel %vm970, %v2817, %v2819
  %v2899 = vsel %vm970, %v2819, %v2821
  %v2900 = vsel %vm970, %v2823, %v2825
  %v2901 = vsel %vm970, %v2825, %v2827
  %v2902 = vsel %vm970, %v2827, %v2829
  %v2903 = vsel %vm970, %v2829, %v2831
  %v2904 = vsel %vm970, %v2831, %v2833
  %v2905 = vsel %vm970, %v2833, %v2835
  %v2906 = vsel %vm970, %v2837, %v2839
  %v2907 = vsel %vm970, %v2839, %v2841
  %v2908 = vsel %vm970, %v2841, %v2843
  %v2909 = vsel %vm970, %v2843, %v2845
  %v2910 = vsel %vm970, %v2845, %v2847
  %v2911 = vsel %vm970, %v2847, %v2849
  %v2912 = vsel %vm970, %v2851, %v2853
  %v2913 = vsel %vm970, %v2853, %v2855
  %v2914 = vsel %vm970, %v2855, %v2857
  %v2915 = vsel %vm970, %v2857, %v2859
  %v2916 = vsel %vm970, %v2859, %v2861
  %v2917 = vsel %vm970, %v2861, %v2863
  %v2972 = vld [vmem:[%s7] sm:$0xff]
  %v2973 = vld [vmem:[%s7 + $0x8] sm:$0xff]
  %2975 = vset.pattern.permute.xlu0 0
  %2976 = vperm.xlu0 %2975, %v2972
  %v2977 = vpop.permute.xlu0 %2976
  %2980 = vset.pattern.permute.xlu0 0
  %2981 = vperm.xlu0 %2980, %v2973
  %v2982 = vpop.permute.xlu0 %2981
  %v2988 = vunpack.c.l.b16 %v2322
  %v2989 = vunpack.c.h.b16 %v2322
  %v2990 = vunpack.c.l.b16 %v2323
  %v2991 = vunpack.c.h.b16 %v2323
  %v2992 = vunpack.c.l.b16 %v2324
  %v2993 = vunpack.c.h.b16 %v2324
  %v2994 = vunpack.c.l.b16 %v2325
  %v2995 = vunpack.c.h.b16 %v2325
  %v2996 = vpack.c.b16 %v2992, %v2988
  %v2997 = vpack.c.b16 %v2993, %v2989
  %v2998 = vpack.c.b16 %v2994, %v2990
  %v2999 = vpack.c.b16 %v2995, %v2991
  %v3004 = vsel %vm1973, %v2999, 0
  %3006 = vmatprep.subr.bf16.mxu0 %v2307
  %3007 = vmatpush1.bf16.msra.mxu0 %v2318
  %3008 = vmatprep.subr.bf16.mxu0 %v2343
  %3009 = vmatpush1.bf16.msra.mxu0 %v2342
  %3010 = vmatprep.subr.bf16.mxu0 %v2369
  %3011 = vmatpush1.bf16.msra.mxu0 %v2368
  %3012 = vmatprep.subr.bf16.mxu0 %v2395
  %3013 = vmatpush1.bf16.msra.mxu0 %v2394
  %3014 = vmatprep.subr.bf16.mxu0 %v2421
  %3015 = vmatpush1.bf16.msra.mxu0 %v2420
  %3016 = vmatprep.subr.bf16.mxu0 %v2447
  %3017 = vmatpush1.bf16.msra.mxu0 %v2446
  %3018 = vmatprep.subr.bf16.mxu0 %v2473
  %3019 = vmatpush1.bf16.msra.mxu0 %v2472
  %3020 = vmatprep.subr.bf16.mxu0 %v2499
  %3021 = vmatpush1.bf16.msra.mxu0 %v2498
  %3022 = vmatprep.subr.bf16.mxu0 %v2525
  %3023 = vmatpush1.bf16.msra.mxu0 %v2524
  %3024 = vmatprep.subr.bf16.mxu0 %v2551
  %3025 = vmatpush1.bf16.msra.mxu0 %v2550
  %3026 = vmatprep.subr.bf16.mxu0 %v2577
  %3027 = vmatpush1.bf16.msra.mxu0 %v2576
  %3028 = vmatprep.subr.bf16.mxu0 %v2603
  %3029 = vmatpush1.bf16.msra.mxu0 %v2602
  %3030 = vmatprep.subr.bf16.mxu0 %v2629
  %3031 = vmatpush1.bf16.msra.mxu0 %v2628
  %3032 = vmatprep.subr.bf16.mxu0 %v2655
  %3033 = vmatpush1.bf16.msra.mxu0 %v2654
  %3034 = vmatprep.subr.bf16.mxu0 %v2681
  %3035 = vmatpush1.bf16.msra.mxu0 %v2680
  %3036 = vmatprep.subr.bf16.mxu0 %v2707
  %3037 = vmatpush1.bf16.msra.mxu0 %v2706
  %3038 = vmatprep.mubr.bf16.mxu0 %v2997
  %3039 = vmatmul.mubr.bf16.gmra.mrb[0].mxu0 %v2996
  %v3040 = vpop.f32.mrb[0].mxu0
  %v3041 = vadd.f32 %v2977, %v3040
  %v3042 = vpop.f32.mrb[0].mxu0
  %v3043 = vadd.f32 %v2977, %v3042
  %v3044 = vpop.f32.mrb[0].mxu0
  %v3045 = vadd.f32 %v2982, %v3044
  %v3046 = vpop.f32.mrb[0].mxu0
  %v3047 = vadd.f32 %v2982, %v3046
  %3048 = vdwg.mxu0
  %3049 = vmatprep.subr.bf16.mxu0 %v2865
  %3050 = vmatpush1.bf16.msra.mxu0 %v2864
  %3051 = vmatprep.subr.bf16.mxu0 %v2871
  %3052 = vmatpush1.bf16.msra.mxu0 %v2870
  %3053 = vmatprep.subr.bf16.mxu0 %v2877
  %3054 = vmatpush1.bf16.msra.mxu0 %v2876
  %3055 = vmatprep.subr.bf16.mxu0 %v2883
  %3056 = vmatpush1.bf16.msra.mxu0 %v2882
  %3057 = vmatprep.subr.bf16.mxu0 %v2889
  %3058 = vmatpush1.bf16.msra.mxu0 %v2888
  %3059 = vmatprep.subr.bf16.mxu0 %v2895
  %3060 = vmatpush1.bf16.msra.mxu0 %v2894
  %3061 = vmatprep.subr.bf16.mxu0 %v2901
  %3062 = vmatpush1.bf16.msra.mxu0 %v2900
  %3063 = vmatprep.subr.bf16.mxu0 %v2907
  %3064 = vmatpush1.bf16.msra.mxu0 %v2906
  %3065 = vmatprep.subr.bf16.mxu0 %v2913
  %3066 = vmatpush1.bf16.msra.mxu0 %v2912
  %3067 = vmatprep.subr.bf16.mxu0 0
  %3068 = vmatpush1.bf16.msra.mxu0 0
  %3069 = vmatprep.subr.bf16.mxu0 0
  %3070 = vmatpush1.bf16.msra.mxu0 0
  %3071 = vmatprep.subr.bf16.mxu0 0
  %3072 = vmatpush1.bf16.msra.mxu0 0
  %3073 = vmatprep.subr.bf16.mxu0 0
  %3074 = vmatpush1.bf16.msra.mxu0 0
  %3075 = vmatprep.subr.bf16.mxu0 0
  %3076 = vmatpush1.bf16.msra.mxu0 0
  %3077 = vmatprep.subr.bf16.mxu0 0
  %3078 = vmatpush1.bf16.msra.mxu0 0
  %3079 = vmatprep.subr.bf16.mxu0 0
  %3080 = vmatpush1.bf16.msra.mxu0 0
  %3081 = vmatprep.mubr.bf16.mxu0 %v3004
  %3082 = vmatmul.mubr.bf16.gmra.mrb[0].mxu0 %v2998
  %v3083 = vpop.f32.mrb[0].mxu0
  %v3084 = vadd.f32 %v3041, %v3083
  %v3085 = vpop.f32.mrb[0].mxu0
  %v3086 = vadd.f32 %v3043, %v3085
  %v3087 = vpop.f32.mrb[0].mxu0
  %v3088 = vadd.f32 %v3045, %v3087
  %v3089 = vpop.f32.mrb[0].mxu0
  %v3090 = vadd.f32 %v3047, %v3089
  %3091 = vdwg.mxu0
  %3092 = vmatprep.subr.bf16.mxu0 %v2309
  %3093 = vmatpush1.bf16.msra.mxu0 %v2308
  %3094 = vmatprep.subr.bf16.mxu0 %v2345
  %3095 = vmatpush1.bf16.msra.mxu0 %v2344
  %3096 = vmatprep.subr.bf16.mxu0 %v2371
  %3097 = vmatpush1.bf16.msra.mxu0 %v2370
  %3098 = vmatprep.subr.bf16.mxu0 %v2397
  %3099 = vmatpush1.bf16.msra.mxu0 %v2396
  %3100 = vmatprep.subr.bf16.mxu0 %v2423
  %3101 = vmatpush1.bf16.msra.mxu0 %v2422
  %3102 = vmatprep.subr.bf16.mxu0 %v2449
  %3103 = vmatpush1.bf16.msra.mxu0 %v2448
  %3104 = vmatprep.subr.bf16.mxu0 %v2475
  %3105 = vmatpush1.bf16.msra.mxu0 %v2474
  %3106 = vmatprep.subr.bf16.mxu0 %v2501
  %3107 = vmatpush1.bf16.msra.mxu0 %v2500
  %3108 = vmatprep.subr.bf16.mxu0 %v2527
  %3109 = vmatpush1.bf16.msra.mxu0 %v2526
  %3110 = vmatprep.subr.bf16.mxu0 %v2553
  %3111 = vmatpush1.bf16.msra.mxu0 %v2552
  %3112 = vmatprep.subr.bf16.mxu0 %v2579
  %3113 = vmatpush1.bf16.msra.mxu0 %v2578
  %3114 = vmatprep.subr.bf16.mxu0 %v2605
  %3115 = vmatpush1.bf16.msra.mxu0 %v2604
  %3116 = vmatprep.subr.bf16.mxu0 %v2631
  %3117 = vmatpush1.bf16.msra.mxu0 %v2630
  %3118 = vmatprep.subr.bf16.mxu0 %v2657
  %3119 = vmatpush1.bf16.msra.mxu0 %v2656
  %3120 = vmatprep.subr.bf16.mxu0 %v2683
  %3121 = vmatpush1.bf16.msra.mxu0 %v2682
  %3122 = vmatprep.subr.bf16.mxu0 %v2709
  %3123 = vmatpush1.bf16.msra.mxu0 %v2708
  %3124 = vmatprep.mubr.bf16.mxu0 %v2997
  %3125 = vmatmul.mubr.bf16.gmra.mrb[0].mxu0 %v2996
  %v3126 = vpop.f32.mrb[0].mxu0
  %v3127 = vadd.f32 %v2977, %v3126
  %v3128 = vpop.f32.mrb[0].mxu0
  %v3129 = vadd.f32 %v2977, %v3128
  %v3130 = vpop.f32.mrb[0].mxu0
  %v3131 = vadd.f32 %v2982, %v3130
  %v3132 = vpop.f32.mrb[0].mxu0
  %v3133 = vadd.f32 %v2982, %v3132
  %3134 = vdwg.mxu0
  %3135 = vmatprep.subr.bf16.mxu0 %v2867
  %3136 = vmatpush1.bf16.msra.mxu0 %v2866
  %3137 = vmatprep.subr.bf16.mxu0 %v2873
  %3138 = vmatpush1.bf16.msra.mxu0 %v2872
  %3139 = vmatprep.subr.bf16.mxu0 %v2879
  %3140 = vmatpush1.bf16.msra.mxu0 %v2878
  %3141 = vmatprep.subr.bf16.mxu0 %v2885
  %3142 = vmatpush1.bf16.msra.mxu0 %v2884
  %3143 = vmatprep.subr.bf16.mxu0 %v2891
  %3144 = vmatpush1.bf16.msra.mxu0 %v2890
  %3145 = vmatprep.subr.bf16.mxu0 %v2897
  %3146 = vmatpush1.bf16.msra.mxu0 %v2896
  %3147 = vmatprep.subr.bf16.mxu0 %v2903
  %3148 = vmatpush1.bf16.msra.mxu0 %v2902
  %3149 = vmatprep.subr.bf16.mxu0 %v2909
  %3150 = vmatpush1.bf16.msra.mxu0 %v2908
  %3151 = vmatprep.subr.bf16.mxu0 %v2915
  %3152 = vmatpush1.bf16.msra.mxu0 %v2914
  %3153 = vmatprep.subr.bf16.mxu0 0
  %3154 = vmatpush1.bf16.msra.mxu0 0
  %3155 = vmatprep.subr.bf16.mxu0 0
  %3156 = vmatpush1.bf16.msra.mxu0 0
  %3157 = vmatprep.subr.bf16.mxu0 0
  %3158 = vmatpush1.bf16.msra.mxu0 0
  %3159 = vmatprep.subr.bf16.mxu0 0
  %3160 = vmatpush1.bf16.msra.mxu0 0
  %3161 = vmatprep.subr.bf16.mxu0 0
  %3162 = vmatpush1.bf16.msra.mxu0 0
  %3163 = vmatprep.subr.bf16.mxu0 0
  %3164 = vmatpush1.bf16.msra.mxu0 0
  %3165 = vmatprep.subr.bf16.mxu0 0
  %3166 = vmatpush1.bf16.msra.mxu0 0
  %3167 = vmatprep.mubr.bf16.mxu0 %v3004
  %3168 = vmatmul.mubr.bf16.gmra.mrb[0].mxu0 %v2998
  %v3169 = vpop.f32.mrb[0].mxu0
  %v3170 = vadd.f32 %v3127, %v3169
  %v3171 = vpop.f32.mrb[0].mxu0
  %v3172 = vadd.f32 %v3129, %v3171
  %v3173 = vpop.f32.mrb[0].mxu0
  %v3174 = vadd.f32 %v3131, %v3173
  %v3175 = vpop.f32.mrb[0].mxu0
  %v3176 = vadd.f32 %v3133, %v3175
  %3177 = vdwg.mxu0
  %3178 = vmatprep.subr.bf16.mxu0 %v2311
  %3179 = vmatpush1.bf16.msra.mxu0 %v2310
  %3180 = vmatprep.subr.bf16.mxu0 %v2347
  %3181 = vmatpush1.bf16.msra.mxu0 %v2346
  %3182 = vmatprep.subr.bf16.mxu0 %v2373
  %3183 = vmatpush1.bf16.msra.mxu0 %v2372
  %3184 = vmatprep.subr.bf16.mxu0 %v2399
  %3185 = vmatpush1.bf16.msra.mxu0 %v2398
  %3186 = vmatprep.subr.bf16.mxu0 %v2425
  %3187 = vmatpush1.bf16.msra.mxu0 %v2424
  %3188 = vmatprep.subr.bf16.mxu0 %v2451
  %3189 = vmatpush1.bf16.msra.mxu0 %v2450
  %3190 = vmatprep.subr.bf16.mxu0 %v2477
  %3191 = vmatpush1.bf16.msra.mxu0 %v2476
  %3192 = vmatprep.subr.bf16.mxu0 %v2503
  %3193 = vmatpush1.bf16.msra.mxu0 %v2502
  %3194 = vmatprep.subr.bf16.mxu0 %v2529
  %3195 = vmatpush1.bf16.msra.mxu0 %v2528
  %3196 = vmatprep.subr.bf16.mxu0 %v2555
  %3197 = vmatpush1.bf16.msra.mxu0 %v2554
  %3198 = vmatprep.subr.bf16.mxu0 %v2581
  %3199 = vmatpush1.bf16.msra.mxu0 %v2580
  %3200 = vmatprep.subr.bf16.mxu0 %v2607
  %3201 = vmatpush1.bf16.msra.mxu0 %v2606
  %3202 = vmatprep.subr.bf16.mxu0 %v2633
  %3203 = vmatpush1.bf16.msra.mxu0 %v2632
  %3204 = vmatprep.subr.bf16.mxu0 %v2659
  %3205 = vmatpush1.bf16.msra.mxu0 %v2658
  %3206 = vmatprep.subr.bf16.mxu0 %v2685
  %3207 = vmatpush1.bf16.msra.mxu0 %v2684
  %3208 = vmatprep.subr.bf16.mxu0 %v2711
  %3209 = vmatpush1.bf16.msra.mxu0 %v2710
  %3210 = vmatprep.mubr.bf16.mxu0 %v2997
  %3211 = vmatmul.mubr.bf16.gmra.mrb[0].mxu0 %v2996
  %v3212 = vpop.f32.mrb[0].mxu0
  %v3213 = vadd.f32 %v2977, %v3212
  %v3214 = vpop.f32.mrb[0].mxu0
  %v3215 = vadd.f32 %v2977, %v3214
  %v3216 = vpop.f32.mrb[0].mxu0
  %v3217 = vadd.f32 %v2982, %v3216
  %v3218 = vpop.f32.mrb[0].mxu0
  %v3219 = vadd.f32 %v2982, %v3218
  %3220 = vdwg.mxu0
  %3221 = vmatprep.subr.bf16.mxu0 %v2869
  %3222 = vmatpush1.bf16.msra.mxu0 %v2868
  %3223 = vmatprep.subr.bf16.mxu0 %v2875
  %3224 = vmatpush1.bf16.msra.mxu0 %v2874
  %3225 = vmatprep.subr.bf16.mxu0 %v2881
  %3226 = vmatpush1.bf16.msra.mxu0 %v2880
  %3227 = vmatprep.subr.bf16.mxu0 %v2887
  %3228 = vmatpush1.bf16.msra.mxu0 %v2886
  %3229 = vmatprep.subr.bf16.mxu0 %v2893
  %3230 = vmatpush1.bf16.msra.mxu0 %v2892
  %3231 = vmatprep.subr.bf16.mxu0 %v2899
  %3232 = vmatpush1.bf16.msra.mxu0 %v2898
  %3233 = vmatprep.subr.bf16.mxu0 %v2905
  %3234 = vmatpush1.bf16.msra.mxu0 %v2904
  %3235 = vmatprep.subr.bf16.mxu0 %v2911
  %3236 = vmatpush1.bf16.msra.mxu0 %v2910
  %3237 = vmatprep.subr.bf16.mxu0 %v2917
  %3238 = vmatpush1.bf16.msra.mxu0 %v2916
  %3239 = vmatprep.subr.bf16.mxu0 0
  %3240 = vmatpush1.bf16.msra.mxu0 0
  %3241 = vmatprep.subr.bf16.mxu0 0
  %3242 = vmatpush1.bf16.msra.mxu0 0
  %3243 = vmatprep.subr.bf16.mxu0 0
  %3244 = vmatpush1.bf16.msra.mxu0 0
  %3245 = vmatprep.subr.bf16.mxu0 0
  %3246 = vmatpush1.bf16.msra.mxu0 0
  %3247 = vmatprep.subr.bf16.mxu0 0
  %3248 = vmatpush1.bf16.msra.mxu0 0
  %3249 = vmatprep.subr.bf16.mxu0 0
  %3250 = vmatpush1.bf16.msra.mxu0 0
  %3251 = vmatprep.subr.bf16.mxu0 0
  %3252 = vmatpush1.bf16.msra.mxu0 0
  %3253 = vmatprep.mubr.bf16.mxu0 %v3004
  %3254 = vmatmul.mubr.bf16.gmra.mrb[0].mxu0 %v2998
  %v3255 = vpop.f32.mrb[0].mxu0
  %v3256 = vadd.f32 %v3213, %v3255
  %v3257 = vpop.f32.mrb[0].mxu0
  %v3258 = vadd.f32 %v3215, %v3257
  %v3259 = vpop.f32.mrb[0].mxu0
  %v3260 = vadd.f32 %v3217, %v3259
  %v3261 = vpop.f32.mrb[0].mxu0
  %v3262 = vadd.f32 %v3219, %v3261
  %3263 = vdwg.mxu0
  %v3264 = vmax.f32 %v3084, 0.0
  %v3265 = vmax.f32 %v3086, 0.0
  %v3266 = vmax.f32 %v3170, 0.0
  %v3267 = vmax.f32 %v3172, 0.0
  %v3268 = vmax.f32 %v3256, 0.0
  %v3269 = vmax.f32 %v3258, 0.0
  %v3270 = vmax.f32 %v3088, 0.0
  %v3271 = vmax.f32 %v3090, 0.0
  %v3272 = vmax.f32 %v3174, 0.0
  %v3273 = vmax.f32 %v3176, 0.0
  %v3274 = vmax.f32 %v3260, 0.0
  %v3275 = vmax.f32 %v3262, 0.0
  %v3276 = vmul.f32 %v3264, %v1164
  %v3277 = vmul.f32 %v3265, %v1164
  %v3278 = vmul.f32 %v3266, %v1164
  %v3279 = vmul.f32 %v3267, %v1164
  %v3280 = vmul.f32 %v3268, %v1164
  %v3281 = vmul.f32 %v3269, %v1164
  %v3282 = vmul.f32 %v3270, %v1169
  %v3283 = vmul.f32 %v3271, %v1169
  %v3284 = vmul.f32 %v3272, %v1169
  %v3285 = vmul.f32 %v3273, %v1169
  %v3286 = vmul.f32 %v3274, %v1169
  %v3287 = vmul.f32 %v3275, %v1169
  %v3288 = vadd.f32 %v3276, %v1188
  %v3289 = vadd.f32 %v3277, %v1188
  %v3290 = vadd.f32 %v3278, %v1188
  %v3291 = vadd.f32 %v3279, %v1188
  %v3292 = vadd.f32 %v3280, %v1188
  %v3293 = vadd.f32 %v3281, %v1188
  %v3294 = vadd.f32 %v3282, %v1193
  %v3295 = vadd.f32 %v3283, %v1193
  %v3296 = vadd.f32 %v3284, %v1193
  %v3297 = vadd.f32 %v3285, %v1193
  %v3298 = vadd.f32 %v3286, %v1193
  %v3299 = vadd.f32 %v3287, %v1193
  %v3300 = vmul.f32 %v3288, %v1211
  %v3301 = vmul.f32 %v3289, %v1215
  %v3302 = vmul.f32 %v3290, %v1219
  %v3303 = vmul.f32 %v3291, %v1223
  %v3304 = vmul.f32 %v3292, %v1227
  %v3305 = vmul.f32 %v3293, %v1231
  %v3306 = vmul.f32 %v3294, %v1211
  %v3307 = vmul.f32 %v3295, %v1215
  %v3308 = vmul.f32 %v3296, %v1219
  %v3309 = vmul.f32 %v3297, %v1223
  %v3310 = vmul.f32 %v3298, %v1227
  %v3311 = vmul.f32 %v3299, %v1231
  %v3312 = vpack.c.bf16 %v3306, %v3300
  %v3313 = vpack.c.bf16 %v3307, %v3301
  %v3314 = vpack.c.bf16 %v3308, %v3302
  %v3315 = vpack.c.bf16 %v3309, %v3303
  %v3316 = vpack.c.bf16 %v3310, %v3304
  %v3317 = vpack.c.bf16 %v3311, %v3305
  %3324 = vrot.lane.b32.xlu0 %v3312, 42
  %v3325 = vpop.permute.xlu0 %3324
  %3326 = vrot.lane.b32.xlu0 %v3313, 42
  %v3327 = vpop.permute.xlu0 %3326
  %3328 = vrot.lane.b32.xlu0 %v3314, 42
  %v3329 = vpop.permute.xlu0 %3328
  %3330 = vrot.lane.b32.xlu0 %v3315, 42
  %v3331 = vpop.permute.xlu0 %3330
  %3332 = vrot.lane.b32.xlu0 %v3316, 42
  %v3333 = vpop.permute.xlu0 %3332
  %3334 = vrot.lane.b32.xlu0 %v3317, 42
  %v3335 = vpop.permute.xlu0 %3334
  %v3336 = vsel %vm1274, %v3325, %v3327
  %v3337 = vsel %vm1274, %v3327, %v3329
  %v3338 = vsel %vm1274, %v3329, %v3331
  %v3339 = vsel %vm1274, %v3331, %v3333
  %v3340 = vsel %vm1274, %v3333, %v3335
  %v3347 = vsel %vm1285, 0, %v3325
  %v3350 = vsel %vm1285, %v3335, 0
  %v3351 = vld [vmem:[%s8] sm:$0xff]
  %v3352 = vld [vmem:[%s8 + $0x8] sm:$0xff]
  %3355 = vrot.lane.b32.xlu0 %v3347, 127
  %v3356 = vpop.permute.xlu0 %3355
  %3357 = vrot.lane.b32.xlu0 %v3336, 127
  %v3358 = vpop.permute.xlu0 %3357
  %3359 = vrot.lane.b32.xlu0 %v3337, 127
  %v3360 = vpop.permute.xlu0 %3359
  %3361 = vrot.lane.b32.xlu0 %v3338, 127
  %v3362 = vpop.permute.xlu0 %3361
  %3363 = vrot.lane.b32.xlu0 %v3339, 127
  %v3364 = vpop.permute.xlu0 %3363
  %3365 = vrot.lane.b32.xlu0 %v3340, 127
  %v3366 = vpop.permute.xlu0 %3365
  %3367 = vrot.lane.b32.xlu0 %v3350, 127
  %v3368 = vpop.permute.xlu0 %3367
  %v3369 = vsel %vm138, %v3356, %v3358
  %v3370 = vsel %vm138, %v3358, %v3360
  %v3371 = vsel %vm138, %v3360, %v3362
  %v3372 = vsel %vm138, %v3362, %v3364
  %v3373 = vsel %vm138, %v3364, %v3366
  %v3374 = vsel %vm138, %v3366, %v3368
  %3381 = vrot.lane.b32.xlu0 %v3347, 126
  %v3382 = vpop.permute.xlu0 %3381
  %3383 = vrot.lane.b32.xlu0 %v3336, 126
  %v3384 = vpop.permute.xlu0 %3383
  %3385 = vrot.lane.b32.xlu0 %v3337, 126
  %v3386 = vpop.permute.xlu0 %3385
  %3387 = vrot.lane.b32.xlu0 %v3338, 126
  %v3388 = vpop.permute.xlu0 %3387
  %3389 = vrot.lane.b32.xlu0 %v3339, 126
  %v3390 = vpop.permute.xlu0 %3389
  %3391 = vrot.lane.b32.xlu0 %v3340, 126
  %v3392 = vpop.permute.xlu0 %3391
  %3393 = vrot.lane.b32.xlu0 %v3350, 126
  %v3394 = vpop.permute.xlu0 %3393
  %v3395 = vsel %vm190, %v3382, %v3384
  %v3396 = vsel %vm190, %v3384, %v3386
  %v3397 = vsel %vm190, %v3386, %v3388
  %v3398 = vsel %vm190, %v3388, %v3390
  %v3399 = vsel %vm190, %v3390, %v3392
  %v3400 = vsel %vm190, %v3392, %v3394
  %3407 = vrot.lane.b32.xlu0 %v3347, 125
  %v3408 = vpop.permute.xlu0 %3407
  %3409 = vrot.lane.b32.xlu0 %v3336, 125
  %v3410 = vpop.permute.xlu0 %3409
  %3411 = vrot.lane.b32.xlu0 %v3337, 125
  %v3412 = vpop.permute.xlu0 %3411
  %3413 = vrot.lane.b32.xlu0 %v3338, 125
  %v3414 = vpop.permute.xlu0 %3413
  %3415 = vrot.lane.b32.xlu0 %v3339, 125
  %v3416 = vpop.permute.xlu0 %3415
  %3417 = vrot.lane.b32.xlu0 %v3340, 125
  %v3418 = vpop.permute.xlu0 %3417
  %3419 = vrot.lane.b32.xlu0 %v3350, 125
  %v3420 = vpop.permute.xlu0 %3419
  %v3421 = vsel %vm218, %v3408, %v3410
  %v3422 = vsel %vm218, %v3410, %v3412
  %v3423 = vsel %vm218, %v3412, %v3414
  %v3424 = vsel %vm218, %v3414, %v3416
  %v3425 = vsel %vm218, %v3416, %v3418
  %v3426 = vsel %vm218, %v3418, %v3420
  %3433 = vrot.lane.b32.xlu0 %v3347, 124
  %v3434 = vpop.permute.xlu0 %3433
  %3435 = vrot.lane.b32.xlu0 %v3336, 124
  %v3436 = vpop.permute.xlu0 %3435
  %3437 = vrot.lane.b32.xlu0 %v3337, 124
  %v3438 = vpop.permute.xlu0 %3437
  %3439 = vrot.lane.b32.xlu0 %v3338, 124
  %v3440 = vpop.permute.xlu0 %3439
  %3441 = vrot.lane.b32.xlu0 %v3339, 124
  %v3442 = vpop.permute.xlu0 %3441
  %3443 = vrot.lane.b32.xlu0 %v3340, 124
  %v3444 = vpop.permute.xlu0 %3443
  %3445 = vrot.lane.b32.xlu0 %v3350, 124
  %v3446 = vpop.permute.xlu0 %3445
  %v3447 = vsel %vm263, %v3434, %v3436
  %v3448 = vsel %vm263, %v3436, %v3438
  %v3449 = vsel %vm263, %v3438, %v3440
  %v3450 = vsel %vm263, %v3440, %v3442
  %v3451 = vsel %vm263, %v3442, %v3444
  %v3452 = vsel %vm263, %v3444, %v3446
  %3459 = vrot.lane.b32.xlu0 %v3347, 108
  %v3460 = vpop.permute.xlu0 %3459
  %3461 = vrot.lane.b32.xlu0 %v3336, 108
  %v3462 = vpop.permute.xlu0 %3461
  %3463 = vrot.lane.b32.xlu0 %v3337, 108
  %v3464 = vpop.permute.xlu0 %3463
  %3465 = vrot.lane.b32.xlu0 %v3338, 108
  %v3466 = vpop.permute.xlu0 %3465
  %3467 = vrot.lane.b32.xlu0 %v3339, 108
  %v3468 = vpop.permute.xlu0 %3467
  %3469 = vrot.lane.b32.xlu0 %v3340, 108
  %v3470 = vpop.permute.xlu0 %3469
  %3471 = vrot.lane.b32.xlu0 %v3350, 108
  %v3472 = vpop.permute.xlu0 %3471
  %v3473 = vsel %vm291, %v3460, %v3462
  %v3474 = vsel %vm291, %v3462, %v3464
  %v3475 = vsel %vm291, %v3464, %v3466
  %v3476 = vsel %vm291, %v3466, %v3468
  %v3477 = vsel %vm291, %v3468, %v3470
  %v3478 = vsel %vm291, %v3470, %v3472
  %3485 = vrot.lane.b32.xlu0 %v3347, 107
  %v3486 = vpop.permute.xlu0 %3485
  %3487 = vrot.lane.b32.xlu0 %v3336, 107
  %v3488 = vpop.permute.xlu0 %3487
  %3489 = vrot.lane.b32.xlu0 %v3337, 107
  %v3490 = vpop.permute.xlu0 %3489
  %3491 = vrot.lane.b32.xlu0 %v3338, 107
  %v3492 = vpop.permute.xlu0 %3491
  %3493 = vrot.lane.b32.xlu0 %v3339, 107
  %v3494 = vpop.permute.xlu0 %3493
  %3495 = vrot.lane.b32.xlu0 %v3340, 107
  %v3496 = vpop.permute.xlu0 %3495
  %3497 = vrot.lane.b32.xlu0 %v3350, 107
  %v3498 = vpop.permute.xlu0 %3497
  %v3499 = vsel %vm327, %v3486, %v3488
  %v3500 = vsel %vm327, %v3488, %v3490
  %v3501 = vsel %vm327, %v3490, %v3492
  %v3502 = vsel %vm327, %v3492, %v3494
  %v3503 = vsel %vm327, %v3494, %v3496
  %v3504 = vsel %vm327, %v3496, %v3498
  %3511 = vrot.lane.b32.xlu0 %v3347, 106
  %v3512 = vpop.permute.xlu0 %3511
  %3513 = vrot.lane.b32.xlu0 %v3336, 106
  %v3514 = vpop.permute.xlu0 %3513
  %3515 = vrot.lane.b32.xlu0 %v3337, 106
  %v3516 = vpop.permute.xlu0 %3515
  %3517 = vrot.lane.b32.xlu0 %v3338, 106
  %v3518 = vpop.permute.xlu0 %3517
  %3519 = vrot.lane.b32.xlu0 %v3339, 106
  %v3520 = vpop.permute.xlu0 %3519
  %3521 = vrot.lane.b32.xlu0 %v3340, 106
  %v3522 = vpop.permute.xlu0 %3521
  %3523 = vrot.lane.b32.xlu0 %v3350, 106
  %v3524 = vpop.permute.xlu0 %3523
  %v3525 = vsel %vm355, %v3512, %v3514
  %v3526 = vsel %vm355, %v3514, %v3516
  %v3527 = vsel %vm355, %v3516, %v3518
  %v3528 = vsel %vm355, %v3518, %v3520
  %v3529 = vsel %vm355, %v3520, %v3522
  %v3530 = vsel %vm355, %v3522, %v3524
  %3537 = vrot.lane.b32.xlu0 %v3347, 105
  %v3538 = vpop.permute.xlu0 %3537
  %3539 = vrot.lane.b32.xlu0 %v3336, 105
  %v3540 = vpop.permute.xlu0 %3539
  %3541 = vrot.lane.b32.xlu0 %v3337, 105
  %v3542 = vpop.permute.xlu0 %3541
  %3543 = vrot.lane.b32.xlu0 %v3338, 105
  %v3544 = vpop.permute.xlu0 %3543
  %3545 = vrot.lane.b32.xlu0 %v3339, 105
  %v3546 = vpop.permute.xlu0 %3545
  %3547 = vrot.lane.b32.xlu0 %v3340, 105
  %v3548 = vpop.permute.xlu0 %3547
  %3549 = vrot.lane.b32.xlu0 %v3350, 105
  %v3550 = vpop.permute.xlu0 %3549
  %v3551 = vsel %vm386, %v3538, %v3540
  %v3552 = vsel %vm386, %v3540, %v3542
  %v3553 = vsel %vm386, %v3542, %v3544
  %v3554 = vsel %vm386, %v3544, %v3546
  %v3555 = vsel %vm386, %v3546, %v3548
  %v3556 = vsel %vm386, %v3548, %v3550
  %3563 = vrot.lane.b32.xlu0 %v3347, 104
  %v3564 = vpop.permute.xlu0 %3563
  %3565 = vrot.lane.b32.xlu0 %v3336, 104
  %v3566 = vpop.permute.xlu0 %3565
  %3567 = vrot.lane.b32.xlu0 %v3337, 104
  %v3568 = vpop.permute.xlu0 %3567
  %3569 = vrot.lane.b32.xlu0 %v3338, 104
  %v3570 = vpop.permute.xlu0 %3569
  %3571 = vrot.lane.b32.xlu0 %v3339, 104
  %v3572 = vpop.permute.xlu0 %3571
  %3573 = vrot.lane.b32.xlu0 %v3340, 104
  %v3574 = vpop.permute.xlu0 %3573
  %3575 = vrot.lane.b32.xlu0 %v3350, 104
  %v3576 = vpop.permute.xlu0 %3575
  %v3577 = vsel %vm414, %v3564, %v3566
  %v3578 = vsel %vm414, %v3566, %v3568
  %v3579 = vsel %vm414, %v3568, %v3570
  %v3580 = vsel %vm414, %v3570, %v3572
  %v3581 = vsel %vm414, %v3572, %v3574
  %v3582 = vsel %vm414, %v3574, %v3576
  %3589 = vrot.lane.b32.xlu0 %v3347, 88
  %v3590 = vpop.permute.xlu0 %3589
  %3591 = vrot.lane.b32.xlu0 %v3336, 88
  %v3592 = vpop.permute.xlu0 %3591
  %3593 = vrot.lane.b32.xlu0 %v3337, 88
  %v3594 = vpop.permute.xlu0 %3593
  %3595 = vrot.lane.b32.xlu0 %v3338, 88
  %v3596 = vpop.permute.xlu0 %3595
  %3597 = vrot.lane.b32.xlu0 %v3339, 88
  %v3598 = vpop.permute.xlu0 %3597
  %3599 = vrot.lane.b32.xlu0 %v3340, 88
  %v3600 = vpop.permute.xlu0 %3599
  %3601 = vrot.lane.b32.xlu0 %v3350, 88
  %v3602 = vpop.permute.xlu0 %3601
  %v3603 = vsel %vm443, %v3590, %v3592
  %v3604 = vsel %vm443, %v3592, %v3594
  %v3605 = vsel %vm443, %v3594, %v3596
  %v3606 = vsel %vm443, %v3596, %v3598
  %v3607 = vsel %vm443, %v3598, %v3600
  %v3608 = vsel %vm443, %v3600, %v3602
  %3615 = vrot.lane.b32.xlu0 %v3347, 87
  %v3616 = vpop.permute.xlu0 %3615
  %3617 = vrot.lane.b32.xlu0 %v3336, 87
  %v3618 = vpop.permute.xlu0 %3617
  %3619 = vrot.lane.b32.xlu0 %v3337, 87
  %v3620 = vpop.permute.xlu0 %3619
  %3621 = vrot.lane.b32.xlu0 %v3338, 87
  %v3622 = vpop.permute.xlu0 %3621
  %3623 = vrot.lane.b32.xlu0 %v3339, 87
  %v3624 = vpop.permute.xlu0 %3623
  %3625 = vrot.lane.b32.xlu0 %v3340, 87
  %v3626 = vpop.permute.xlu0 %3625
  %3627 = vrot.lane.b32.xlu0 %v3350, 87
  %v3628 = vpop.permute.xlu0 %3627
  %v3629 = vsel %vm471, %v3616, %v3618
  %v3630 = vsel %vm471, %v3618, %v3620
  %v3631 = vsel %vm471, %v3620, %v3622
  %v3632 = vsel %vm471, %v3622, %v3624
  %v3633 = vsel %vm471, %v3624, %v3626
  %v3634 = vsel %vm471, %v3626, %v3628
  %3641 = vrot.lane.b32.xlu0 %v3347, 86
  %v3642 = vpop.permute.xlu0 %3641
  %3643 = vrot.lane.b32.xlu0 %v3336, 86
  %v3644 = vpop.permute.xlu0 %3643
  %3645 = vrot.lane.b32.xlu0 %v3337, 86
  %v3646 = vpop.permute.xlu0 %3645
  %3647 = vrot.lane.b32.xlu0 %v3338, 86
  %v3648 = vpop.permute.xlu0 %3647
  %3649 = vrot.lane.b32.xlu0 %v3339, 86
  %v3650 = vpop.permute.xlu0 %3649
  %3651 = vrot.lane.b32.xlu0 %v3340, 86
  %v3652 = vpop.permute.xlu0 %3651
  %3653 = vrot.lane.b32.xlu0 %v3350, 86
  %v3654 = vpop.permute.xlu0 %3653
  %v3655 = vsel %vm500, %v3642, %v3644
  %v3656 = vsel %vm500, %v3644, %v3646
  %v3657 = vsel %vm500, %v3646, %v3648
  %v3658 = vsel %vm500, %v3648, %v3650
  %v3659 = vsel %vm500, %v3650, %v3652
  %v3660 = vsel %vm500, %v3652, %v3654
  %3667 = vrot.lane.b32.xlu0 %v3347, 85
  %v3668 = vpop.permute.xlu0 %3667
  %3669 = vrot.lane.b32.xlu0 %v3336, 85
  %v3670 = vpop.permute.xlu0 %3669
  %3671 = vrot.lane.b32.xlu0 %v3337, 85
  %v3672 = vpop.permute.xlu0 %3671
  %3673 = vrot.lane.b32.xlu0 %v3338, 85
  %v3674 = vpop.permute.xlu0 %3673
  %3675 = vrot.lane.b32.xlu0 %v3339, 85
  %v3676 = vpop.permute.xlu0 %3675
  %3677 = vrot.lane.b32.xlu0 %v3340, 85
  %v3678 = vpop.permute.xlu0 %3677
  %3679 = vrot.lane.b32.xlu0 %v3350, 85
  %v3680 = vpop.permute.xlu0 %3679
  %v3681 = vsel %vm528, %v3668, %v3670
  %v3682 = vsel %vm528, %v3670, %v3672
  %v3683 = vsel %vm528, %v3672, %v3674
  %v3684 = vsel %vm528, %v3674, %v3676
  %v3685 = vsel %vm528, %v3676, %v3678
  %v3686 = vsel %vm528, %v3678, %v3680
  %3693 = vrot.lane.b32.xlu0 %v3347, 84
  %v3694 = vpop.permute.xlu0 %3693
  %3695 = vrot.lane.b32.xlu0 %v3336, 84
  %v3696 = vpop.permute.xlu0 %3695
  %3697 = vrot.lane.b32.xlu0 %v3337, 84
  %v3698 = vpop.permute.xlu0 %3697
  %3699 = vrot.lane.b32.xlu0 %v3338, 84
  %v3700 = vpop.permute.xlu0 %3699
  %3701 = vrot.lane.b32.xlu0 %v3339, 84
  %v3702 = vpop.permute.xlu0 %3701
  %3703 = vrot.lane.b32.xlu0 %v3340, 84
  %v3704 = vpop.permute.xlu0 %3703
  %3705 = vrot.lane.b32.xlu0 %v3350, 84
  %v3706 = vpop.permute.xlu0 %3705
  %v3707 = vsel %vm556, %v3694, %v3696
  %v3708 = vsel %vm556, %v3696, %v3698
  %v3709 = vsel %vm556, %v3698, %v3700
  %v3710 = vsel %vm556, %v3700, %v3702
  %v3711 = vsel %vm556, %v3702, %v3704
  %v3712 = vsel %vm556, %v3704, %v3706
  %3719 = vrot.lane.b32.xlu0 %v3347, 68
  %v3720 = vpop.permute.xlu0 %3719
  %3721 = vrot.lane.b32.xlu0 %v3336, 68
  %v3722 = vpop.permute.xlu0 %3721
  %3723 = vrot.lane.b32.xlu0 %v3337, 68
  %v3724 = vpop.permute.xlu0 %3723
  %3725 = vrot.lane.b32.xlu0 %v3338, 68
  %v3726 = vpop.permute.xlu0 %3725
  %3727 = vrot.lane.b32.xlu0 %v3339, 68
  %v3728 = vpop.permute.xlu0 %3727
  %3729 = vrot.lane.b32.xlu0 %v3340, 68
  %v3730 = vpop.permute.xlu0 %3729
  %3731 = vrot.lane.b32.xlu0 %v3350, 68
  %v3732 = vpop.permute.xlu0 %3731
  %v3733 = vsel %vm584, %v3720, %v3722
  %v3734 = vsel %vm584, %v3722, %v3724
  %v3735 = vsel %vm584, %v3724, %v3726
  %v3736 = vsel %vm584, %v3726, %v3728
  %v3737 = vsel %vm584, %v3728, %v3730
  %v3738 = vsel %vm584, %v3730, %v3732
  %3745 = vrot.lane.b32.xlu0 %v3347, 109
  %v3746 = vpop.permute.xlu0 %3745
  %3747 = vrot.lane.b32.xlu0 %v3336, 109
  %v3748 = vpop.permute.xlu0 %3747
  %3749 = vrot.lane.b32.xlu0 %v3337, 109
  %v3750 = vpop.permute.xlu0 %3749
  %3751 = vrot.lane.b32.xlu0 %v3338, 109
  %v3752 = vpop.permute.xlu0 %3751
  %3753 = vrot.lane.b32.xlu0 %v3339, 109
  %v3754 = vpop.permute.xlu0 %3753
  %3755 = vrot.lane.b32.xlu0 %v3340, 109
  %v3756 = vpop.permute.xlu0 %3755
  %3757 = vrot.lane.b32.xlu0 %v3350, 109
  %v3758 = vpop.permute.xlu0 %3757
  %v3759 = vsel %vm861, %v3746, %v3748
  %v3760 = vsel %vm861, %v3748, %v3750
  %v3761 = vsel %vm861, %v3750, %v3752
  %v3762 = vsel %vm861, %v3752, %v3754
  %v3763 = vsel %vm861, %v3754, %v3756
  %v3764 = vsel %vm861, %v3756, %v3758
  %3765 = vrot.lane.b32.xlu0 %v3347, 67
  %v3766 = vpop.permute.xlu0 %3765
  %3767 = vrot.lane.b32.xlu0 %v3336, 67
  %v3768 = vpop.permute.xlu0 %3767
  %3769 = vrot.lane.b32.xlu0 %v3337, 67
  %v3770 = vpop.permute.xlu0 %3769
  %3771 = vrot.lane.b32.xlu0 %v3338, 67
  %v3772 = vpop.permute.xlu0 %3771
  %3773 = vrot.lane.b32.xlu0 %v3339, 67
  %v3774 = vpop.permute.xlu0 %3773
  %3775 = vrot.lane.b32.xlu0 %v3340, 67
  %v3776 = vpop.permute.xlu0 %3775
  %3777 = vrot.lane.b32.xlu0 %v3350, 67
  %v3778 = vpop.permute.xlu0 %3777
  %3779 = vrot.lane.b32.xlu0 %v3369, 67
  %v3780 = vpop.permute.xlu0 %3779
  %3781 = vrot.lane.b32.xlu0 %v3370, 67
  %v3782 = vpop.permute.xlu0 %3781
  %3783 = vrot.lane.b32.xlu0 %v3371, 67
  %v3784 = vpop.permute.xlu0 %3783
  %3785 = vrot.lane.b32.xlu0 %v3372, 67
  %v3786 = vpop.permute.xlu0 %3785
  %3787 = vrot.lane.b32.xlu0 %v3373, 67
  %v3788 = vpop.permute.xlu0 %3787
  %3789 = vrot.lane.b32.xlu0 %v3374, 67
  %v3790 = vpop.permute.xlu0 %3789
  %3791 = vrot.lane.b32.xlu0 %v3368, 67
  %v3792 = vpop.permute.xlu0 %3791
  %3793 = vrot.lane.b32.xlu0 %v3395, 67
  %v3794 = vpop.permute.xlu0 %3793
  %3795 = vrot.lane.b32.xlu0 %v3396, 67
  %v3796 = vpop.permute.xlu0 %3795
  %3797 = vrot.lane.b32.xlu0 %v3397, 67
  %v3798 = vpop.permute.xlu0 %3797
  %3799 = vrot.lane.b32.xlu0 %v3398, 67
  %v3800 = vpop.permute.xlu0 %3799
  %3801 = vrot.lane.b32.xlu0 %v3399, 67
  %v3802 = vpop.permute.xlu0 %3801
  %3803 = vrot.lane.b32.xlu0 %v3400, 67
  %v3804 = vpop.permute.xlu0 %3803
  %3805 = vrot.lane.b32.xlu0 %v3394, 67
  %v3806 = vpop.permute.xlu0 %3805
  %3807 = vrot.lane.b32.xlu0 %v3421, 67
  %v3808 = vpop.permute.xlu0 %3807
  %3809 = vrot.lane.b32.xlu0 %v3422, 67
  %v3810 = vpop.permute.xlu0 %3809
  %3811 = vrot.lane.b32.xlu0 %v3423, 67
  %v3812 = vpop.permute.xlu0 %3811
  %3813 = vrot.lane.b32.xlu0 %v3424, 67
  %v3814 = vpop.permute.xlu0 %3813
  %3815 = vrot.lane.b32.xlu0 %v3425, 67
  %v3816 = vpop.permute.xlu0 %3815
  %3817 = vrot.lane.b32.xlu0 %v3426, 67
  %v3818 = vpop.permute.xlu0 %3817
  %3819 = vrot.lane.b32.xlu0 %v3420, 67
  %v3820 = vpop.permute.xlu0 %3819
  %3821 = vrot.lane.b32.xlu0 %v3759, 67
  %v3822 = vpop.permute.xlu0 %3821
  %3823 = vrot.lane.b32.xlu0 %v3760, 67
  %v3824 = vpop.permute.xlu0 %3823
  %3825 = vrot.lane.b32.xlu0 %v3761, 67
  %v3826 = vpop.permute.xlu0 %3825
  %3827 = vrot.lane.b32.xlu0 %v3762, 67
  %v3828 = vpop.permute.xlu0 %3827
  %3829 = vrot.lane.b32.xlu0 %v3763, 67
  %v3830 = vpop.permute.xlu0 %3829
  %3831 = vrot.lane.b32.xlu0 %v3764, 67
  %v3832 = vpop.permute.xlu0 %3831
  %3833 = vrot.lane.b32.xlu0 %v3758, 67
  %v3834 = vpop.permute.xlu0 %3833
  %3835 = vrot.lane.b32.xlu0 %v3473, 67
  %v3836 = vpop.permute.xlu0 %3835
  %3837 = vrot.lane.b32.xlu0 %v3474, 67
  %v3838 = vpop.permute.xlu0 %3837
  %3839 = vrot.lane.b32.xlu0 %v3475, 67
  %v3840 = vpop.permute.xlu0 %3839
  %3841 = vrot.lane.b32.xlu0 %v3476, 67
  %v3842 = vpop.permute.xlu0 %3841
  %3843 = vrot.lane.b32.xlu0 %v3477, 67
  %v3844 = vpop.permute.xlu0 %3843
  %3845 = vrot.lane.b32.xlu0 %v3478, 67
  %v3846 = vpop.permute.xlu0 %3845
  %3847 = vrot.lane.b32.xlu0 %v3472, 67
  %v3848 = vpop.permute.xlu0 %3847
  %3849 = vrot.lane.b32.xlu0 %v3499, 67
  %v3850 = vpop.permute.xlu0 %3849
  %3851 = vrot.lane.b32.xlu0 %v3500, 67
  %v3852 = vpop.permute.xlu0 %3851
  %3853 = vrot.lane.b32.xlu0 %v3501, 67
  %v3854 = vpop.permute.xlu0 %3853
  %3855 = vrot.lane.b32.xlu0 %v3502, 67
  %v3856 = vpop.permute.xlu0 %3855
  %3857 = vrot.lane.b32.xlu0 %v3503, 67
  %v3858 = vpop.permute.xlu0 %3857
  %3859 = vrot.lane.b32.xlu0 %v3504, 67
  %v3860 = vpop.permute.xlu0 %3859
  %3861 = vrot.lane.b32.xlu0 %v3498, 67
  %v3862 = vpop.permute.xlu0 %3861
  %3863 = vrot.lane.b32.xlu0 %v3525, 67
  %v3864 = vpop.permute.xlu0 %3863
  %3865 = vrot.lane.b32.xlu0 %v3526, 67
  %v3866 = vpop.permute.xlu0 %3865
  %3867 = vrot.lane.b32.xlu0 %v3527, 67
  %v3868 = vpop.permute.xlu0 %3867
  %3869 = vrot.lane.b32.xlu0 %v3528, 67
  %v3870 = vpop.permute.xlu0 %3869
  %3871 = vrot.lane.b32.xlu0 %v3529, 67
  %v3872 = vpop.permute.xlu0 %3871
  %3873 = vrot.lane.b32.xlu0 %v3530, 67
  %v3874 = vpop.permute.xlu0 %3873
  %3875 = vrot.lane.b32.xlu0 %v3524, 67
  %v3876 = vpop.permute.xlu0 %3875
  %3877 = vrot.lane.b32.xlu0 %v3551, 67
  %v3878 = vpop.permute.xlu0 %3877
  %3879 = vrot.lane.b32.xlu0 %v3552, 67
  %v3880 = vpop.permute.xlu0 %3879
  %3881 = vrot.lane.b32.xlu0 %v3553, 67
  %v3882 = vpop.permute.xlu0 %3881
  %3883 = vrot.lane.b32.xlu0 %v3554, 67
  %v3884 = vpop.permute.xlu0 %3883
  %3885 = vrot.lane.b32.xlu0 %v3555, 67
  %v3886 = vpop.permute.xlu0 %3885
  %3887 = vrot.lane.b32.xlu0 %v3556, 67
  %v3888 = vpop.permute.xlu0 %3887
  %3889 = vrot.lane.b32.xlu0 %v3550, 67
  %v3890 = vpop.permute.xlu0 %3889
  %v3891 = vsel %vm970, %v3766, %v3768
  %v3892 = vsel %vm970, %v3768, %v3770
  %v3893 = vsel %vm970, %v3770, %v3772
  %v3894 = vsel %vm970, %v3772, %v3774
  %v3895 = vsel %vm970, %v3774, %v3776
  %v3896 = vsel %vm970, %v3776, %v3778
  %v3897 = vsel %vm970, %v3780, %v3782
  %v3898 = vsel %vm970, %v3782, %v3784
  %v3899 = vsel %vm970, %v3784, %v3786
  %v3900 = vsel %vm970, %v3786, %v3788
  %v3901 = vsel %vm970, %v3788, %v3790
  %v3902 = vsel %vm970, %v3790, %v3792
  %v3903 = vsel %vm970, %v3794, %v3796
  %v3904 = vsel %vm970, %v3796, %v3798
  %v3905 = vsel %vm970, %v3798, %v3800
  %v3906 = vsel %vm970, %v3800, %v3802
  %v3907 = vsel %vm970, %v3802, %v3804
  %v3908 = vsel %vm970, %v3804, %v3806
  %v3909 = vsel %vm970, %v3808, %v3810
  %v3910 = vsel %vm970, %v3810, %v3812
  %v3911 = vsel %vm970, %v3812, %v3814
  %v3912 = vsel %vm970, %v3814, %v3816
  %v3913 = vsel %vm970, %v3816, %v3818
  %v3914 = vsel %vm970, %v3818, %v3820
  %v3915 = vsel %vm970, %v3822, %v3824
  %v3916 = vsel %vm970, %v3824, %v3826
  %v3917 = vsel %vm970, %v3826, %v3828
  %v3918 = vsel %vm970, %v3828, %v3830
  %v3919 = vsel %vm970, %v3830, %v3832
  %v3920 = vsel %vm970, %v3832, %v3834
  %v3921 = vsel %vm970, %v3836, %v3838
  %v3922 = vsel %vm970, %v3838, %v3840
  %v3923 = vsel %vm970, %v3840, %v3842
  %v3924 = vsel %vm970, %v3842, %v3844
  %v3925 = vsel %vm970, %v3844, %v3846
  %v3926 = vsel %vm970, %v3846, %v3848
  %v3927 = vsel %vm970, %v3850, %v3852
  %v3928 = vsel %vm970, %v3852, %v3854
  %v3929 = vsel %vm970, %v3854, %v3856
  %v3930 = vsel %vm970, %v3856, %v3858
  %v3931 = vsel %vm970, %v3858, %v3860
  %v3932 = vsel %vm970, %v3860, %v3862
  %v3933 = vsel %vm970, %v3864, %v3866
  %v3934 = vsel %vm970, %v3866, %v3868
  %v3935 = vsel %vm970, %v3868, %v3870
  %v3936 = vsel %vm970, %v3870, %v3872
  %v3937 = vsel %vm970, %v3872, %v3874
  %v3938 = vsel %vm970, %v3874, %v3876
  %v3939 = vsel %vm970, %v3878, %v3880
  %v3940 = vsel %vm970, %v3880, %v3882
  %v3941 = vsel %vm970, %v3882, %v3884
  %v3942 = vsel %vm970, %v3884, %v3886
  %v3943 = vsel %vm970, %v3886, %v3888
  %v3944 = vsel %vm970, %v3888, %v3890
  %v4001 = vunpack.c.l.b16 %v3351
  %v4002 = vunpack.c.h.b16 %v3351
  %v4003 = vunpack.c.l.b16 %v3352
  %v4004 = vunpack.c.h.b16 %v3352
  %v4005 = vpack.c.b16 %v4001, %v4001
  %v4006 = vpack.c.b16 %v4002, %v4002
  %v4007 = vpack.c.b16 %v4003, %v4003
  %v4008 = vpack.c.b16 %v4004, %v4004
  %v4013 = vsel %vm1973, %v4008, 0
  %4015 = vmatprep.subr.bf16.mxu0 %v3336
  %4016 = vmatpush1.bf16.msra.mxu0 %v3347
  %4017 = vmatprep.subr.bf16.mxu0 %v3370
  %4018 = vmatpush1.bf16.msra.mxu0 %v3369
  %4019 = vmatprep.subr.bf16.mxu0 %v3396
  %4020 = vmatpush1.bf16.msra.mxu0 %v3395
  %4021 = vmatprep.subr.bf16.mxu0 %v3422
  %4022 = vmatpush1.bf16.msra.mxu0 %v3421
  %4023 = vmatprep.subr.bf16.mxu0 %v3448
  %4024 = vmatpush1.bf16.msra.mxu0 %v3447
  %4025 = vmatprep.subr.bf16.mxu0 %v3474
  %4026 = vmatpush1.bf16.msra.mxu0 %v3473
  %4027 = vmatprep.subr.bf16.mxu0 %v3500
  %4028 = vmatpush1.bf16.msra.mxu0 %v3499
  %4029 = vmatprep.subr.bf16.mxu0 %v3526
  %4030 = vmatpush1.bf16.msra.mxu0 %v3525
  %4031 = vmatprep.subr.bf16.mxu0 %v3552
  %4032 = vmatpush1.bf16.msra.mxu0 %v3551
  %4033 = vmatprep.subr.bf16.mxu0 %v3578
  %4034 = vmatpush1.bf16.msra.mxu0 %v3577
  %4035 = vmatprep.subr.bf16.mxu0 %v3604
  %4036 = vmatpush1.bf16.msra.mxu0 %v3603
  %4037 = vmatprep.subr.bf16.mxu0 %v3630
  %4038 = vmatpush1.bf16.msra.mxu0 %v3629
  %4039 = vmatprep.subr.bf16.mxu0 %v3656
  %4040 = vmatpush1.bf16.msra.mxu0 %v3655
  %4041 = vmatprep.subr.bf16.mxu0 %v3682
  %4042 = vmatpush1.bf16.msra.mxu0 %v3681
  %4043 = vmatprep.subr.bf16.mxu0 %v3708
  %4044 = vmatpush1.bf16.msra.mxu0 %v3707
  %4045 = vmatprep.subr.bf16.mxu0 %v3734
  %4046 = vmatpush1.bf16.msra.mxu0 %v3733
  %4047 = vmatprep.mubr.bf16.mxu0 %v4006
  %4048 = vmatmul.mubr.bf16.gmra.mrb[0].mxu0 %v4005
  %v4049 = vpop.f32.mrb[0].mxu0
  %v4050 = vadd.f32 0.0, %v4049
  %v4051 = vpop.f32.mrb[0].mxu0
  %v4052 = vadd.f32 0.0, %v4051
  %v4053 = vpop.f32.mrb[0].mxu0
  %v4054 = vpop.f32.mrb[0].mxu0
  %4055 = vdwg.mxu0
  %4056 = vmatprep.subr.bf16.mxu0 %v3892
  %4057 = vmatpush1.bf16.msra.mxu0 %v3891
  %4058 = vmatprep.subr.bf16.mxu0 %v3898
  %4059 = vmatpush1.bf16.msra.mxu0 %v3897
  %4060 = vmatprep.subr.bf16.mxu0 %v3904
  %4061 = vmatpush1.bf16.msra.mxu0 %v3903
  %4062 = vmatprep.subr.bf16.mxu0 %v3910
  %4063 = vmatpush1.bf16.msra.mxu0 %v3909
  %4064 = vmatprep.subr.bf16.mxu0 %v3916
  %4065 = vmatpush1.bf16.msra.mxu0 %v3915
  %4066 = vmatprep.subr.bf16.mxu0 %v3922
  %4067 = vmatpush1.bf16.msra.mxu0 %v3921
  %4068 = vmatprep.subr.bf16.mxu0 %v3928
  %4069 = vmatpush1.bf16.msra.mxu0 %v3927
  %4070 = vmatprep.subr.bf16.mxu0 %v3934
  %4071 = vmatpush1.bf16.msra.mxu0 %v3933
  %4072 = vmatprep.subr.bf16.mxu0 %v3940
  %4073 = vmatpush1.bf16.msra.mxu0 %v3939
  %4074 = vmatprep.subr.bf16.mxu0 0
  %4075 = vmatpush1.bf16.msra.mxu0 0
  %4076 = vmatprep.subr.bf16.mxu0 0
  %4077 = vmatpush1.bf16.msra.mxu0 0
  %4078 = vmatprep.subr.bf16.mxu0 0
  %4079 = vmatpush1.bf16.msra.mxu0 0
  %4080 = vmatprep.subr.bf16.mxu0 0
  %4081 = vmatpush1.bf16.msra.mxu0 0
  %4082 = vmatprep.subr.bf16.mxu0 0
  %4083 = vmatpush1.bf16.msra.mxu0 0
  %4084 = vmatprep.subr.bf16.mxu0 0
  %4085 = vmatpush1.bf16.msra.mxu0 0
  %4086 = vmatprep.subr.bf16.mxu0 0
  %4087 = vmatpush1.bf16.msra.mxu0 0
  %4088 = vmatprep.mubr.bf16.mxu0 %v4013
  %4089 = vmatmul.mubr.bf16.gmra.mrb[0].mxu0 %v4007
  %v4090 = vpop.f32.mrb[0].mxu0
  %v4091 = vadd.f32 %v4050, %v4090
  %v4092 = vpop.f32.mrb[0].mxu0
  %v4093 = vadd.f32 %v4052, %v4092
  %v4094 = vpop.f32.mrb[0].mxu0
  %v4095 = vpop.f32.mrb[0].mxu0
  %4096 = vdwg.mxu0
  %4097 = vmatprep.subr.bf16.mxu0 %v3338
  %4098 = vmatpush1.bf16.msra.mxu0 %v3337
  %4099 = vmatprep.subr.bf16.mxu0 %v3372
  %4100 = vmatpush1.bf16.msra.mxu0 %v3371
  %4101 = vmatprep.subr.bf16.mxu0 %v3398
  %4102 = vmatpush1.bf16.msra.mxu0 %v3397
  %4103 = vmatprep.subr.bf16.mxu0 %v3424
  %4104 = vmatpush1.bf16.msra.mxu0 %v3423
  %4105 = vmatprep.subr.bf16.mxu0 %v3450
  %4106 = vmatpush1.bf16.msra.mxu0 %v3449
  %4107 = vmatprep.subr.bf16.mxu0 %v3476
  %4108 = vmatpush1.bf16.msra.mxu0 %v3475
  %4109 = vmatprep.subr.bf16.mxu0 %v3502
  %4110 = vmatpush1.bf16.msra.mxu0 %v3501
  %4111 = vmatprep.subr.bf16.mxu0 %v3528
  %4112 = vmatpush1.bf16.msra.mxu0 %v3527
  %4113 = vmatprep.subr.bf16.mxu0 %v3554
  %4114 = vmatpush1.bf16.msra.mxu0 %v3553
  %4115 = vmatprep.subr.bf16.mxu0 %v3580
  %4116 = vmatpush1.bf16.msra.mxu0 %v3579
  %4117 = vmatprep.subr.bf16.mxu0 %v3606
  %4118 = vmatpush1.bf16.msra.mxu0 %v3605
  %4119 = vmatprep.subr.bf16.mxu0 %v3632
  %4120 = vmatpush1.bf16.msra.mxu0 %v3631
  %4121 = vmatprep.subr.bf16.mxu0 %v3658
  %4122 = vmatpush1.bf16.msra.mxu0 %v3657
  %4123 = vmatprep.subr.bf16.mxu0 %v3684
  %4124 = vmatpush1.bf16.msra.mxu0 %v3683
  %4125 = vmatprep.subr.bf16.mxu0 %v3710
  %4126 = vmatpush1.bf16.msra.mxu0 %v3709
  %4127 = vmatprep.subr.bf16.mxu0 %v3736
  %4128 = vmatpush1.bf16.msra.mxu0 %v3735
  %4129 = vmatprep.mubr.bf16.mxu0 %v4006
  %4130 = vmatmul.mubr.bf16.gmra.mrb[0].mxu0 %v4005
  %v4131 = vpop.f32.mrb[0].mxu0
  %v4132 = vadd.f32 0.0, %v4131
  %v4133 = vpop.f32.mrb[0].mxu0
  %v4134 = vadd.f32 0.0, %v4133
  %v4135 = vpop.f32.mrb[0].mxu0
  %v4136 = vpop.f32.mrb[0].mxu0
  %4137 = vdwg.mxu0
  %4138 = vmatprep.subr.bf16.mxu0 %v3894
  %4139 = vmatpush1.bf16.msra.mxu0 %v3893
  %4140 = vmatprep.subr.bf16.mxu0 %v3900
  %4141 = vmatpush1.bf16.msra.mxu0 %v3899
  %4142 = vmatprep.subr.bf16.mxu0 %v3906
  %4143 = vmatpush1.bf16.msra.mxu0 %v3905
  %4144 = vmatprep.subr.bf16.mxu0 %v3912
  %4145 = vmatpush1.bf16.msra.mxu0 %v3911
  %4146 = vmatprep.subr.bf16.mxu0 %v3918
  %4147 = vmatpush1.bf16.msra.mxu0 %v3917
  %4148 = vmatprep.subr.bf16.mxu0 %v3924
  %4149 = vmatpush1.bf16.msra.mxu0 %v3923
  %4150 = vmatprep.subr.bf16.mxu0 %v3930
  %4151 = vmatpush1.bf16.msra.mxu0 %v3929
  %4152 = vmatprep.subr.bf16.mxu0 %v3936
  %4153 = vmatpush1.bf16.msra.mxu0 %v3935
  %4154 = vmatprep.subr.bf16.mxu0 %v3942
  %4155 = vmatpush1.bf16.msra.mxu0 %v3941
  %4156 = vmatprep.subr.bf16.mxu0 0
  %4157 = vmatpush1.bf16.msra.mxu0 0
  %4158 = vmatprep.subr.bf16.mxu0 0
  %4159 = vmatpush1.bf16.msra.mxu0 0
  %4160 = vmatprep.subr.bf16.mxu0 0
  %4161 = vmatpush1.bf16.msra.mxu0 0
  %4162 = vmatprep.subr.bf16.mxu0 0
  %4163 = vmatpush1.bf16.msra.mxu0 0
  %4164 = vmatprep.subr.bf16.mxu0 0
  %4165 = vmatpush1.bf16.msra.mxu0 0
  %4166 = vmatprep.subr.bf16.mxu0 0
  %4167 = vmatpush1.bf16.msra.mxu0 0
  %4168 = vmatprep.subr.bf16.mxu0 0
  %4169 = vmatpush1.bf16.msra.mxu0 0
  %4170 = vmatprep.mubr.bf16.mxu0 %v4013
  %4171 = vmatmul.mubr.bf16.gmra.mrb[0].mxu0 %v4007
  %v4172 = vpop.f32.mrb[0].mxu0
  %v4173 = vadd.f32 %v4132, %v4172
  %v4174 = vpop.f32.mrb[0].mxu0
  %v4175 = vadd.f32 %v4134, %v4174
  %v4176 = vpop.f32.mrb[0].mxu0
  %v4177 = vpop.f32.mrb[0].mxu0
  %4178 = vdwg.mxu0
  %4179 = vmatprep.subr.bf16.mxu0 %v3340
  %4180 = vmatpush1.bf16.msra.mxu0 %v3339
  %4181 = vmatprep.subr.bf16.mxu0 %v3374
  %4182 = vmatpush1.bf16.msra.mxu0 %v3373
  %4183 = vmatprep.subr.bf16.mxu0 %v3400
  %4184 = vmatpush1.bf16.msra.mxu0 %v3399
  %4185 = vmatprep.subr.bf16.mxu0 %v3426
  %4186 = vmatpush1.bf16.msra.mxu0 %v3425
  %4187 = vmatprep.subr.bf16.mxu0 %v3452
  %4188 = vmatpush1.bf16.msra.mxu0 %v3451
  %4189 = vmatprep.subr.bf16.mxu0 %v3478
  %4190 = vmatpush1.bf16.msra.mxu0 %v3477
  %4191 = vmatprep.subr.bf16.mxu0 %v3504
  %4192 = vmatpush1.bf16.msra.mxu0 %v3503
  %4193 = vmatprep.subr.bf16.mxu0 %v3530
  %4194 = vmatpush1.bf16.msra.mxu0 %v3529
  %4195 = vmatprep.subr.bf16.mxu0 %v3556
  %4196 = vmatpush1.bf16.msra.mxu0 %v3555
  %4197 = vmatprep.subr.bf16.mxu0 %v3582
  %4198 = vmatpush1.bf16.msra.mxu0 %v3581
  %4199 = vmatprep.subr.bf16.mxu0 %v3608
  %4200 = vmatpush1.bf16.msra.mxu0 %v3607
  %4201 = vmatprep.subr.bf16.mxu0 %v3634
  %4202 = vmatpush1.bf16.msra.mxu0 %v3633
  %4203 = vmatprep.subr.bf16.mxu0 %v3660
  %4204 = vmatpush1.bf16.msra.mxu0 %v3659
  %4205 = vmatprep.subr.bf16.mxu0 %v3686
  %4206 = vmatpush1.bf16.msra.mxu0 %v3685
  %4207 = vmatprep.subr.bf16.mxu0 %v3712
  %4208 = vmatpush1.bf16.msra.mxu0 %v3711
  %4209 = vmatprep.subr.bf16.mxu0 %v3738
  %4210 = vmatpush1.bf16.msra.mxu0 %v3737
  %4211 = vmatprep.mubr.bf16.mxu0 %v4006
  %4212 = vmatmul.mubr.bf16.gmra.mrb[0].mxu0 %v4005
  %v4213 = vpop.f32.mrb[0].mxu0
  %v4214 = vadd.f32 0.0, %v4213
  %v4215 = vpop.f32.mrb[0].mxu0
  %v4216 = vadd.f32 0.0, %v4215
  %v4217 = vpop.f32.mrb[0].mxu0
  %v4218 = vpop.f32.mrb[0].mxu0
  %4219 = vdwg.mxu0
  %4220 = vmatprep.subr.bf16.mxu0 %v3896
  %4221 = vmatpush1.bf16.msra.mxu0 %v3895
  %4222 = vmatprep.subr.bf16.mxu0 %v3902
  %4223 = vmatpush1.bf16.msra.mxu0 %v3901
  %4224 = vmatprep.subr.bf16.mxu0 %v3908
  %4225 = vmatpush1.bf16.msra.mxu0 %v3907
  %4226 = vmatprep.subr.bf16.mxu0 %v3914
  %4227 = vmatpush1.bf16.msra.mxu0 %v3913
  %4228 = vmatprep.subr.bf16.mxu0 %v3920
  %4229 = vmatpush1.bf16.msra.mxu0 %v3919
  %4230 = vmatprep.subr.bf16.mxu0 %v3926
  %4231 = vmatpush1.bf16.msra.mxu0 %v3925
  %4232 = vmatprep.subr.bf16.mxu0 %v3932
  %4233 = vmatpush1.bf16.msra.mxu0 %v3931
  %4234 = vmatprep.subr.bf16.mxu0 %v3938
  %4235 = vmatpush1.bf16.msra.mxu0 %v3937
  %4236 = vmatprep.subr.bf16.mxu0 %v3944
  %4237 = vmatpush1.bf16.msra.mxu0 %v3943
  %4238 = vmatprep.subr.bf16.mxu0 0
  %4239 = vmatpush1.bf16.msra.mxu0 0
  %4240 = vmatprep.subr.bf16.mxu0 0
  %4241 = vmatpush1.bf16.msra.mxu0 0
  %4242 = vmatprep.subr.bf16.mxu0 0
  %4243 = vmatpush1.bf16.msra.mxu0 0
  %4244 = vmatprep.subr.bf16.mxu0 0
  %4245 = vmatpush1.bf16.msra.mxu0 0
  %4246 = vmatprep.subr.bf16.mxu0 0
  %4247 = vmatpush1.bf16.msra.mxu0 0
  %4248 = vmatprep.subr.bf16.mxu0 0
  %4249 = vmatpush1.bf16.msra.mxu0 0
  %4250 = vmatprep.subr.bf16.mxu0 0
  %4251 = vmatpush1.bf16.msra.mxu0 0
  %4252 = vmatprep.mubr.bf16.mxu0 %v4013
  %4253 = vmatmul.mubr.bf16.gmra.mrb[0].mxu0 %v4007
  %v4254 = vpop.f32.mrb[0].mxu0
  %v4255 = vadd.f32 %v4214, %v4254
  %v4256 = vpop.f32.mrb[0].mxu0
  %v4257 = vadd.f32 %v4216, %v4256
  %v4258 = vpop.f32.mrb[0].mxu0
  %v4259 = vpop.f32.mrb[0].mxu0
  %4260 = vdwg.mxu0
  %v4261 = vld [vmem:[#allocation2] sm:$0x1]
  %4263 = vset.pattern.permute.xlu0 0
  %4264 = vperm.xlu0 %4263, %v4261
  %v4265 = vpop.permute.xlu0 %4264
  %v4267 = vlaneseq
  %v4268 = vshrl.u32 %v4267, 7
  %v4269 = vsub.s32 0, %v4268
  %v4270 = vrot.slane %v4265, %v4269
  %v4271 = vadd.f32 %v4091, %v4270
  %v4272 = vadd.f32 %v4093, %v4270
  %v4273 = vadd.f32 %v4173, %v4270
  %v4274 = vadd.f32 %v4175, %v4270
  %v4275 = vadd.f32 %v4255, %v4270
  %v4276 = vadd.f32 %v4257, %v4270
  %v4277 = vxor.u32 %v4271, 2147483648
  %v4278 = vxor.u32 %v4272, 2147483648
  %v4279 = vxor.u32 %v4273, 2147483648
  %v4280 = vxor.u32 %v4274, 2147483648
  %v4281 = vxor.u32 %v4275, 2147483648
  %v4282 = vxor.u32 %v4276, 2147483648
  %v4283 = vmul.f32 %v4277, 1.442695
  %v4284 = vpow.pop %v4283
  %v4285 = vmul.f32 %v4278, 1.442695
  %v4286 = vpow.pop %v4285
  %v4287 = vmul.f32 %v4279, 1.442695
  %v4288 = vpow.pop %v4287
  %v4289 = vmul.f32 %v4280, 1.442695
  %v4290 = vpow.pop %v4289
  %v4291 = vmul.f32 %v4281, 1.442695
  %v4292 = vpow.pop %v4291
  %v4293 = vmul.f32 %v4282, 1.442695
  %v4294 = vpow.pop %v4293
  %v4295 = vadd.f32 %v4284, 1.0
  %v4296 = vadd.f32 %v4286, 1.0
  %v4297 = vadd.f32 %v4288, 1.0
  %v4298 = vadd.f32 %v4290, 1.0
  %v4299 = vadd.f32 %v4292, 1.0
  %v4300 = vadd.f32 %v4294, 1.0
  %v4301 = vrcp.pop %v4295
  %v4302 = vmul.f32 1.0, %v4301
  %v4303 = vrcp.pop %v4296
  %v4304 = vmul.f32 1.0, %v4303
  %v4305 = vrcp.pop %v4297
  %v4306 = vmul.f32 1.0, %v4305
  %v4307 = vrcp.pop %v4298
  %v4308 = vmul.f32 1.0, %v4307
  %v4309 = vrcp.pop %v4299
  %v4310 = vmul.f32 1.0, %v4309
  %v4311 = vrcp.pop %v4300
  %v4312 = vmul.f32 1.0, %v4311
  %v4319 = vcombine.low %v4302, %v4304
  %v4320 = vcombine.low %v4306, %v4308
  %v4321 = vcombine.low %v4310, %v4312
  %v4323 = vunpack.c.l.s4 1966171168
  %v4324 = vunpack.c.0.s8 %v4323
  %v4325 = vlaneseq
  %v4326 = vshrl.u32 %v4325, 7
  %v4327 = vsub.s32 %v4324, %v4326
  %v4328 = vrot.slane %v4319, %v4327
  %v4330 = vunpack.c.l.s4 1966171168
  %v4331 = vunpack.c.0.s8 %v4330
  %v4332 = vlaneseq
  %v4333 = vshrl.u32 %v4332, 7
  %v4334 = vsub.s32 %v4331, %v4333
  %v4335 = vrot.slane %v4320, %v4334
  %v4337 = vunpack.c.l.s4 1966171168
  %v4338 = vunpack.c.0.s8 %v4337
  %v4339 = vlaneseq
  %v4340 = vshrl.u32 %v4339, 7
  %v4341 = vsub.s32 %v4338, %v4340
  %v4342 = vrot.slane %v4321, %v4341
  %v4343 = vcombine.low %v4328, %v4335
  %v4345 = vunpack.c.l.s4 1966171168
  %v4346 = vunpack.c.0.s8 %v4345
  %v4347 = vlaneseq
  %v4348 = vshrl.u32 %v4347, 7
  %v4349 = vsub.s32 %v4346, %v4348
  %v4350 = vrot.slane %v4343, %v4349
  %v4352 = vunpack.c.l.s4 1966171168
  %v4353 = vunpack.c.0.s8 %v4352
  %v4354 = vlaneseq
  %v4355 = vshrl.u32 %v4354, 7
  %v4356 = vsub.s32 %v4353, %v4355
  %v4357 = vrot.slane %v4342, %v4356
  %v4358 = vcombine.low %v4350, %v4357
  %v4360 = vlaneseq
  %vm4361 = vcmp.ge.s32.totalorder %v4360, 0
  %vm4362 = vcmp.lt.s32.totalorder %v4360, 768
  %vm4363 = vmand %vm4361, %vm4362
  %4364 = vst.msk [vmem:[%s12] sm:$0x3f] %vm4363, %v4358
  // Predicated region
  $region50: #{detection_zone_flou.1} parent=0 // pred_check
    _
  $region51: #{detection_zone_flou.1} parent=0 // pred_check_branch
    %4366 = sbr.rel (0) target = $region53
  $region52: #{detection_zone_flou.1} parent=0 // pred_region
    _
  $region53: #{detection_zone_flou.1} parent=0 // pred_fallthru
    _
  // Predicated region
  $region54: #{detection_zone_flou.1} parent=0 // pred_check
    _
  $region55: #{detection_zone_flou.1} parent=0 // pred_check_branch
    %4368 = sbr.rel (0) target = $region57
  $region56: #{detection_zone_flou.1} parent=0 // pred_region
    _
  $region57: #{detection_zone_flou.1} parent=0 // pred_fallthru
    _

</llo_original>
